<compile_context>
chip_gen: v5e
topology: v5e:2x2
jax: 0.10.0
libtpu: 0.0.40
codegen_flags: <defaults>
</compile_context>

<pallas_src>
import functools

import jax
import jax.numpy as jnp
from jax import lax
from jax.experimental import pallas as pl
from jax.experimental.pallas import tpu as pltpu


def bert_asp_kernel(hidden_ref, aux_ref, pooler_ref, w_ref, b_ref, out_ref,
                    acc_ref, cnt_ref, *, inner_ts):
    # hidden_ref : [TB, TS, H]  bf16 hidden states (dropout = identity at eval)
    # aux_ref    : [TB, TS]     f32 auxiliary aspect weights
    # pooler_ref : [TB, H]      f32 pooler output
    # w_ref      : [H, P]       f32 dense weight (pre-transposed for x @ W)
    # b_ref      : [1, P]       f32 bias
    # out_ref    : [TB, P]      f32 logits
    # acc_ref    : [TB, H] f32  aspect-sum accumulator across seq tiles
    # cnt_ref    : [TB, 1] f32  nonzero-count accumulator across seq tiles
    si = pl.program_id(1)

    @pl.when(si == 0)
    def _init():
        acc_ref[...] = jnp.zeros_like(acc_ref)
        cnt_ref[...] = jnp.zeros_like(cnt_ref)

    # aspect_len contribution of this seq tile (aux is f32 -> exact !=0 check).
    aux = aux_ref[...]                                               # [TB, TS]
    cnt_ref[...] += jnp.sum((aux != 0.0).astype(jnp.float32), axis=-1,
                            keepdims=True)

    # Weighted sum over S on the VPU (broadcast-multiply, f32 accumulate) with
    # a sublane-axis reduce, chunked over TS so the f32 product temporary stays
    # small.  Keeps `hidden` off the MXU weight-load path entirely.
    ts = aux_ref.shape[1]
    n_inner = ts // inner_ts

    def chunk(c, carry):
        start = pl.multiple_of(c * inner_ts, inner_ts)
        h = hidden_ref[:, pl.ds(start, inner_ts), :].astype(jnp.float32)  # [TB, IN, H]
        a = aux_ref[:, pl.ds(start, inner_ts)]                            # [TB, IN]
        acc_ref[...] += jnp.sum(a[:, :, None] * h, axis=1)                # [TB, H]
        return carry

    lax.fori_loop(0, n_inner, chunk, 0, unroll=True)

    @pl.when(si == pl.num_programs(1) - 1)
    def _finalize():
        # NOTE: the PyTorch module divides by aspect_len with no guard; an
        # all-zero aspect row would give inf/nan there.  Clamp to 1 to stay
        # finite (documented semantic difference).
        aspect_len = jnp.maximum(cnt_ref[...], 1.0)                       # [TB, 1]
        x = acc_ref[...] / aspect_len + pooler_ref[...].astype(jnp.float32)
        # Dense projection runs once per batch tile.  P is tiny (3) -> masked
        # partial store, negligible (epilogue-only).
        logits = jnp.dot(x, w_ref[...].astype(jnp.float32),
                         preferred_element_type=jnp.float32) + b_ref[...]
        out_ref[...] = logits.astype(out_ref.dtype)


def bert_asp_forward(hidden_states, aux_seq, pooler_out, dense_w_t, dense_b,
                     *, tb=None, ts=None, inner_ts=None):
    """hidden_states [B,S,H] (bf16), aux_seq [B,S] (f32), pooler_out [B,H],
    dense_w_t [H,P], dense_b [1,P] -> logits [B,P] f32."""
    B, S, H = hidden_states.shape
    P = dense_w_t.shape[1]
    hid_bytes = jnp.dtype(hidden_states.dtype).itemsize
    aux_bytes = jnp.dtype(aux_seq.dtype).itemsize

    # ---- Tile selection (perf review): big, full-sequence hidden tiles. ----
    if ts is None:
        ts = S
    if tb is None:
        budget = 13 << 20          # ~13 MiB bf16 hidden tile per pipeline buffer
        tb = B
        for cand in (128, 64, 32, 16, 8):
            if (B % cand == 0 and B // cand >= 2
                    and cand * ts * H * hid_bytes <= budget):
                tb = cand
                break
    if inner_ts is None:
        # Keep the in-kernel f32 product temporary under ~4 MiB.
        inner_ts = ts
        while inner_ts > 8 and inner_ts % 2 == 0 and tb * inner_ts * H * 4 > (4 << 20):
            inner_ts //= 2

    # (8, 128) block constraints.
    assert B % tb == 0 and S % ts == 0 and ts % inner_ts == 0
    assert (tb % 8 == 0) or (tb == B)
    assert (ts % 8 == 0) or (ts == S)      # hidden tile second-to-last dim
    assert (ts % 128 == 0) or (ts == S)    # aux tile last dim

    grid = (B // tb, S // ts)

    in_specs = [
        pl.BlockSpec((tb, ts, H), lambda bi, si: (bi, si, 0)),  # hidden tile (bf16)
        pl.BlockSpec((tb, ts),    lambda bi, si: (bi, si)),     # aux tile (f32)
        pl.BlockSpec((tb, H),     lambda bi, si: (bi, 0)),      # pooler (resident per batch tile)
        pl.BlockSpec((H, P),      lambda bi, si: (0, 0)),       # dense W^T (resident)
        pl.BlockSpec((1, P),      lambda bi, si: (0, 0)),       # dense bias (resident)
    ]
    out_specs = pl.BlockSpec((tb, P), lambda bi, si: (bi, 0))   # same block across S -> accumulator

    # ---- Explicit VMEM budget (perf review) --------------------------------
    hidden_tile = tb * ts * H * hid_bytes
    aux_tile = tb * ts * aux_bytes
    resident = 4 * (tb * H + H * P + P + tb * P + tb * H + tb)   # pooler,W,b,out,acc,cnt (f32)
    chunk_tmp = 2 * tb * inner_ts * H * 4                        # in-kernel f32 temporaries
    vmem_needed = 2 * (hidden_tile + aux_tile) + 2 * resident + chunk_tmp
    vmem_limit = int(min(max(2 * vmem_needed, 32 << 20), 56 << 20))  # v7x-safe cap

    bytes_accessed = (hidden_states.size * hid_bytes
                      + aux_seq.size * aux_bytes
                      + pooler_out.size * 4
                      + dense_w_t.size * 4
                      + dense_b.size * 4
                      + B * P * 4)
    cost = pl.CostEstimate(flops=2 * B * S * H + 2 * B * H * P,
                           transcendentals=0,
                           bytes_accessed=bytes_accessed)

    return pl.pallas_call(
        functools.partial(bert_asp_kernel, inner_ts=inner_ts),
        out_shape=jax.ShapeDtypeStruct((B, P), jnp.float32),
        grid_spec=pltpu.PrefetchScalarGridSpec(
            num_scalar_prefetch=0,
            grid=grid,
            in_specs=in_specs,
            out_specs=out_specs,
            scratch_shapes=[pltpu.VMEM((tb, H), jnp.float32),   # aspect accumulator
                            pltpu.VMEM((tb, 1), jnp.float32)],  # nonzero count
        ),
        compiler_params=pltpu.CompilerParams(
            # batch tiles shard across TensorCores (v7x); S is the reduction axis.
            dimension_semantics=("parallel", "arbitrary"),
            vmem_limit_bytes=vmem_limit),
        cost_estimate=cost,
    )(hidden_states, aux_seq, pooler_out, dense_w_t, dense_b)


def synthetic_bert(text_indices, emb_table, pool_w, pool_b):
    # TODO(synk): the real module uses an external pretrained BERT; replaced here by a
    # deterministic plain-JAX stand-in (embedding lookup + tanh pooler on token 0).
    hidden_states = emb_table[text_indices]                          # [B, S, H]
    pooler_out = jnp.tanh(hidden_states[:, 0, :] @ pool_w + pool_b)  # [B, H]
    return hidden_states, pooler_out


if __name__ == "__main__":
    # Small shapes, but sized so the batch grid axis has >= 2 blocks (v7x
    # megacore) with tb = 16.
    B, S, H, P = 32, 256, 128, 3     # batch, seq, bert_dim, polarities_dim
    VOCAB = 30

    key = jax.random.PRNGKey(0)
    k_emb, k_poolw, k_poolb, k_dw, k_db, k_idx, k_aux = jax.random.split(key, 7)

    # Deterministic synthetic parameters.
    emb_table = jax.random.normal(k_emb, (VOCAB, H), dtype=jnp.float32) * 0.02
    pool_w = jax.random.normal(k_poolw, (H, H), dtype=jnp.float32) * 0.02
    pool_b = jax.random.normal(k_poolb, (H,), dtype=jnp.float32) * 0.02
    # nn.Linear(bert_dim, polarities_dim): weight [P, H], bias [P]; pass W.T as [H, P].
    dense_w = jax.random.normal(k_dw, (P, H), dtype=jnp.float32) * 0.02
    dense_b = jax.random.normal(k_db, (P,), dtype=jnp.float32) * 0.02
    dense_w_t = dense_w.T                 # [H, P]
    dense_b2 = dense_b.reshape(1, P)      # [1, P]

    # Deterministic example inputs.
    text_bert_indices = jax.random.randint(k_idx, (B, S), 0, VOCAB)
    # Auxiliary aspect mask kept in f32 (exact PyTorch !=0 semantics); ensure at
    # least one nonzero per row (same implicit precondition as the PyTorch module).
    aux_seq = (jax.random.uniform(k_aux, (B, S)) > 0.5).astype(jnp.float32)
    aux_seq = aux_seq.at[:, 1].set(1.0)

    # "bert" call (external module -> plain-JAX glue).
    hidden_states, pooler_out = synthetic_bert(text_bert_indices, emb_table, pool_w, pool_b)
    # TODO(synk): nn.Dropout is identity at inference; no stochastic dropout applied.

    # Only the HBM-dominant operand is cast to bf16; aux stays f32.
    hidden_bf16 = hidden_states.astype(jnp.bfloat16)

    # Recommended configuration: full-sequence tiles (seq grid axis = 1 step).
    logits = bert_asp_forward(hidden_bf16, aux_seq, pooler_out, dense_w_t, dense_b2)
    logits = jax.block_until_ready(logits)

    # Also exercise the multi-step seq reduction + in-kernel chunking paths.
    logits2 = bert_asp_forward(hidden_bf16, aux_seq, pooler_out, dense_w_t, dense_b2,
                               tb=16, ts=128, inner_ts=64)
    logits2 = jax.block_until_ready(logits2)

    # Reference in plain JAX (mirrors the PyTorch forward), computed from the
    # same bf16-cast hidden states upcast to f32 and the f32 aux mask.
    hid_f = hidden_bf16.astype(jnp.float32)
    aspect_len = jnp.sum(aux_seq != 0, axis=-1).astype(jnp.float32)
    aspect = jnp.sum(aux_seq[:, :, None] * hid_f, axis=1) / aspect_len[:, None]
    x_ref = aspect + pooler_out
    logits_ref = jnp.dot(x_ref, dense_w.T,
                         precision=jax.lax.Precision.HIGHEST) + dense_b

    assert logits.shape == (B, P) and logits2.shape == (B, P)
    assert jnp.allclose(logits, logits_ref, atol=1e-4, rtol=1e-4)
    assert jnp.allclose(logits2, logits_ref, atol=1e-4, rtol=1e-4)
    print("KERNEL_OK")
</pallas_src>

<mosaic_0001>
module attributes {stable_mosaic.version = 11 : i64} {
  func.func @bert_asp_kernel(%arg0: i32, %arg1: i32, %arg2: memref<16x256x128xbf16, #tpu.memory_space<vmem>>, %arg3: memref<16x256xf32, #tpu.memory_space<vmem>>, %arg4: memref<16x128xf32, #tpu.memory_space<vmem>>, %arg5: memref<128x3xf32, #tpu.memory_space<vmem>>, %arg6: memref<1x3xf32, #tpu.memory_space<vmem>>, %arg7: memref<16x3xf32, #tpu.memory_space<vmem>>, %arg8: memref<16x128xf32, #tpu.memory_space<vmem>>, %arg9: memref<16x1xf32, #tpu.memory_space<vmem>>) attributes {dimension_semantics = [#tpu.dimension_semantics<parallel>, #tpu.dimension_semantics<arbitrary>], iteration_bounds = array<i64: 2, 1>, scalar_prefetch = 0 : i64, scratch_operands = 2 : i64, tpu.core_type = #tpu.core_type<tc>, window_params = [{transform_indices = @transform_0, window_bounds = array<i64: 16, 256, 128>}, {transform_indices = @transform_1, window_bounds = array<i64: 16, 256>}, {transform_indices = @transform_2, window_bounds = array<i64: 16, 128>}, {pipeline_mode = #tpu.pipeline_mode<synchronous>, transform_indices = @transform_3, window_bounds = array<i64: 128, 3>}, {pipeline_mode = #tpu.pipeline_mode<synchronous>, transform_indices = @transform_4, window_bounds = array<i64: 1, 3>}, {transform_indices = @transform_5, window_bounds = array<i64: 16, 3>}]} {
    %c0_i32 = arith.constant 0 : i32
    %0 = arith.cmpi eq, %arg1, %c0_i32 : i32
    %1 = arith.extui %0 : i1 to i32
    %c0_i32_0 = arith.constant 0 : i32
    %2 = arith.cmpi ne, %1, %c0_i32_0 : i32
    scf.if %2 {
      %cst_18 = arith.constant 0.000000e+00 : f32
      %30 = vector.broadcast %cst_18 : f32 to vector<16x128xf32>
      %c0_19 = arith.constant 0 : index
      %c0_20 = arith.constant 0 : index
      %31 = vector.load %arg8[%c0_19, %c0_20] : memref<16x128xf32, #tpu.memory_space<vmem>>, vector<16x128xf32>
      tpu.vector_store %arg8[%c0_19, %c0_20], %30 {strides = array<i32>} : memref<16x128xf32, #tpu.memory_space<vmem>>, vector<16x128xf32>,
      %cst_21 = arith.constant 0.000000e+00 : f32
      %32 = vector.broadcast %cst_21 : f32 to vector<16x1xf32>
      %c0_22 = arith.constant 0 : index
      %c0_23 = arith.constant 0 : index
      %33 = vector.load %arg9[%c0_22, %c0_23] : memref<16x1xf32, #tpu.memory_space<vmem>>, vector<16x1xf32>
      tpu.vector_store %arg9[%c0_22, %c0_23], %32 {strides = array<i32>} : memref<16x1xf32, #tpu.memory_space<vmem>>, vector<16x1xf32>,
    } else {
    }
    %c0 = arith.constant 0 : index
    %c0_1 = arith.constant 0 : index
    %3 = vector.load %arg3[%c0, %c0_1] : memref<16x256xf32, #tpu.memory_space<vmem>>, vector<16x256xf32>
    %c0_2 = arith.constant 0 : index
    %c0_3 = arith.constant 0 : index
    %4 = vector.load %arg9[%c0_2, %c0_3] : memref<16x1xf32, #tpu.memory_space<vmem>>, vector<16x1xf32>
    %cst = arith.constant 0.000000e+00 : f32
    %5 = vector.broadcast %cst : f32 to vector<16x256xf32>
    %6 = arith.cmpf one, %3, %5 : vector<16x256xf32>
    %7 = arith.extui %6 : vector<16x256xi1> to vector<16x256xi32>
    %8 = arith.sitofp %7 : vector<16x256xi32> to vector<16x256xf32>
    %cst_4 = arith.constant dense<0.000000e+00> : vector<16xf32>
    %9 = vector.multi_reduction <add>, %8, %cst_4 [1] : vector<16x256xf32> to vector<16xf32>
    %10 = vector.shape_cast %9 : vector<16xf32> to vector<16x1xf32>
    %11 = arith.addf %4, %10 : vector<16x1xf32>
    %c0_5 = arith.constant 0 : index
    %c0_6 = arith.constant 0 : index
    %12 = vector.load %arg9[%c0_5, %c0_6] : memref<16x1xf32, #tpu.memory_space<vmem>>, vector<16x1xf32>
    tpu.vector_store %arg9[%c0_5, %c0_6], %11 {strides = array<i32>} : memref<16x1xf32, #tpu.memory_space<vmem>>, vector<16x1xf32>,
    %c0_i32_7 = arith.constant 0 : i32
    %c256_i32 = arith.constant 256 : i32
    %13 = arith.muli %c0_i32_7, %c256_i32 : i32
    %14 = tpu.assume_multiple %13, 256 : i32
    %c0_8 = arith.constant 0 : index
    %15 = arith.index_cast %14 : i32 to index
    %c0_9 = arith.constant 0 : index
    %16 = vector.load %arg2[%c0_8, %15, %c0_9] : memref<16x256x128xbf16, #tpu.memory_space<vmem>>, vector<16x256x128xbf16>
    %17 = arith.extf %16 : vector<16x256x128xbf16> to vector<16x256x128xf32>
    %c0_10 = arith.constant 0 : index
    %18 = arith.index_cast %14 : i32 to index
    %19 = vector.load %arg3[%c0_10, %18] : memref<16x256xf32, #tpu.memory_space<vmem>>, vector<16x256xf32>
    %c0_11 = arith.constant 0 : index
    %c0_12 = arith.constant 0 : index
    %20 = vector.load %arg8[%c0_11, %c0_12] : memref<16x128xf32, #tpu.memory_space<vmem>>, vector<16x128xf32>
    %21 = vector.shape_cast %19 : vector<16x256xf32> to vector<16x256x1xf32>
    %22 = vector.broadcast %21 : vector<16x256x1xf32> to vector<16x256x128xf32>
    %23 = arith.mulf %22, %17 : vector<16x256x128xf32>
    %cst_13 = arith.constant dense<0.000000e+00> : vector<16x128xf32>
    %24 = vector.multi_reduction <add>, %23, %cst_13 [1] : vector<16x256x128xf32> to vector<16x128xf32>
    %25 = arith.addf %20, %24 : vector<16x128xf32>
    %c0_14 = arith.constant 0 : index
    %c0_15 = arith.constant 0 : index
    %26 = vector.load %arg8[%c0_14, %c0_15] : memref<16x128xf32, #tpu.memory_space<vmem>>, vector<16x128xf32>
    tpu.vector_store %arg8[%c0_14, %c0_15], %25 {strides = array<i32>} : memref<16x128xf32, #tpu.memory_space<vmem>>, vector<16x128xf32>,
    %c1_i32 = arith.constant 1 : i32
    %c0_i32_16 = arith.constant 0 : i32
    %27 = arith.cmpi eq, %arg1, %c0_i32_16 : i32
    %28 = arith.extui %27 : i1 to i32
    %c0_i32_17 = arith.constant 0 : i32
    %29 = arith.cmpi ne, %28, %c0_i32_17 : i32
    scf.if %29 {
      %c0_18 = arith.constant 0 : index
      %c0_19 = arith.constant 0 : index
      %30 = vector.load %arg9[%c0_18, %c0_19] : memref<16x1xf32, #tpu.memory_space<vmem>>, vector<16x1xf32>
      %cst_20 = arith.constant 1.000000e+00 : f32
      %31 = vector.broadcast %cst_20 : f32 to vector<16x1xf32>
      %32 = arith.maximumf %30, %31 : vector<16x1xf32>
      %c0_21 = arith.constant 0 : index
      %c0_22 = arith.constant 0 : index
      %33 = vector.load %arg8[%c0_21, %c0_22] : memref<16x128xf32, #tpu.memory_space<vmem>>, vector<16x128xf32>
      %34 = vector.broadcast %32 : vector<16x1xf32> to vector<16x128xf32>
      %35 = arith.divf %33, %34 : vector<16x128xf32>
      %c0_23 = arith.constant 0 : index
      %c0_24 = arith.constant 0 : index
      %36 = vector.load %arg4[%c0_23, %c0_24] : memref<16x128xf32, #tpu.memory_space<vmem>>, vector<16x128xf32>
      %37 = arith.addf %35, %36 : vector<16x128xf32>
      %c0_25 = arith.constant 0 : index
      %c0_26 = arith.constant 0 : index
      %38 = vector.load %arg5[%c0_25, %c0_26] : memref<128x3xf32, #tpu.memory_space<vmem>>, vector<128x3xf32>
      %cst_27 = arith.constant dense<0.000000e+00> : vector<16x3xf32>
      %39 = tpu.matmul %37, %38, %cst_27 {dimension_numbers = #tpu.dot_dimension_numbers<[1], [0], [0], [1], [0, 0, 1, 1], [], []>} : vector<16x128xf32>, vector<128x3xf32>, vector<16x3xf32> -> vector<16x3xf32>
      %c0_28 = arith.constant 0 : index
      %c0_29 = arith.constant 0 : index
      %40 = vector.load %arg6[%c0_28, %c0_29] : memref<1x3xf32, #tpu.memory_space<vmem>>, vector<1x3xf32>
      %41 = vector.broadcast %40 : vector<1x3xf32> to vector<16x3xf32>
      %42 = arith.addf %39, %41 : vector<16x3xf32>
      %c0_30 = arith.constant 0 : index
      %c0_31 = arith.constant 0 : index
      %43 = vector.load %arg7[%c0_30, %c0_31] : memref<16x3xf32, #tpu.memory_space<vmem>>, vector<16x3xf32>
      tpu.vector_store %arg7[%c0_30, %c0_31], %42 {strides = array<i32>} : memref<16x3xf32, #tpu.memory_space<vmem>>, vector<16x3xf32>,
    } else {
    }
    return
  }
  func.func @transform_0(%arg0: i32, %arg1: i32) -> (i32, i32, i32) {
    %c0_i32 = arith.constant 0 : i32
    %c0_i32_0 = arith.constant 0 : i32
    return %arg0, %arg1, %c0_i32 : i32, i32, i32
  }
  func.func @transform_1(%arg0: i32, %arg1: i32) -> (i32, i32) {
    %c0_i32 = arith.constant 0 : i32
    return %arg0, %arg1 : i32, i32
  }
  func.func @transform_2(%arg0: i32, %arg1: i32) -> (i32, i32) {
    %c0_i32 = arith.constant 0 : i32
    %c0_i32_0 = arith.constant 0 : i32
    return %arg0, %c0_i32 : i32, i32
  }
  func.func @transform_3(%arg0: i32, %arg1: i32) -> (i32, i32) {
    %c0_i32 = arith.constant 0 : i32
    %c0_i32_0 = arith.constant 0 : i32
    %c0_i32_1 = arith.constant 0 : i32
    return %c0_i32, %c0_i32_0 : i32, i32
  }
  func.func @transform_4(%arg0: i32, %arg1: i32) -> (i32, i32) {
    %c0_i32 = arith.constant 0 : i32
    %c0_i32_0 = arith.constant 0 : i32
    %c0_i32_1 = arith.constant 0 : i32
    return %c0_i32, %c0_i32_0 : i32, i32
  }
  func.func @transform_5(%arg0: i32, %arg1: i32) -> (i32, i32) {
    %c0_i32 = arith.constant 0 : i32
    %c0_i32_0 = arith.constant 0 : i32
    return %arg0, %c0_i32 : i32, i32
  }
}

</mosaic_0001>

<llo_original>
// kernel: tpu_custom_call.1
$region0: #{tpu_custom_call.1}
  #allocation0 [shape = 'u32[]', space=smem, size = 0x4, offset = 0x4, fixed_abs, tag = 'smem constant byte address 0x4 - core index']
  #allocation1 [shape = 'u32[72,128]{1,0:T(1,128)}', space=vmem, size = 0x9000, scoped, tag = 'internal scratch']
  #allocation2 [shape = 'f32[16,128]{1,0:T(8,128)}', space=vmem, size = 0x2000, scoped, tag = 'scratch operand']
  #allocation3 [shape = 'f32[16,1]{1,0:T(8,128)}', space=vmem, size = 0x2000, scoped, tag = 'scratch operand']
  %s0 = inlined_call_operand.hbm [shape: bf16[32,256,128], index: 0, kind: input, shape index: {}]
  %s1 = inlined_call_operand.hbm [shape: f32[32,256], index: 1, kind: input, shape index: {}]
  %s2 = inlined_call_operand.hbm [shape: f32[32,128], index: 2, kind: input, shape index: {}]
  %s3 = inlined_call_operand.vmem [shape: f32[128,3], index: 3, kind: input, shape index: {}]
  %s4 = inlined_call_operand.hbm [shape: f32[1,3], index: 4, kind: input, shape index: {}]
  %s5 = inlined_call_operand.vmem [shape: f32[32,3], index: 5, kind: output, shape index: {}]
  %s6 = sld [smem:[#allocation0]]
  $region77: #{tpu_custom_call.1} parent=0
    _
  %s8 = ssub.s32 1, %s6
  %s9 = scalar_select 0, %s8, %s6
  $region1: #{tpu_custom_call.1} parent=0
    #allocation4 [shape = 'u8[2097152]{0}', space=vmem, size = 0x200000, scoped, tag = 'input window, operand 0']
    #allocation5 [shape = 's32[2]{0}', space=sflag, size = 0x8, scoped, tag = 'scoped memory for tpu_custom_call.1']
    #allocation6 [shape = 'u8[32768]{0}', space=vmem, size = 0x8000, scoped, tag = 'input window, operand 1']
    #allocation7 [shape = 's32[2]{0}', space=sflag, size = 0x8, scoped, tag = 'scoped memory for tpu_custom_call.1']
    #allocation8 [shape = 'u8[16384]{0}', space=vmem, size = 0x4000, scoped, tag = 'input window, operand 2']
    #allocation9 [shape = 'u8[512]{0}', space=vmem, size = 0x400, scoped, tag = 'input window, operand 4, single buffered']
    #allocation10 [shape = 's32[1]{0}', space=sflag, size = 0x4, scoped, tag = 'scoped memory for tpu_custom_call.1']
    %10 = vsyncpa [#allocation5], 0
    %s11 = scalar_lea.sflag [#allocation5], 1
    %12 = vsyncpa %s11, 0
    %13 = vsyncpa [#allocation7], 0
    %s14 = scalar_lea.sflag [#allocation7], 1
    %15 = vsyncpa %s14, 0
    %16 = vsyncpa [#allocation10], 0
    loop: start=0, step=1, limit=4
    $region2: #{tpu_custom_call.1} parent=1 // loop_pre_header
      _
    $region3: #{tpu_custom_call.1} parent=1 // loop_header
      %s18 = sphi 0, %s22
      %p19 = scmp.ge.s32.totalorder %s18, 4
      %s25 = sphi 0, %s37
      %s26 = sphi 0, %s33
      %s27 = sphi 0, %s25
      %s28 = sphi 0, %s26
      %s29 = sphi 0, %s27
      %s30 = sphi 0, %s28
      %s42 = sphi 0, %s44
      %s45 = sphi 0, %s42
      %s46 = sphi 0, %s45
      %s62 = sphi 0, %s46
      %s70 = sphi 0, %s72
      %s73 = sphi 0, %s70
      %s74 = sphi 0, %s73
      %s90 = sphi 0, %s74
      %s96 = sphi 0, %s98
      %s99 = sphi 0, %s96
      %s100 = sphi 0, %s99
      %s116 = sphi 0, %s100
      %s120 = sphi 0, %s120
      %s122 = sphi 0, %s120
      %s123 = sphi 0, %s122
      %s137 = sphi 0, %s123
      %s141 = sphi 0, %s141
      %s143 = sphi 0, %s141
      %s144 = sphi 0, %s143
      %s158 = sphi 0, %s144
      %s164 = sphi 0, %s166
      %s167 = sphi 0, %s164
      %s168 = sphi 0, %s167
      %s184 = sphi 0, %s168
    $region4: #{tpu_custom_call.1} parent=1 // loop_header_branch
      %21 = sbr.rel (%p19) target = $region8
    $region5: #{tpu_custom_call.1} parent=1 // loop_body
      %s23 = ssub.s32 %s18, 1
      %s24 = ssub.s32 %s18, 2
      %s31 = sadd.s32 1, %s26
      %p32 = scmp.ge.s32.totalorder %s31, 1
      %s33 = scalar_select %p32, 0, %s31
      %s34 = sadd.s32 1, %s25
      %s35 = scalar_select %p32, %s34, %s25
      %p36 = scmp.ge.s32.totalorder %s35, 2
      %s37 = scalar_select %p36, 0, %s35
      %s38 = ssub.s32 %s25, %s37
      %s39 = ssub.s32 %s26, %s33
      %s40 = sor.u32 %s38, %s39
      %p41 = scmp.eq.s32.totalorder %s40, 0
      %s43 = sadd.s32 %s42, 1
      %s44 = scalar_select %p41, %s42, %s43
      %p47 = pneg %p41
      %p48 = scmp.eq.s32.totalorder %s18, 1
      %p49 = por %p47, %p48
      %p50 = scmp.ne.s32.totalorder %s42, %s45
      %p51 = scmp.eq.s32.totalorder %s18, 0
      %p52 = por %p50, %p51
      %p53 = scmp.ne.s32.totalorder %s42, %s45
      %p54 = scmp.eq.s32.totalorder %s23, 1
      %p55 = por %p53, %p54
      %p56 = scmp.ne.s32.totalorder %s45, %s46
      %p57 = scmp.eq.s32.totalorder %s23, 0
      %p58 = por %p56, %p57
      %p59 = scmp.ne.s32.totalorder %s45, %s46
      %p60 = scmp.eq.s32.totalorder %s24, 1
      %p61 = por %p59, %p60
      %p63 = scmp.ne.s32.totalorder %s46, %s62
      %p64 = scmp.eq.s32.totalorder %s24, 0
      %p65 = por %p63, %p64
      %s66 = ssub.s32 %s25, %s37
      %s67 = ssub.s32 %s26, %s33
      %s68 = sor.u32 %s66, %s67
      %p69 = scmp.eq.s32.totalorder %s68, 0
      %s71 = sadd.s32 %s70, 1
      %s72 = scalar_select %p69, %s70, %s71
      %p75 = pneg %p69
      %p76 = scmp.eq.s32.totalorder %s18, 1
      %p77 = por %p75, %p76
      %p78 = scmp.ne.s32.totalorder %s70, %s73
      %p79 = scmp.eq.s32.totalorder %s18, 0
      %p80 = por %p78, %p79
      %p81 = scmp.ne.s32.totalorder %s70, %s73
      %p82 = scmp.eq.s32.totalorder %s23, 1
      %p83 = por %p81, %p82
      %p84 = scmp.ne.s32.totalorder %s73, %s74
      %p85 = scmp.eq.s32.totalorder %s23, 0
      %p86 = por %p84, %p85
      %p87 = scmp.ne.s32.totalorder %s73, %s74
      %p88 = scmp.eq.s32.totalorder %s24, 1
      %p89 = por %p87, %p88
      %p91 = scmp.ne.s32.totalorder %s74, %s90
      %p92 = scmp.eq.s32.totalorder %s24, 0
      %p93 = por %p91, %p92
      %s94 = ssub.s32 %s25, %s37
      %p95 = scmp.eq.s32.totalorder %s94, 0
      %s97 = sadd.s32 %s96, 1
      %s98 = scalar_select %p95, %s96, %s97
      %p101 = pneg %p95
      %p102 = scmp.eq.s32.totalorder %s18, 1
      %p103 = por %p101, %p102
      %p104 = scmp.ne.s32.totalorder %s96, %s99
      %p105 = scmp.eq.s32.totalorder %s18, 0
      %p106 = por %p104, %p105
      %p107 = scmp.ne.s32.totalorder %s96, %s99
      %p108 = scmp.eq.s32.totalorder %s23, 1
      %p109 = por %p107, %p108
      %p110 = scmp.ne.s32.totalorder %s99, %s100
      %p111 = scmp.eq.s32.totalorder %s23, 0
      %p112 = por %p110, %p111
      %p113 = scmp.ne.s32.totalorder %s99, %s100
      %p114 = scmp.eq.s32.totalorder %s24, 1
      %p115 = por %p113, %p114
      %p117 = scmp.ne.s32.totalorder %s100, %s116
      %p118 = scmp.eq.s32.totalorder %s24, 0
      %p119 = por %p117, %p118
      %s121 = sadd.s32 %s120, 1
      %p124 = scmp.eq.s32.totalorder %s18, 1
      %p125 = scmp.ne.s32.totalorder %s120, %s122
      %p126 = scmp.eq.s32.totalorder %s18, 0
      %p127 = por %p125, %p126
      %p128 = scmp.ne.s32.totalorder %s120, %s122
      %p129 = scmp.eq.s32.totalorder %s23, 1
      %p130 = por %p128, %p129
      %p131 = scmp.ne.s32.totalorder %s122, %s123
      %p132 = scmp.eq.s32.totalorder %s23, 0
      %p133 = por %p131, %p132
      %p134 = scmp.ne.s32.totalorder %s122, %s123
      %p135 = scmp.eq.s32.totalorder %s24, 1
      %p136 = por %p134, %p135
      %p138 = scmp.ne.s32.totalorder %s123, %s137
      %p139 = scmp.eq.s32.totalorder %s24, 0
      %p140 = por %p138, %p139
      %s142 = sadd.s32 %s141, 1
      %p145 = scmp.eq.s32.totalorder %s18, 1
      %p146 = scmp.ne.s32.totalorder %s141, %s143
      %p147 = scmp.eq.s32.totalorder %s18, 0
      %p148 = por %p146, %p147
      %p149 = scmp.ne.s32.totalorder %s141, %s143
      %p150 = scmp.eq.s32.totalorder %s23, 1
      %p151 = por %p149, %p150
      %p152 = scmp.ne.s32.totalorder %s143, %s144
      %p153 = scmp.eq.s32.totalorder %s23, 0
      %p154 = por %p152, %p153
      %p155 = scmp.ne.s32.totalorder %s143, %s144
      %p156 = scmp.eq.s32.totalorder %s24, 1
      %p157 = por %p155, %p156
      %p159 = scmp.ne.s32.totalorder %s144, %s158
      %p160 = scmp.eq.s32.totalorder %s24, 0
      %p161 = por %p159, %p160
      %s162 = ssub.s32 %s25, %s37
      %p163 = scmp.eq.s32.totalorder %s162, 0
      %s165 = sadd.s32 %s164, 1
      %s166 = scalar_select %p163, %s164, %s165
      %p169 = pneg %p163
      %p170 = scmp.eq.s32.totalorder %s18, 1
      %p171 = por %p169, %p170
      %p172 = scmp.ne.s32.totalorder %s164, %s167
      %p173 = scmp.eq.s32.totalorder %s18, 0
      %p174 = por %p172, %p173
      %p175 = scmp.ne.s32.totalorder %s164, %s167
      %p176 = scmp.eq.s32.totalorder %s23, 1
      %p177 = por %p175, %p176
      %p178 = scmp.ne.s32.totalorder %s167, %s168
      %p179 = scmp.eq.s32.totalorder %s23, 0
      %p180 = por %p178, %p179
      %p181 = scmp.ne.s32.totalorder %s167, %s168
      %p182 = scmp.eq.s32.totalorder %s24, 1
      %p183 = por %p181, %p182
      %p185 = scmp.ne.s32.totalorder %s168, %s184
      %p186 = scmp.eq.s32.totalorder %s24, 0
      %p187 = por %p185, %p186
      %p188 = scmp.le.s32.totalorder 1, %s18
      %p189 = scmp.lt.s32.totalorder %s18, 3
      %p190 = pnand %p188, %p189
      %p191 = pneg %p190
      // Predicated region
      $region9: #{tpu_custom_call.1} parent=5 // pred_check
        _
      $region10: #{tpu_custom_call.1} parent=5 // pred_check_branch
        %193 = sbr.rel (%p190) target = $region12
      $region11: #{tpu_custom_call.1} parent=5 // pred_region
        %s194 = ssub.s32 %s18, 1
        // Predicated region
        $region13: #{tpu_custom_call.1} parent=11 // pred_check
          %p195 = pneg %p133
        $region14: #{tpu_custom_call.1} parent=11 // pred_check_branch
          %197 = sbr.rel (%p195) target = $region16
        $region15: #{tpu_custom_call.1} parent=11 // pred_region
          _
        $region16: #{tpu_custom_call.1} parent=11 // pred_fallthru
          _
        // Predicated region
        $region17: #{tpu_custom_call.1} parent=11 // pred_check
          %p198 = pneg %p154
        $region18: #{tpu_custom_call.1} parent=11 // pred_check_branch
          %200 = sbr.rel (%p198) target = $region20
        $region19: #{tpu_custom_call.1} parent=11 // pred_region
          %202 = vsyncadd [#allocation10], 0
          %s204 = sshll.u32 %s4, 4
          %s205 = int_to_ptr.hbm [resolvable:$true] %s204
          %s206 = sshll.u32 [#allocation9], 4
          %s207 = int_to_ptr.vmem [resolvable:$true] %s206
          %209 = dma.hbm_to_vmem [thread:$0]  %s205, 16, %s207, [#allocation10]
        $region20: #{tpu_custom_call.1} parent=11 // pred_fallthru
          _
      $region12: #{tpu_custom_call.1} parent=5 // pred_fallthru
        _
      %p210 = scmp.lt.s32.totalorder %s18, 2
      // Predicated region
      $region21: #{tpu_custom_call.1} parent=5 // pred_check
        %p211 = pneg %p210
      $region22: #{tpu_custom_call.1} parent=5 // pred_check_branch
        %213 = sbr.rel (%p211) target = $region24
      $region23: #{tpu_custom_call.1} parent=5 // pred_region
        // Predicated region
        $region25: #{tpu_custom_call.1} parent=23 // pred_check
          %p214 = pneg %p52
        $region26: #{tpu_custom_call.1} parent=23 // pred_check_branch
          %216 = sbr.rel (%p214) target = $region28
        $region27: #{tpu_custom_call.1} parent=23 // pred_region
          %s217 = sand.u32 %s42, 1
          %s218 = scalar_lea.sflag [#allocation5], %s217
          %s219 = sand.u32 %s42, 1
          %s220 = smul.addr %s219, 2048
          %s221 = scalar_lea.vmem [#allocation4], %s220
          %s222 = smul.u32 16, %s25
          %s223 = smul.u32 32, %s26
          %225 = vsyncadd %s218, 0
          %s226 = smul.addr %s222, 32
          %s227 = sadd.s32 %s223, %s226
          %s228 = smul.addr %s227, 4
          %s229 = scalar_lea.hbm %s0, %s228
          %s230 = sshll.u32 %s229, 4
          %s231 = int_to_ptr.hbm [resolvable:$true] %s230
          %s232 = sshll.u32 %s221, 4
          %s233 = int_to_ptr.vmem [resolvable:$true] %s232
          %238 = dma.hbm_to_vmem [thread:$0]  %s231, 32768, %s233, %s218, 64, 64, 4
        $region28: #{tpu_custom_call.1} parent=23 // pred_fallthru
          _
        // Predicated region
        $region29: #{tpu_custom_call.1} parent=23 // pred_check
          %p239 = pneg %p80
        $region30: #{tpu_custom_call.1} parent=23 // pred_check_branch
          %241 = sbr.rel (%p239) target = $region32
        $region31: #{tpu_custom_call.1} parent=23 // pred_region
          %s242 = sand.u32 %s18, 1
          %s243 = scalar_lea.sflag [#allocation7], %s242
          %s244 = sand.u32 %s70, 1
          %s245 = smul.addr %s244, 32
          %s246 = scalar_lea.vmem [#allocation6], %s245
          %s247 = smul.u32 2, %s25
          %s248 = smul.u32 2, %s26
          %250 = vsyncadd %s243, 0
          %s251 = smul.addr %s247, 2
          %s252 = sadd.s32 %s248, %s251
          %s253 = smul.addr %s252, 8
          %s254 = scalar_lea.hbm %s1, %s253
          %s255 = sshll.u32 %s254, 4
          %s256 = int_to_ptr.hbm [resolvable:$true] %s255
          %s257 = sshll.u32 %s246, 4
          %s258 = int_to_ptr.vmem [resolvable:$true] %s257
          %263 = dma.hbm_to_vmem [thread:$0]  %s256, 512, %s258, %s243, 256, 256, 16
        $region32: #{tpu_custom_call.1} parent=23 // pred_fallthru
          _
        // Predicated region
        $region33: #{tpu_custom_call.1} parent=23 // pred_check
          %p264 = pneg %p106
        $region34: #{tpu_custom_call.1} parent=23 // pred_check_branch
          %266 = sbr.rel (%p264) target = $region36
        $region35: #{tpu_custom_call.1} parent=23 // pred_region
          %s267 = sand.u32 %s18, 1
          %s268 = scalar_lea.sflag [#allocation7], %s267
          %s269 = sand.u32 %s96, 1
          %s270 = smul.addr %s269, 16
          %s271 = scalar_lea.vmem [#allocation8], %s270
          %s272 = smul.u32 2, %s25
          %274 = vsyncadd %s268, 0
          %s275 = smul.addr %s272, 8
          %s276 = scalar_lea.hbm %s2, %s275
          %s277 = sshll.u32 %s276, 4
          %s278 = int_to_ptr.hbm [resolvable:$true] %s277
          %s279 = sshll.u32 %s271, 4
          %s280 = int_to_ptr.vmem [resolvable:$true] %s279
          %285 = dma.hbm_to_vmem [thread:$0]  %s278, 256, %s280, %s268, 128, 128, 8
        $region36: #{tpu_custom_call.1} parent=23 // pred_fallthru
          _
      $region24: #{tpu_custom_call.1} parent=5 // pred_fallthru
        _
      %p286 = scmp.le.s32.totalorder 1, %s18
      %p287 = scmp.lt.s32.totalorder %s18, 3
      %p288 = pnand %p286, %p287
      %p289 = pneg %p288
      // Predicated region
      $region37: #{tpu_custom_call.1} parent=5 // pred_check
        _
      $region38: #{tpu_custom_call.1} parent=5 // pred_check_branch
        %291 = sbr.rel (%p288) target = $region40
      $region39: #{tpu_custom_call.1} parent=5 // pred_region
        %s292 = ssub.s32 %s18, 1
        %s293 = sand.u32 %s45, 1
        %s294 = scalar_lea.sflag [#allocation5], %s293
        %s295 = sand.u32 %s45, 1
        %s296 = smul.addr %s295, 2048
        %s297 = scalar_lea.vmem [#allocation4], %s296
        // Predicated region
        $region41: #{tpu_custom_call.1} parent=39 // pred_check
          %p298 = pneg %p58
        $region42: #{tpu_custom_call.1} parent=39 // pred_check_branch
          %300 = sbr.rel (%p298) target = $region44
        $region43: #{tpu_custom_call.1} parent=39 // pred_region
          %302 = dma.done %s294, 32768
        $region44: #{tpu_custom_call.1} parent=39 // pred_fallthru
          _
        %s303 = sand.u32 %s23, 1
        %s304 = scalar_lea.sflag [#allocation7], %s303
        %s305 = sand.u32 %s73, 1
        %s306 = smul.addr %s305, 32
        %s307 = scalar_lea.vmem [#allocation6], %s306
        // Predicated region
        $region45: #{tpu_custom_call.1} parent=39 // pred_check
          %p308 = pneg %p86
        $region46: #{tpu_custom_call.1} parent=39 // pred_check_branch
          %310 = sbr.rel (%p308) target = $region48
        $region47: #{tpu_custom_call.1} parent=39 // pred_region
          %312 = dma.done %s304, 512
        $region48: #{tpu_custom_call.1} parent=39 // pred_fallthru
          _
        %s313 = sand.u32 %s23, 1
        %s314 = scalar_lea.sflag [#allocation7], %s313
        %s315 = sand.u32 %s99, 1
        %s316 = smul.addr %s315, 16
        %s317 = scalar_lea.vmem [#allocation8], %s316
        // Predicated region
        $region49: #{tpu_custom_call.1} parent=39 // pred_check
          %p318 = pneg %p112
        $region50: #{tpu_custom_call.1} parent=39 // pred_check_branch
          %320 = sbr.rel (%p318) target = $region52
        $region51: #{tpu_custom_call.1} parent=39 // pred_region
          %322 = dma.done %s314, 256
        $region52: #{tpu_custom_call.1} parent=39 // pred_fallthru
          _
        // Predicated region
        $region53: #{tpu_custom_call.1} parent=39 // pred_check
          %p323 = pneg %p154
        $region54: #{tpu_custom_call.1} parent=39 // pred_check_branch
          %325 = sbr.rel (%p323) target = $region56
        $region55: #{tpu_custom_call.1} parent=39 // pred_region
          %327 = dma.done [#allocation10], 16
        $region56: #{tpu_custom_call.1} parent=39 // pred_fallthru
          _
        %s328 = sand.u32 %s45, 1
        %s329 = scalar_lea.sflag [#allocation5], %s328
        %s330 = sand.u32 %s45, 1
        %s331 = smul.addr %s330, 2048
        %s332 = scalar_lea.vmem [#allocation4], %s331
        %p333 = pneg %p58
        %p334 = pneg %p55
        %s335 = sand.u32 %s23, 1
        %s336 = scalar_lea.sflag [#allocation7], %s335
        %s337 = sand.u32 %s73, 1
        %s338 = smul.addr %s337, 32
        %s339 = scalar_lea.vmem [#allocation6], %s338
        %p340 = pneg %p86
        %p341 = pneg %p83
        %s342 = sand.u32 %s23, 1
        %s343 = scalar_lea.sflag [#allocation7], %s342
        %s344 = sand.u32 %s99, 1
        %s345 = smul.addr %s344, 16
        %s346 = scalar_lea.vmem [#allocation8], %s345
        %p347 = pneg %p112
        %p348 = pneg %p109
        %p349 = pneg %p133
        %p350 = pneg %p130
        %p351 = pneg %p154
        %p352 = pneg %p151
        %p353 = pneg %p180
        %p354 = pneg %p177
        %s355 = smul.u32 2, %s27
        %p356 = scmp.lt.s32.totalorder %s355, 3
        %s357 = scalar_select %p356, %s355, 3
        %s358 = smul.addr %s357, 8
        %s359 = scalar_lea.vmem %s5, %s358
        %s360 = smul.u32 16, %s27
        %s361 = smul.u32 32, %s28
        %s362 = smul.u32 2, %s27
        %s363 = smul.u32 2, %s28
        %s364 = smul.u32 2, %s27
        %s365 = smul.u32 2, %s27
        %p366 = scmp.lt.s32.totalorder %s365, 3
        %s367 = scalar_select %p366, %s365, 3
        %s368 = smul.addr %s367, 8
        %s369 = scalar_lea.vmem %s5, %s368
        %s370 = smul.u32 2, %s27
        %p371 = scmp.eq.s32.totalorder %s28, 0
        // Predicated region
        $region57: #{tpu_custom_call.1} parent=39 // pred_check
          %p372 = pneg %p371
        $region58: #{tpu_custom_call.1} parent=39 // pred_check_branch
          %374 = sbr.rel (%p372) target = $region60
        $region59: #{tpu_custom_call.1} parent=39 // pred_region
          %375 = vst [vmem:[#allocation2] sm:$0xff] 0.0
          %376 = vst [vmem:[#allocation2 + $0x8] sm:$0xff] 0.0
          %vm377 = vcmask 7168
          %378 = vst.msk [vmem:[#allocation3] sm:$0xff] %vm377, 0.0
          %379 = vst.msk [vmem:[#allocation3 + $0x8] sm:$0xff] %vm377, 0.0
        $region60: #{tpu_custom_call.1} parent=39 // pred_fallthru
          _
        %v380 = vld [vmem:[%s307] sm:$0xff]
        %v381 = vld [vmem:[%s307 + $0x8] sm:$0xff]
        %v382 = vld [vmem:[%s307 + $0x10] sm:$0xff]
        %v383 = vld [vmem:[%s307 + $0x18] sm:$0xff]
        %v384 = vld [vmem:[#allocation3] sm:$0xff]
        %v385 = vld [vmem:[#allocation3 + $0x8] sm:$0xff]
        %vm386 = vcmp.ne.f32.partialorder %v380, 0.0
        %vm387 = vcmp.ne.f32.partialorder %v381, 0.0
        %vm388 = vcmp.ne.f32.partialorder %v382, 0.0
        %vm389 = vcmp.ne.f32.partialorder %v383, 0.0
        %v390 = vsel %vm386, 1, 0
        %v391 = vsel %vm387, 1, 0
        %v392 = vsel %vm388, 1, 0
        %v393 = vsel %vm389, 1, 0
        %v394 = vcvt.s32.f32 %v390
        %v395 = vcvt.s32.f32 %v391
        %v396 = vcvt.s32.f32 %v392
        %v397 = vcvt.s32.f32 %v393
        %v398 = vadd.f32 %v394, %v395
        %399 = vadd.xlane.f32.xlu0 %v398
        %v400 = vpop.xlane.xlu0 %399
        %v401 = vadd.f32 %v396, %v397
        %402 = vadd.xlane.f32.xlu0 %v401
        %v403 = vpop.xlane.xlu0 %402
        %v404 = vadd.f32 %v384, %v400
        %v405 = vadd.f32 %v385, %v403
        %vm406 = vcmask 7168
        %407 = vst.msk [vmem:[#allocation3] sm:$0xff] %vm406, %v404
        %408 = vst.msk [vmem:[#allocation3 + $0x8] sm:$0xff] %vm406, %v405
        %v409 = vld [vmem:[%s297] sm:$0xf]
        %v410 = vld [vmem:[%s297 + $0x4] sm:$0xf]
        %v411 = vld [vmem:[%s297 + $0x8] sm:$0xf]
        %v412 = vld [vmem:[%s297 + $0xc] sm:$0xf]
        %v413 = vld [vmem:[%s297 + $0x10] sm:$0xf]
        %v414 = vld [vmem:[%s297 + $0x14] sm:$0xf]
        %v415 = vld [vmem:[%s297 + $0x18] sm:$0xf]
        %v416 = vld [vmem:[%s297 + $0x1c] sm:$0xf]
        %v417 = vld [vmem:[%s297 + $0x20] sm:$0xf]
        %v418 = vld [vmem:[%s297 + $0x24] sm:$0xf]
        %v419 = vld [vmem:[%s297 + $0x28] sm:$0xf]
        %v420 = vld [vmem:[%s297 + $0x2c] sm:$0xf]
        %v421 = vld [vmem:[%s297 + $0x30] sm:$0xf]
        %v422 = vld [vmem:[%s297 + $0x34] sm:$0xf]
        %v423 = vld [vmem:[%s297 + $0x38] sm:$0xf]
        %v424 = vld [vmem:[%s297 + $0x3c] sm:$0xf]
        %v425 = vld [vmem:[%s297 + $0x40] sm:$0xf]
        %v426 = vld [vmem:[%s297 + $0x44] sm:$0xf]
        %v427 = vld [vmem:[%s297 + $0x48] sm:$0xf]
        %v428 = vld [vmem:[%s297 + $0x4c] sm:$0xf]
        %v429 = vld [vmem:[%s297 + $0x50] sm:$0xf]
        %v430 = vld [vmem:[%s297 + $0x54] sm:$0xf]
        %v431 = vld [vmem:[%s297 + $0x58] sm:$0xf]
        %v432 = vld [vmem:[%s297 + $0x5c] sm:$0xf]
        %v433 = vld [vmem:[%s297 + $0x60] sm:$0xf]
        %v434 = vld [vmem:[%s297 + $0x64] sm:$0xf]
        %v435 = vld [vmem:[%s297 + $0x68] sm:$0xf]
        %v436 = vld [vmem:[%s297 + $0x6c] sm:$0xf]
        %v437 = vld [vmem:[%s297 + $0x70] sm:$0xf]
        %v438 = vld [vmem:[%s297 + $0x74] sm:$0xf]
        %v439 = vld [vmem:[%s297 + $0x78] sm:$0xf]
        %v440 = vld [vmem:[%s297 + $0x7c] sm:$0xf]
        %v441 = vld [vmem:[%s297 + $0x80] sm:$0xf]
        %v442 = vld [vmem:[%s297 + $0x84] sm:$0xf]
        %v443 = vld [vmem:[%s297 + $0x88] sm:$0xf]
        %v444 = vld [vmem:[%s297 + $0x8c] sm:$0xf]
        %v445 = vld [vmem:[%s297 + $0x90] sm:$0xf]
        %v446 = vld [vmem:[%s297 + $0x94] sm:$0xf]
        %v447 = vld [vmem:[%s297 + $0x98] sm:$0xf]
        %v448 = vld [vmem:[%s297 + $0x9c] sm:$0xf]
        %v449 = vld [vmem:[%s297 + $0xa0] sm:$0xf]
        %v450 = vld [vmem:[%s297 + $0xa4] sm:$0xf]
        %v451 = vld [vmem:[%s297 + $0xa8] sm:$0xf]
        %v452 = vld [vmem:[%s297 + $0xac] sm:$0xf]
        %v453 = vld [vmem:[%s297 + $0xb0] sm:$0xf]
        %v454 = vld [vmem:[%s297 + $0xb4] sm:$0xf]
        %v455 = vld [vmem:[%s297 + $0xb8] sm:$0xf]
        %v456 = vld [vmem:[%s297 + $0xbc] sm:$0xf]
        %v457 = vld [vmem:[%s297 + $0xc0] sm:$0xf]
        %v458 = vld [vmem:[%s297 + $0xc4] sm:$0xf]
        %v459 = vld [vmem:[%s297 + $0xc8] sm:$0xf]
        %v460 = vld [vmem:[%s297 + $0xcc] sm:$0xf]
        %v461 = vld [vmem:[%s297 + $0xd0] sm:$0xf]
        %v462 = vld [vmem:[%s297 + $0xd4] sm:$0xf]
        %v463 = vld [vmem:[%s297 + $0xd8] sm:$0xf]
        %v464 = vld [vmem:[%s297 + $0xdc] sm:$0xf]
        %v465 = vld [vmem:[%s297 + $0xe0] sm:$0xf]
        %v466 = vld [vmem:[%s297 + $0xe4] sm:$0xf]
        %v467 = vld [vmem:[%s297 + $0xe8] sm:$0xf]
        %v468 = vld [vmem:[%s297 + $0xec] sm:$0xf]
        %v469 = vld [vmem:[%s297 + $0xf0] sm:$0xf]
        %v470 = vld [vmem:[%s297 + $0xf4] sm:$0xf]
        %v471 = vld [vmem:[%s297 + $0xf8] sm:$0xf]
        %v472 = vld [vmem:[%s297 + $0xfc] sm:$0xf]
        %v473 = vld [vmem:[%s297 + $0x100] sm:$0xf]
        %v474 = vld [vmem:[%s297 + $0x104] sm:$0xf]
        %v475 = vld [vmem:[%s297 + $0x108] sm:$0xf]
        %v476 = vld [vmem:[%s297 + $0x10c] sm:$0xf]
        %v477 = vld [vmem:[%s297 + $0x110] sm:$0xf]
        %v478 = vld [vmem:[%s297 + $0x114] sm:$0xf]
        %v479 = vld [vmem:[%s297 + $0x118] sm:$0xf]
        %v480 = vld [vmem:[%s297 + $0x11c] sm:$0xf]
        %v481 = vld [vmem:[%s297 + $0x120] sm:$0xf]
        %v482 = vld [vmem:[%s297 + $0x124] sm:$0xf]
        %v483 = vld [vmem:[%s297 + $0x128] sm:$0xf]
        %v484 = vld [vmem:[%s297 + $0x12c] sm:$0xf]
        %v485 = vld [vmem:[%s297 + $0x130] sm:$0xf]
        %v486 = vld [vmem:[%s297 + $0x134] sm:$0xf]
        %v487 = vld [vmem:[%s297 + $0x138] sm:$0xf]
        %v488 = vld [vmem:[%s297 + $0x13c] sm:$0xf]
        %v489 = vld [vmem:[%s297 + $0x140] sm:$0xf]
        %v490 = vld [vmem:[%s297 + $0x144] sm:$0xf]
        %v491 = vld [vmem:[%s297 + $0x148] sm:$0xf]
        %v492 = vld [vmem:[%s297 + $0x14c] sm:$0xf]
        %v493 = vld [vmem:[%s297 + $0x150] sm:$0xf]
        %v494 = vld [vmem:[%s297 + $0x154] sm:$0xf]
        %v495 = vld [vmem:[%s297 + $0x158] sm:$0xf]
        %v496 = vld [vmem:[%s297 + $0x15c] sm:$0xf]
        %v497 = vld [vmem:[%s297 + $0x160] sm:$0xf]
        %v498 = vld [vmem:[%s297 + $0x164] sm:$0xf]
        %v499 = vld [vmem:[%s297 + $0x168] sm:$0xf]
        %v500 = vld [vmem:[%s297 + $0x16c] sm:$0xf]
        %v501 = vld [vmem:[%s297 + $0x170] sm:$0xf]
        %v502 = vld [vmem:[%s297 + $0x174] sm:$0xf]
        %v503 = vld [vmem:[%s297 + $0x178] sm:$0xf]
        %v504 = vld [vmem:[%s297 + $0x17c] sm:$0xf]
        %v505 = vld [vmem:[%s297 + $0x180] sm:$0xf]
        %v506 = vld [vmem:[%s297 + $0x184] sm:$0xf]
        %v507 = vld [vmem:[%s297 + $0x188] sm:$0xf]
        %v508 = vld [vmem:[%s297 + $0x18c] sm:$0xf]
        %v509 = vld [vmem:[%s297 + $0x190] sm:$0xf]
        %v510 = vld [vmem:[%s297 + $0x194] sm:$0xf]
        %v511 = vld [vmem:[%s297 + $0x198] sm:$0xf]
        %v512 = vld [vmem:[%s297 + $0x19c] sm:$0xf]
        %v513 = vld [vmem:[%s297 + $0x1a0] sm:$0xf]
        %v514 = vld [vmem:[%s297 + $0x1a4] sm:$0xf]
        %v515 = vld [vmem:[%s297 + $0x1a8] sm:$0xf]
        %v516 = vld [vmem:[%s297 + $0x1ac] sm:$0xf]
        %v517 = vld [vmem:[%s297 + $0x1b0] sm:$0xf]
        %v518 = vld [vmem:[%s297 + $0x1b4] sm:$0xf]
        %v519 = vld [vmem:[%s297 + $0x1b8] sm:$0xf]
        %v520 = vld [vmem:[%s297 + $0x1bc] sm:$0xf]
        %v521 = vld [vmem:[%s297 + $0x1c0] sm:$0xf]
        %v522 = vld [vmem:[%s297 + $0x1c4] sm:$0xf]
        %v523 = vld [vmem:[%s297 + $0x1c8] sm:$0xf]
        %v524 = vld [vmem:[%s297 + $0x1cc] sm:$0xf]
        %v525 = vld [vmem:[%s297 + $0x1d0] sm:$0xf]
        %v526 = vld [vmem:[%s297 + $0x1d4] sm:$0xf]
        %v527 = vld [vmem:[%s297 + $0x1d8] sm:$0xf]
        %v528 = vld [vmem:[%s297 + $0x1dc] sm:$0xf]
        %v529 = vld [vmem:[%s297 + $0x1e0] sm:$0xf]
        %v530 = vld [vmem:[%s297 + $0x1e4] sm:$0xf]
        %v531 = vld [vmem:[%s297 + $0x1e8] sm:$0xf]
        %v532 = vld [vmem:[%s297 + $0x1ec] sm:$0xf]
        %v533 = vld [vmem:[%s297 + $0x1f0] sm:$0xf]
        %v534 = vld [vmem:[%s297 + $0x1f4] sm:$0xf]
        %v535 = vld [vmem:[%s297 + $0x1f8] sm:$0xf]
        %v536 = vld [vmem:[%s297 + $0x1fc] sm:$0xf]
        %v537 = vld [vmem:[%s297 + $0x200] sm:$0xf]
        %v538 = vld [vmem:[%s297 + $0x204] sm:$0xf]
        %v539 = vld [vmem:[%s297 + $0x208] sm:$0xf]
        %v540 = vld [vmem:[%s297 + $0x20c] sm:$0xf]
        %v541 = vld [vmem:[%s297 + $0x210] sm:$0xf]
        %v542 = vld [vmem:[%s297 + $0x214] sm:$0xf]
        %v543 = vld [vmem:[%s297 + $0x218] sm:$0xf]
        %v544 = vld [vmem:[%s297 + $0x21c] sm:$0xf]
        %v545 = vld [vmem:[%s297 + $0x220] sm:$0xf]
        %v546 = vld [vmem:[%s297 + $0x224] sm:$0xf]
        %v547 = vld [vmem:[%s297 + $0x228] sm:$0xf]
        %v548 = vld [vmem:[%s297 + $0x22c] sm:$0xf]
        %v549 = vld [vmem:[%s297 + $0x230] sm:$0xf]
        %v550 = vld [vmem:[%s297 + $0x234] sm:$0xf]
        %v551 = vld [vmem:[%s297 + $0x238] sm:$0xf]
        %v552 = vld [vmem:[%s297 + $0x23c] sm:$0xf]
        %v553 = vld [vmem:[%s297 + $0x240] sm:$0xf]
        %v554 = vld [vmem:[%s297 + $0x244] sm:$0xf]
        %v555 = vld [vmem:[%s297 + $0x248] sm:$0xf]
        %v556 = vld [vmem:[%s297 + $0x24c] sm:$0xf]
        %v557 = vld [vmem:[%s297 + $0x250] sm:$0xf]
        %v558 = vld [vmem:[%s297 + $0x254] sm:$0xf]
        %v559 = vld [vmem:[%s297 + $0x258] sm:$0xf]
        %v560 = vld [vmem:[%s297 + $0x25c] sm:$0xf]
        %v561 = vld [vmem:[%s297 + $0x260] sm:$0xf]
        %v562 = vld [vmem:[%s297 + $0x264] sm:$0xf]
        %v563 = vld [vmem:[%s297 + $0x268] sm:$0xf]
        %v564 = vld [vmem:[%s297 + $0x26c] sm:$0xf]
        %v565 = vld [vmem:[%s297 + $0x270] sm:$0xf]
        %v566 = vld [vmem:[%s297 + $0x274] sm:$0xf]
        %v567 = vld [vmem:[%s297 + $0x278] sm:$0xf]
        %v568 = vld [vmem:[%s297 + $0x27c] sm:$0xf]
        %v569 = vld [vmem:[%s297 + $0x280] sm:$0xf]
        %v570 = vld [vmem:[%s297 + $0x284] sm:$0xf]
        %v571 = vld [vmem:[%s297 + $0x288] sm:$0xf]
        %v572 = vld [vmem:[%s297 + $0x28c] sm:$0xf]
        %v573 = vld [vmem:[%s297 + $0x290] sm:$0xf]
        %v574 = vld [vmem:[%s297 + $0x294] sm:$0xf]
        %v575 = vld [vmem:[%s297 + $0x298] sm:$0xf]
        %v576 = vld [vmem:[%s297 + $0x29c] sm:$0xf]
        %v577 = vld [vmem:[%s297 + $0x2a0] sm:$0xf]
        %v578 = vld [vmem:[%s297 + $0x2a4] sm:$0xf]
        %v579 = vld [vmem:[%s297 + $0x2a8] sm:$0xf]
        %v580 = vld [vmem:[%s297 + $0x2ac] sm:$0xf]
        %v581 = vld [vmem:[%s297 + $0x2b0] sm:$0xf]
        %v582 = vld [vmem:[%s297 + $0x2b4] sm:$0xf]
        %v583 = vld [vmem:[%s297 + $0x2b8] sm:$0xf]
        %v584 = vld [vmem:[%s297 + $0x2bc] sm:$0xf]
        %v585 = vld [vmem:[%s297 + $0x2c0] sm:$0xf]
        %v586 = vld [vmem:[%s297 + $0x2c4] sm:$0xf]
        %v587 = vld [vmem:[%s297 + $0x2c8] sm:$0xf]
        %v588 = vld [vmem:[%s297 + $0x2cc] sm:$0xf]
        %v589 = vld [vmem:[%s297 + $0x2d0] sm:$0xf]
        %v590 = vld [vmem:[%s297 + $0x2d4] sm:$0xf]
        %v591 = vld [vmem:[%s297 + $0x2d8] sm:$0xf]
        %v592 = vld [vmem:[%s297 + $0x2dc] sm:$0xf]
        %v593 = vld [vmem:[%s297 + $0x2e0] sm:$0xf]
        %v594 = vld [vmem:[%s297 + $0x2e4] sm:$0xf]
        %v595 = vld [vmem:[%s297 + $0x2e8] sm:$0xf]
        %v596 = vld [vmem:[%s297 + $0x2ec] sm:$0xf]
        %v597 = vld [vmem:[%s297 + $0x2f0] sm:$0xf]
        %v598 = vld [vmem:[%s297 + $0x2f4] sm:$0xf]
        %v599 = vld [vmem:[%s297 + $0x2f8] sm:$0xf]
        %v600 = vld [vmem:[%s297 + $0x2fc] sm:$0xf]
        %v601 = vld [vmem:[%s297 + $0x300] sm:$0xf]
        %v602 = vld [vmem:[%s297 + $0x304] sm:$0xf]
        %v603 = vld [vmem:[%s297 + $0x308] sm:$0xf]
        %v604 = vld [vmem:[%s297 + $0x30c] sm:$0xf]
        %v605 = vld [vmem:[%s297 + $0x310] sm:$0xf]
        %v606 = vld [vmem:[%s297 + $0x314] sm:$0xf]
        %v607 = vld [vmem:[%s297 + $0x318] sm:$0xf]
        %v608 = vld [vmem:[%s297 + $0x31c] sm:$0xf]
        %v609 = vld [vmem:[%s297 + $0x320] sm:$0xf]
        %v610 = vld [vmem:[%s297 + $0x324] sm:$0xf]
        %v611 = vld [vmem:[%s297 + $0x328] sm:$0xf]
        %v612 = vld [vmem:[%s297 + $0x32c] sm:$0xf]
        %v613 = vld [vmem:[%s297 + $0x330] sm:$0xf]
        %v614 = vld [vmem:[%s297 + $0x334] sm:$0xf]
        %v615 = vld [vmem:[%s297 + $0x338] sm:$0xf]
        %v616 = vld [vmem:[%s297 + $0x33c] sm:$0xf]
        %v617 = vld [vmem:[%s297 + $0x340] sm:$0xf]
        %v618 = vld [vmem:[%s297 + $0x344] sm:$0xf]
        %v619 = vld [vmem:[%s297 + $0x348] sm:$0xf]
        %v620 = vld [vmem:[%s297 + $0x34c] sm:$0xf]
        %v621 = vld [vmem:[%s297 + $0x350] sm:$0xf]
        %v622 = vld [vmem:[%s297 + $0x354] sm:$0xf]
        %v623 = vld [vmem:[%s297 + $0x358] sm:$0xf]
        %v624 = vld [vmem:[%s297 + $0x35c] sm:$0xf]
        %v625 = vld [vmem:[%s297 + $0x360] sm:$0xf]
        %v626 = vld [vmem:[%s297 + $0x364] sm:$0xf]
        %v627 = vld [vmem:[%s297 + $0x368] sm:$0xf]
        %v628 = vld [vmem:[%s297 + $0x36c] sm:$0xf]
        %v629 = vld [vmem:[%s297 + $0x370] sm:$0xf]
        %v630 = vld [vmem:[%s297 + $0x374] sm:$0xf]
        %v631 = vld [vmem:[%s297 + $0x378] sm:$0xf]
        %v632 = vld [vmem:[%s297 + $0x37c] sm:$0xf]
        %v633 = vld [vmem:[%s297 + $0x380] sm:$0xf]
        %v634 = vld [vmem:[%s297 + $0x384] sm:$0xf]
        %v635 = vld [vmem:[%s297 + $0x388] sm:$0xf]
        %v636 = vld [vmem:[%s297 + $0x38c] sm:$0xf]
        %v637 = vld [vmem:[%s297 + $0x390] sm:$0xf]
        %v638 = vld [vmem:[%s297 + $0x394] sm:$0xf]
        %v639 = vld [vmem:[%s297 + $0x398] sm:$0xf]
        %v640 = vld [vmem:[%s297 + $0x39c] sm:$0xf]
        %v641 = vld [vmem:[%s297 + $0x3a0] sm:$0xf]
        %v642 = vld [vmem:[%s297 + $0x3a4] sm:$0xf]
        %v643 = vld [vmem:[%s297 + $0x3a8] sm:$0xf]
        %v644 = vld [vmem:[%s297 + $0x3ac] sm:$0xf]
        %v645 = vld [vmem:[%s297 + $0x3b0] sm:$0xf]
        %v646 = vld [vmem:[%s297 + $0x3b4] sm:$0xf]
        %v647 = vld [vmem:[%s297 + $0x3b8] sm:$0xf]
        %v648 = vld [vmem:[%s297 + $0x3bc] sm:$0xf]
        %v649 = vld [vmem:[%s297 + $0x3c0] sm:$0xf]
        %v650 = vld [vmem:[%s297 + $0x3c4] sm:$0xf]
        %v651 = vld [vmem:[%s297 + $0x3c8] sm:$0xf]
        %v652 = vld [vmem:[%s297 + $0x3cc] sm:$0xf]
        %v653 = vld [vmem:[%s297 + $0x3d0] sm:$0xf]
        %v654 = vld [vmem:[%s297 + $0x3d4] sm:$0xf]
        %v655 = vld [vmem:[%s297 + $0x3d8] sm:$0xf]
        %v656 = vld [vmem:[%s297 + $0x3dc] sm:$0xf]
        %v657 = vld [vmem:[%s297 + $0x3e0] sm:$0xf]
        %v658 = vld [vmem:[%s297 + $0x3e4] sm:$0xf]
        %v659 = vld [vmem:[%s297 + $0x3e8] sm:$0xf]
        %v660 = vld [vmem:[%s297 + $0x3ec] sm:$0xf]
        %v661 = vld [vmem:[%s297 + $0x3f0] sm:$0xf]
        %v662 = vld [vmem:[%s297 + $0x3f4] sm:$0xf]
        %v663 = vld [vmem:[%s297 + $0x3f8] sm:$0xf]
        %v664 = vld [vmem:[%s297 + $0x3fc] sm:$0xf]
        %v665 = vld [vmem:[%s297 + $0x400] sm:$0xf]
        %v666 = vld [vmem:[%s297 + $0x404] sm:$0xf]
        %v667 = vld [vmem:[%s297 + $0x408] sm:$0xf]
        %v668 = vld [vmem:[%s297 + $0x40c] sm:$0xf]
        %v669 = vld [vmem:[%s297 + $0x410] sm:$0xf]
        %v670 = vld [vmem:[%s297 + $0x414] sm:$0xf]
        %v671 = vld [vmem:[%s297 + $0x418] sm:$0xf]
        %v672 = vld [vmem:[%s297 + $0x41c] sm:$0xf]
        %v673 = vld [vmem:[%s297 + $0x420] sm:$0xf]
        %v674 = vld [vmem:[%s297 + $0x424] sm:$0xf]
        %v675 = vld [vmem:[%s297 + $0x428] sm:$0xf]
        %v676 = vld [vmem:[%s297 + $0x42c] sm:$0xf]
        %v677 = vld [vmem:[%s297 + $0x430] sm:$0xf]
        %v678 = vld [vmem:[%s297 + $0x434] sm:$0xf]
        %v679 = vld [vmem:[%s297 + $0x438] sm:$0xf]
        %v680 = vld [vmem:[%s297 + $0x43c] sm:$0xf]
        %v681 = vld [vmem:[%s297 + $0x440] sm:$0xf]
        %v682 = vld [vmem:[%s297 + $0x444] sm:$0xf]
        %v683 = vld [vmem:[%s297 + $0x448] sm:$0xf]
        %v684 = vld [vmem:[%s297 + $0x44c] sm:$0xf]
        %v685 = vld [vmem:[%s297 + $0x450] sm:$0xf]
        %v686 = vld [vmem:[%s297 + $0x454] sm:$0xf]
        %v687 = vld [vmem:[%s297 + $0x458] sm:$0xf]
        %v688 = vld [vmem:[%s297 + $0x45c] sm:$0xf]
        %v689 = vld [vmem:[%s297 + $0x460] sm:$0xf]
        %v690 = vld [vmem:[%s297 + $0x464] sm:$0xf]
        %v691 = vld [vmem:[%s297 + $0x468] sm:$0xf]
        %v692 = vld [vmem:[%s297 + $0x46c] sm:$0xf]
        %v693 = vld [vmem:[%s297 + $0x470] sm:$0xf]
        %v694 = vld [vmem:[%s297 + $0x474] sm:$0xf]
        %v695 = vld [vmem:[%s297 + $0x478] sm:$0xf]
        %v696 = vld [vmem:[%s297 + $0x47c] sm:$0xf]
        %v697 = vld [vmem:[%s297 + $0x480] sm:$0xf]
        %v698 = vld [vmem:[%s297 + $0x484] sm:$0xf]
        %v699 = vld [vmem:[%s297 + $0x488] sm:$0xf]
        %v700 = vld [vmem:[%s297 + $0x48c] sm:$0xf]
        %v701 = vld [vmem:[%s297 + $0x490] sm:$0xf]
        %v702 = vld [vmem:[%s297 + $0x494] sm:$0xf]
        %v703 = vld [vmem:[%s297 + $0x498] sm:$0xf]
        %v704 = vld [vmem:[%s297 + $0x49c] sm:$0xf]
        %v705 = vld [vmem:[%s297 + $0x4a0] sm:$0xf]
        %v706 = vld [vmem:[%s297 + $0x4a4] sm:$0xf]
        %v707 = vld [vmem:[%s297 + $0x4a8] sm:$0xf]
        %v708 = vld [vmem:[%s297 + $0x4ac] sm:$0xf]
        %v709 = vld [vmem:[%s297 + $0x4b0] sm:$0xf]
        %v710 = vld [vmem:[%s297 + $0x4b4] sm:$0xf]
        %v711 = vld [vmem:[%s297 + $0x4b8] sm:$0xf]
        %v712 = vld [vmem:[%s297 + $0x4bc] sm:$0xf]
        %v713 = vld [vmem:[%s297 + $0x4c0] sm:$0xf]
        %v714 = vld [vmem:[%s297 + $0x4c4] sm:$0xf]
        %v715 = vld [vmem:[%s297 + $0x4c8] sm:$0xf]
        %v716 = vld [vmem:[%s297 + $0x4cc] sm:$0xf]
        %v717 = vld [vmem:[%s297 + $0x4d0] sm:$0xf]
        %v718 = vld [vmem:[%s297 + $0x4d4] sm:$0xf]
        %v719 = vld [vmem:[%s297 + $0x4d8] sm:$0xf]
        %v720 = vld [vmem:[%s297 + $0x4dc] sm:$0xf]
        %v721 = vld [vmem:[%s297 + $0x4e0] sm:$0xf]
        %v722 = vld [vmem:[%s297 + $0x4e4] sm:$0xf]
        %v723 = vld [vmem:[%s297 + $0x4e8] sm:$0xf]
        %v724 = vld [vmem:[%s297 + $0x4ec] sm:$0xf]
        %v725 = vld [vmem:[%s297 + $0x4f0] sm:$0xf]
        %v726 = vld [vmem:[%s297 + $0x4f4] sm:$0xf]
        %v727 = vld [vmem:[%s297 + $0x4f8] sm:$0xf]
        %v728 = vld [vmem:[%s297 + $0x4fc] sm:$0xf]
        %v729 = vld [vmem:[%s297 + $0x500] sm:$0xf]
        %v730 = vld [vmem:[%s297 + $0x504] sm:$0xf]
        %v731 = vld [vmem:[%s297 + $0x508] sm:$0xf]
        %v732 = vld [vmem:[%s297 + $0x50c] sm:$0xf]
        %v733 = vld [vmem:[%s297 + $0x510] sm:$0xf]
        %v734 = vld [vmem:[%s297 + $0x514] sm:$0xf]
        %v735 = vld [vmem:[%s297 + $0x518] sm:$0xf]
        %v736 = vld [vmem:[%s297 + $0x51c] sm:$0xf]
        %v737 = vld [vmem:[%s297 + $0x520] sm:$0xf]
        %v738 = vld [vmem:[%s297 + $0x524] sm:$0xf]
        %v739 = vld [vmem:[%s297 + $0x528] sm:$0xf]
        %v740 = vld [vmem:[%s297 + $0x52c] sm:$0xf]
        %v741 = vld [vmem:[%s297 + $0x530] sm:$0xf]
        %v742 = vld [vmem:[%s297 + $0x534] sm:$0xf]
        %v743 = vld [vmem:[%s297 + $0x538] sm:$0xf]
        %v744 = vld [vmem:[%s297 + $0x53c] sm:$0xf]
        %v745 = vld [vmem:[%s297 + $0x540] sm:$0xf]
        %v746 = vld [vmem:[%s297 + $0x544] sm:$0xf]
        %v747 = vld [vmem:[%s297 + $0x548] sm:$0xf]
        %v748 = vld [vmem:[%s297 + $0x54c] sm:$0xf]
        %v749 = vld [vmem:[%s297 + $0x550] sm:$0xf]
        %v750 = vld [vmem:[%s297 + $0x554] sm:$0xf]
        %v751 = vld [vmem:[%s297 + $0x558] sm:$0xf]
        %v752 = vld [vmem:[%s297 + $0x55c] sm:$0xf]
        %v753 = vld [vmem:[%s297 + $0x560] sm:$0xf]
        %v754 = vld [vmem:[%s297 + $0x564] sm:$0xf]
        %v755 = vld [vmem:[%s297 + $0x568] sm:$0xf]
        %v756 = vld [vmem:[%s297 + $0x56c] sm:$0xf]
        %v757 = vld [vmem:[%s297 + $0x570] sm:$0xf]
        %v758 = vld [vmem:[%s297 + $0x574] sm:$0xf]
        %v759 = vld [vmem:[%s297 + $0x578] sm:$0xf]
        %v760 = vld [vmem:[%s297 + $0x57c] sm:$0xf]
        %v761 = vld [vmem:[%s297 + $0x580] sm:$0xf]
        %v762 = vld [vmem:[%s297 + $0x584] sm:$0xf]
        %v763 = vld [vmem:[%s297 + $0x588] sm:$0xf]
        %v764 = vld [vmem:[%s297 + $0x58c] sm:$0xf]
        %v765 = vld [vmem:[%s297 + $0x590] sm:$0xf]
        %v766 = vld [vmem:[%s297 + $0x594] sm:$0xf]
        %v767 = vld [vmem:[%s297 + $0x598] sm:$0xf]
        %v768 = vld [vmem:[%s297 + $0x59c] sm:$0xf]
        %v769 = vld [vmem:[%s297 + $0x5a0] sm:$0xf]
        %v770 = vld [vmem:[%s297 + $0x5a4] sm:$0xf]
        %v771 = vld [vmem:[%s297 + $0x5a8] sm:$0xf]
        %v772 = vld [vmem:[%s297 + $0x5ac] sm:$0xf]
        %v773 = vld [vmem:[%s297 + $0x5b0] sm:$0xf]
        %v774 = vld [vmem:[%s297 + $0x5b4] sm:$0xf]
        %v775 = vld [vmem:[%s297 + $0x5b8] sm:$0xf]
        %v776 = vld [vmem:[%s297 + $0x5bc] sm:$0xf]
        %v777 = vld [vmem:[%s297 + $0x5c0] sm:$0xf]
        %v778 = vld [vmem:[%s297 + $0x5c4] sm:$0xf]
        %v779 = vld [vmem:[%s297 + $0x5c8] sm:$0xf]
        %v780 = vld [vmem:[%s297 + $0x5cc] sm:$0xf]
        %v781 = vld [vmem:[%s297 + $0x5d0] sm:$0xf]
        %v782 = vld [vmem:[%s297 + $0x5d4] sm:$0xf]
        %v783 = vld [vmem:[%s297 + $0x5d8] sm:$0xf]
        %v784 = vld [vmem:[%s297 + $0x5dc] sm:$0xf]
        %v785 = vld [vmem:[%s297 + $0x5e0] sm:$0xf]
        %v786 = vld [vmem:[%s297 + $0x5e4] sm:$0xf]
        %v787 = vld [vmem:[%s297 + $0x5e8] sm:$0xf]
        %v788 = vld [vmem:[%s297 + $0x5ec] sm:$0xf]
        %v789 = vld [vmem:[%s297 + $0x5f0] sm:$0xf]
        %v790 = vld [vmem:[%s297 + $0x5f4] sm:$0xf]
        %v791 = vld [vmem:[%s297 + $0x5f8] sm:$0xf]
        %v792 = vld [vmem:[%s297 + $0x5fc] sm:$0xf]
        %v793 = vld [vmem:[%s297 + $0x600] sm:$0xf]
        %v794 = vld [vmem:[%s297 + $0x604] sm:$0xf]
        %v795 = vld [vmem:[%s297 + $0x608] sm:$0xf]
        %v796 = vld [vmem:[%s297 + $0x60c] sm:$0xf]
        %v797 = vld [vmem:[%s297 + $0x610] sm:$0xf]
        %v798 = vld [vmem:[%s297 + $0x614] sm:$0xf]
        %v799 = vld [vmem:[%s297 + $0x618] sm:$0xf]
        %v800 = vld [vmem:[%s297 + $0x61c] sm:$0xf]
        %v801 = vld [vmem:[%s297 + $0x620] sm:$0xf]
        %v802 = vld [vmem:[%s297 + $0x624] sm:$0xf]
        %v803 = vld [vmem:[%s297 + $0x628] sm:$0xf]
        %v804 = vld [vmem:[%s297 + $0x62c] sm:$0xf]
        %v805 = vld [vmem:[%s297 + $0x630] sm:$0xf]
        %v806 = vld [vmem:[%s297 + $0x634] sm:$0xf]
        %v807 = vld [vmem:[%s297 + $0x638] sm:$0xf]
        %v808 = vld [vmem:[%s297 + $0x63c] sm:$0xf]
        %v809 = vld [vmem:[%s297 + $0x640] sm:$0xf]
        %v810 = vld [vmem:[%s297 + $0x644] sm:$0xf]
        %v811 = vld [vmem:[%s297 + $0x648] sm:$0xf]
        %v812 = vld [vmem:[%s297 + $0x64c] sm:$0xf]
        %v813 = vld [vmem:[%s297 + $0x650] sm:$0xf]
        %v814 = vld [vmem:[%s297 + $0x654] sm:$0xf]
        %v815 = vld [vmem:[%s297 + $0x658] sm:$0xf]
        %v816 = vld [vmem:[%s297 + $0x65c] sm:$0xf]
        %v817 = vld [vmem:[%s297 + $0x660] sm:$0xf]
        %v818 = vld [vmem:[%s297 + $0x664] sm:$0xf]
        %v819 = vld [vmem:[%s297 + $0x668] sm:$0xf]
        %v820 = vld [vmem:[%s297 + $0x66c] sm:$0xf]
        %v821 = vld [vmem:[%s297 + $0x670] sm:$0xf]
        %v822 = vld [vmem:[%s297 + $0x674] sm:$0xf]
        %v823 = vld [vmem:[%s297 + $0x678] sm:$0xf]
        %v824 = vld [vmem:[%s297 + $0x67c] sm:$0xf]
        %v825 = vld [vmem:[%s297 + $0x680] sm:$0xf]
        %v826 = vld [vmem:[%s297 + $0x684] sm:$0xf]
        %v827 = vld [vmem:[%s297 + $0x688] sm:$0xf]
        %v828 = vld [vmem:[%s297 + $0x68c] sm:$0xf]
        %v829 = vld [vmem:[%s297 + $0x690] sm:$0xf]
        %v830 = vld [vmem:[%s297 + $0x694] sm:$0xf]
        %v831 = vld [vmem:[%s297 + $0x698] sm:$0xf]
        %v832 = vld [vmem:[%s297 + $0x69c] sm:$0xf]
        %v833 = vld [vmem:[%s297 + $0x6a0] sm:$0xf]
        %v834 = vld [vmem:[%s297 + $0x6a4] sm:$0xf]
        %v835 = vld [vmem:[%s297 + $0x6a8] sm:$0xf]
        %v836 = vld [vmem:[%s297 + $0x6ac] sm:$0xf]
        %v837 = vld [vmem:[%s297 + $0x6b0] sm:$0xf]
        %v838 = vld [vmem:[%s297 + $0x6b4] sm:$0xf]
        %v839 = vld [vmem:[%s297 + $0x6b8] sm:$0xf]
        %v840 = vld [vmem:[%s297 + $0x6bc] sm:$0xf]
        %v841 = vld [vmem:[%s297 + $0x6c0] sm:$0xf]
        %v842 = vld [vmem:[%s297 + $0x6c4] sm:$0xf]
        %v843 = vld [vmem:[%s297 + $0x6c8] sm:$0xf]
        %v844 = vld [vmem:[%s297 + $0x6cc] sm:$0xf]
        %v845 = vld [vmem:[%s297 + $0x6d0] sm:$0xf]
        %v846 = vld [vmem:[%s297 + $0x6d4] sm:$0xf]
        %v847 = vld [vmem:[%s297 + $0x6d8] sm:$0xf]
        %v848 = vld [vmem:[%s297 + $0x6dc] sm:$0xf]
        %v849 = vld [vmem:[%s297 + $0x6e0] sm:$0xf]
        %v850 = vld [vmem:[%s297 + $0x6e4] sm:$0xf]
        %v851 = vld [vmem:[%s297 + $0x6e8] sm:$0xf]
        %v852 = vld [vmem:[%s297 + $0x6ec] sm:$0xf]
        %v853 = vld [vmem:[%s297 + $0x6f0] sm:$0xf]
        %v854 = vld [vmem:[%s297 + $0x6f4] sm:$0xf]
        %v855 = vld [vmem:[%s297 + $0x6f8] sm:$0xf]
        %v856 = vld [vmem:[%s297 + $0x6fc] sm:$0xf]
        %v857 = vld [vmem:[%s297 + $0x700] sm:$0xf]
        %v858 = vld [vmem:[%s297 + $0x704] sm:$0xf]
        %v859 = vld [vmem:[%s297 + $0x708] sm:$0xf]
        %v860 = vld [vmem:[%s297 + $0x70c] sm:$0xf]
        %v861 = vld [vmem:[%s297 + $0x710] sm:$0xf]
        %v862 = vld [vmem:[%s297 + $0x714] sm:$0xf]
        %v863 = vld [vmem:[%s297 + $0x718] sm:$0xf]
        %v864 = vld [vmem:[%s297 + $0x71c] sm:$0xf]
        %v865 = vld [vmem:[%s297 + $0x720] sm:$0xf]
        %v866 = vld [vmem:[%s297 + $0x724] sm:$0xf]
        %v867 = vld [vmem:[%s297 + $0x728] sm:$0xf]
        %v868 = vld [vmem:[%s297 + $0x72c] sm:$0xf]
        %v869 = vld [vmem:[%s297 + $0x730] sm:$0xf]
        %v870 = vld [vmem:[%s297 + $0x734] sm:$0xf]
        %v871 = vld [vmem:[%s297 + $0x738] sm:$0xf]
        %v872 = vld [vmem:[%s297 + $0x73c] sm:$0xf]
        %v873 = vld [vmem:[%s297 + $0x740] sm:$0xf]
        %v874 = vld [vmem:[%s297 + $0x744] sm:$0xf]
        %v875 = vld [vmem:[%s297 + $0x748] sm:$0xf]
        %v876 = vld [vmem:[%s297 + $0x74c] sm:$0xf]
        %v877 = vld [vmem:[%s297 + $0x750] sm:$0xf]
        %v878 = vld [vmem:[%s297 + $0x754] sm:$0xf]
        %v879 = vld [vmem:[%s297 + $0x758] sm:$0xf]
        %v880 = vld [vmem:[%s297 + $0x75c] sm:$0xf]
        %v881 = vld [vmem:[%s297 + $0x760] sm:$0xf]
        %v882 = vld [vmem:[%s297 + $0x764] sm:$0xf]
        %v883 = vld [vmem:[%s297 + $0x768] sm:$0xf]
        %v884 = vld [vmem:[%s297 + $0x76c] sm:$0xf]
        %v885 = vld [vmem:[%s297 + $0x770] sm:$0xf]
        %v886 = vld [vmem:[%s297 + $0x774] sm:$0xf]
        %v887 = vld [vmem:[%s297 + $0x778] sm:$0xf]
        %v888 = vld [vmem:[%s297 + $0x77c] sm:$0xf]
        %v889 = vld [vmem:[%s297 + $0x780] sm:$0xf]
        %v890 = vld [vmem:[%s297 + $0x784] sm:$0xf]
        %v891 = vld [vmem:[%s297 + $0x788] sm:$0xf]
        %v892 = vld [vmem:[%s297 + $0x78c] sm:$0xf]
        %v893 = vld [vmem:[%s297 + $0x790] sm:$0xf]
        %v894 = vld [vmem:[%s297 + $0x794] sm:$0xf]
        %v895 = vld [vmem:[%s297 + $0x798] sm:$0xf]
        %v896 = vld [vmem:[%s297 + $0x79c] sm:$0xf]
        %v897 = vld [vmem:[%s297 + $0x7a0] sm:$0xf]
        %v898 = vld [vmem:[%s297 + $0x7a4] sm:$0xf]
        %v899 = vld [vmem:[%s297 + $0x7a8] sm:$0xf]
        %v900 = vld [vmem:[%s297 + $0x7ac] sm:$0xf]
        %v901 = vld [vmem:[%s297 + $0x7b0] sm:$0xf]
        %v902 = vld [vmem:[%s297 + $0x7b4] sm:$0xf]
        %v903 = vld [vmem:[%s297 + $0x7b8] sm:$0xf]
        %v904 = vld [vmem:[%s297 + $0x7bc] sm:$0xf]
        %v905 = vld [vmem:[%s297 + $0x7c0] sm:$0xf]
        %v906 = vld [vmem:[%s297 + $0x7c4] sm:$0xf]
        %v907 = vld [vmem:[%s297 + $0x7c8] sm:$0xf]
        %v908 = vld [vmem:[%s297 + $0x7cc] sm:$0xf]
        %v909 = vld [vmem:[%s297 + $0x7d0] sm:$0xf]
        %v910 = vld [vmem:[%s297 + $0x7d4] sm:$0xf]
        %v911 = vld [vmem:[%s297 + $0x7d8] sm:$0xf]
        %v912 = vld [vmem:[%s297 + $0x7dc] sm:$0xf]
        %v913 = vld [vmem:[%s297 + $0x7e0] sm:$0xf]
        %v914 = vld [vmem:[%s297 + $0x7e4] sm:$0xf]
        %v915 = vld [vmem:[%s297 + $0x7e8] sm:$0xf]
        %v916 = vld [vmem:[%s297 + $0x7ec] sm:$0xf]
        %v917 = vld [vmem:[%s297 + $0x7f0] sm:$0xf]
        %v918 = vld [vmem:[%s297 + $0x7f4] sm:$0xf]
        %v919 = vld [vmem:[%s297 + $0x7f8] sm:$0xf]
        %v920 = vld [vmem:[%s297 + $0x7fc] sm:$0xf]
        %v921 = vunpack.c.l.bf16 %v409
        %v922 = vunpack.c.l.bf16 %v410
        %v923 = vunpack.c.l.bf16 %v411
        %v924 = vunpack.c.l.bf16 %v412
        %v925 = vunpack.c.l.bf16 %v413
        %v926 = vunpack.c.l.bf16 %v414
        %v927 = vunpack.c.l.bf16 %v415
        %v928 = vunpack.c.l.bf16 %v416
        %v929 = vunpack.c.l.bf16 %v417
        %v930 = vunpack.c.l.bf16 %v418
        %v931 = vunpack.c.l.bf16 %v419
        %v932 = vunpack.c.l.bf16 %v420
        %v933 = vunpack.c.l.bf16 %v421
        %v934 = vunpack.c.l.bf16 %v422
        %v935 = vunpack.c.l.bf16 %v423
        %v936 = vunpack.c.l.bf16 %v424
        %v937 = vunpack.c.l.bf16 %v425
        %v938 = vunpack.c.l.bf16 %v426
        %v939 = vunpack.c.l.bf16 %v427
        %v940 = vunpack.c.l.bf16 %v428
        %v941 = vunpack.c.l.bf16 %v429
        %v942 = vunpack.c.l.bf16 %v430
        %v943 = vunpack.c.l.bf16 %v431
        %v944 = vunpack.c.l.bf16 %v432
        %v945 = vunpack.c.l.bf16 %v433
        %v946 = vunpack.c.l.bf16 %v434
        %v947 = vunpack.c.l.bf16 %v435
        %v948 = vunpack.c.l.bf16 %v436
        %v949 = vunpack.c.l.bf16 %v437
        %v950 = vunpack.c.l.bf16 %v438
        %v951 = vunpack.c.l.bf16 %v439
        %v952 = vunpack.c.l.bf16 %v440
        %v953 = vunpack.c.l.bf16 %v441
        %v954 = vunpack.c.l.bf16 %v442
        %v955 = vunpack.c.l.bf16 %v443
        %v956 = vunpack.c.l.bf16 %v444
        %v957 = vunpack.c.l.bf16 %v445
        %v958 = vunpack.c.l.bf16 %v446
        %v959 = vunpack.c.l.bf16 %v447
        %v960 = vunpack.c.l.bf16 %v448
        %v961 = vunpack.c.l.bf16 %v449
        %v962 = vunpack.c.l.bf16 %v450
        %v963 = vunpack.c.l.bf16 %v451
        %v964 = vunpack.c.l.bf16 %v452
        %v965 = vunpack.c.l.bf16 %v453
        %v966 = vunpack.c.l.bf16 %v454
        %v967 = vunpack.c.l.bf16 %v455
        %v968 = vunpack.c.l.bf16 %v456
        %v969 = vunpack.c.l.bf16 %v457
        %v970 = vunpack.c.l.bf16 %v458
        %v971 = vunpack.c.l.bf16 %v459
        %v972 = vunpack.c.l.bf16 %v460
        %v973 = vunpack.c.l.bf16 %v461
        %v974 = vunpack.c.l.bf16 %v462
        %v975 = vunpack.c.l.bf16 %v463
        %v976 = vunpack.c.l.bf16 %v464
        %v977 = vunpack.c.l.bf16 %v465
        %v978 = vunpack.c.l.bf16 %v466
        %v979 = vunpack.c.l.bf16 %v467
        %v980 = vunpack.c.l.bf16 %v468
        %v981 = vunpack.c.l.bf16 %v469
        %v982 = vunpack.c.l.bf16 %v470
        %v983 = vunpack.c.l.bf16 %v471
        %v984 = vunpack.c.l.bf16 %v472
        %v985 = vunpack.c.l.bf16 %v473
        %v986 = vunpack.c.l.bf16 %v474
        %v987 = vunpack.c.l.bf16 %v475
        %v988 = vunpack.c.l.bf16 %v476
        %v989 = vunpack.c.l.bf16 %v477
        %v990 = vunpack.c.l.bf16 %v478
        %v991 = vunpack.c.l.bf16 %v479
        %v992 = vunpack.c.l.bf16 %v480
        %v993 = vunpack.c.l.bf16 %v481
        %v994 = vunpack.c.l.bf16 %v482
        %v995 = vunpack.c.l.bf16 %v483
        %v996 = vunpack.c.l.bf16 %v484
        %v997 = vunpack.c.l.bf16 %v485
        %v998 = vunpack.c.l.bf16 %v486
        %v999 = vunpack.c.l.bf16 %v487
        %v1000 = vunpack.c.l.bf16 %v488
        %v1001 = vunpack.c.l.bf16 %v489
        %v1002 = vunpack.c.l.bf16 %v490
        %v1003 = vunpack.c.l.bf16 %v491
        %v1004 = vunpack.c.l.bf16 %v492
        %v1005 = vunpack.c.l.bf16 %v493
        %v1006 = vunpack.c.l.bf16 %v494
        %v1007 = vunpack.c.l.bf16 %v495
        %v1008 = vunpack.c.l.bf16 %v496
        %v1009 = vunpack.c.l.bf16 %v497
        %v1010 = vunpack.c.l.bf16 %v498
        %v1011 = vunpack.c.l.bf16 %v499
        %v1012 = vunpack.c.l.bf16 %v500
        %v1013 = vunpack.c.l.bf16 %v501
        %v1014 = vunpack.c.l.bf16 %v502
        %v1015 = vunpack.c.l.bf16 %v503
        %v1016 = vunpack.c.l.bf16 %v504
        %v1017 = vunpack.c.l.bf16 %v505
        %v1018 = vunpack.c.l.bf16 %v506
        %v1019 = vunpack.c.l.bf16 %v507
        %v1020 = vunpack.c.l.bf16 %v508
        %v1021 = vunpack.c.l.bf16 %v509
        %v1022 = vunpack.c.l.bf16 %v510
        %v1023 = vunpack.c.l.bf16 %v511
        %v1024 = vunpack.c.l.bf16 %v512
        %v1025 = vunpack.c.l.bf16 %v513
        %v1026 = vunpack.c.l.bf16 %v514
        %v1027 = vunpack.c.l.bf16 %v515
        %v1028 = vunpack.c.l.bf16 %v516
        %v1029 = vunpack.c.l.bf16 %v517
        %v1030 = vunpack.c.l.bf16 %v518
        %v1031 = vunpack.c.l.bf16 %v519
        %v1032 = vunpack.c.l.bf16 %v520
        %v1033 = vunpack.c.l.bf16 %v521
        %v1034 = vunpack.c.l.bf16 %v522
        %v1035 = vunpack.c.l.bf16 %v523
        %v1036 = vunpack.c.l.bf16 %v524
        %v1037 = vunpack.c.l.bf16 %v525
        %v1038 = vunpack.c.l.bf16 %v526
        %v1039 = vunpack.c.l.bf16 %v527
        %v1040 = vunpack.c.l.bf16 %v528
        %v1041 = vunpack.c.l.bf16 %v529
        %v1042 = vunpack.c.l.bf16 %v530
        %v1043 = vunpack.c.l.bf16 %v531
        %v1044 = vunpack.c.l.bf16 %v532
        %v1045 = vunpack.c.l.bf16 %v533
        %v1046 = vunpack.c.l.bf16 %v534
        %v1047 = vunpack.c.l.bf16 %v535
        %v1048 = vunpack.c.l.bf16 %v536
        %v1049 = vunpack.c.l.bf16 %v537
        %v1050 = vunpack.c.l.bf16 %v538
        %v1051 = vunpack.c.l.bf16 %v539
        %v1052 = vunpack.c.l.bf16 %v540
        %v1053 = vunpack.c.l.bf16 %v541
        %v1054 = vunpack.c.l.bf16 %v542
        %v1055 = vunpack.c.l.bf16 %v543
        %v1056 = vunpack.c.l.bf16 %v544
        %v1057 = vunpack.c.l.bf16 %v545
        %v1058 = vunpack.c.l.bf16 %v546
        %v1059 = vunpack.c.l.bf16 %v547
        %v1060 = vunpack.c.l.bf16 %v548
        %v1061 = vunpack.c.l.bf16 %v549
        %v1062 = vunpack.c.l.bf16 %v550
        %v1063 = vunpack.c.l.bf16 %v551
        %v1064 = vunpack.c.l.bf16 %v552
        %v1065 = vunpack.c.l.bf16 %v553
        %v1066 = vunpack.c.l.bf16 %v554
        %v1067 = vunpack.c.l.bf16 %v555
        %v1068 = vunpack.c.l.bf16 %v556
        %v1069 = vunpack.c.l.bf16 %v557
        %v1070 = vunpack.c.l.bf16 %v558
        %v1071 = vunpack.c.l.bf16 %v559
        %v1072 = vunpack.c.l.bf16 %v560
        %v1073 = vunpack.c.l.bf16 %v561
        %v1074 = vunpack.c.l.bf16 %v562
        %v1075 = vunpack.c.l.bf16 %v563
        %v1076 = vunpack.c.l.bf16 %v564
        %v1077 = vunpack.c.l.bf16 %v565
        %v1078 = vunpack.c.l.bf16 %v566
        %v1079 = vunpack.c.l.bf16 %v567
        %v1080 = vunpack.c.l.bf16 %v568
        %v1081 = vunpack.c.l.bf16 %v569
        %v1082 = vunpack.c.l.bf16 %v570
        %v1083 = vunpack.c.l.bf16 %v571
        %v1084 = vunpack.c.l.bf16 %v572
        %v1085 = vunpack.c.l.bf16 %v573
        %v1086 = vunpack.c.l.bf16 %v574
        %v1087 = vunpack.c.l.bf16 %v575
        %v1088 = vunpack.c.l.bf16 %v576
        %v1089 = vunpack.c.l.bf16 %v577
        %v1090 = vunpack.c.l.bf16 %v578
        %v1091 = vunpack.c.l.bf16 %v579
        %v1092 = vunpack.c.l.bf16 %v580
        %v1093 = vunpack.c.l.bf16 %v581
        %v1094 = vunpack.c.l.bf16 %v582
        %v1095 = vunpack.c.l.bf16 %v583
        %v1096 = vunpack.c.l.bf16 %v584
        %v1097 = vunpack.c.l.bf16 %v585
        %v1098 = vunpack.c.l.bf16 %v586
        %v1099 = vunpack.c.l.bf16 %v587
        %v1100 = vunpack.c.l.bf16 %v588
        %v1101 = vunpack.c.l.bf16 %v589
        %v1102 = vunpack.c.l.bf16 %v590
        %v1103 = vunpack.c.l.bf16 %v591
        %v1104 = vunpack.c.l.bf16 %v592
        %v1105 = vunpack.c.l.bf16 %v593
        %v1106 = vunpack.c.l.bf16 %v594
        %v1107 = vunpack.c.l.bf16 %v595
        %v1108 = vunpack.c.l.bf16 %v596
        %v1109 = vunpack.c.l.bf16 %v597
        %v1110 = vunpack.c.l.bf16 %v598
        %v1111 = vunpack.c.l.bf16 %v599
        %v1112 = vunpack.c.l.bf16 %v600
        %v1113 = vunpack.c.l.bf16 %v601
        %v1114 = vunpack.c.l.bf16 %v602
        %v1115 = vunpack.c.l.bf16 %v603
        %v1116 = vunpack.c.l.bf16 %v604
        %v1117 = vunpack.c.l.bf16 %v605
        %v1118 = vunpack.c.l.bf16 %v606
        %v1119 = vunpack.c.l.bf16 %v607
        %v1120 = vunpack.c.l.bf16 %v608
        %v1121 = vunpack.c.l.bf16 %v609
        %v1122 = vunpack.c.l.bf16 %v610
        %v1123 = vunpack.c.l.bf16 %v611
        %v1124 = vunpack.c.l.bf16 %v612
        %v1125 = vunpack.c.l.bf16 %v613
        %v1126 = vunpack.c.l.bf16 %v614
        %v1127 = vunpack.c.l.bf16 %v615
        %v1128 = vunpack.c.l.bf16 %v616
        %v1129 = vunpack.c.l.bf16 %v617
        %v1130 = vunpack.c.l.bf16 %v618
        %v1131 = vunpack.c.l.bf16 %v619
        %v1132 = vunpack.c.l.bf16 %v620
        %v1133 = vunpack.c.l.bf16 %v621
        %v1134 = vunpack.c.l.bf16 %v622
        %v1135 = vunpack.c.l.bf16 %v623
        %v1136 = vunpack.c.l.bf16 %v624
        %v1137 = vunpack.c.l.bf16 %v625
        %v1138 = vunpack.c.l.bf16 %v626
        %v1139 = vunpack.c.l.bf16 %v627
        %v1140 = vunpack.c.l.bf16 %v628
        %v1141 = vunpack.c.l.bf16 %v629
        %v1142 = vunpack.c.l.bf16 %v630
        %v1143 = vunpack.c.l.bf16 %v631
        %v1144 = vunpack.c.l.bf16 %v632
        %v1145 = vunpack.c.l.bf16 %v633
        %v1146 = vunpack.c.l.bf16 %v634
        %v1147 = vunpack.c.l.bf16 %v635
        %v1148 = vunpack.c.l.bf16 %v636
        %v1149 = vunpack.c.l.bf16 %v637
        %v1150 = vunpack.c.l.bf16 %v638
        %v1151 = vunpack.c.l.bf16 %v639
        %v1152 = vunpack.c.l.bf16 %v640
        %v1153 = vunpack.c.l.bf16 %v641
        %v1154 = vunpack.c.l.bf16 %v642
        %v1155 = vunpack.c.l.bf16 %v643
        %v1156 = vunpack.c.l.bf16 %v644
        %v1157 = vunpack.c.l.bf16 %v645
        %v1158 = vunpack.c.l.bf16 %v646
        %v1159 = vunpack.c.l.bf16 %v647
        %v1160 = vunpack.c.l.bf16 %v648
        %v1161 = vunpack.c.l.bf16 %v649
        %v1162 = vunpack.c.l.bf16 %v650
        %v1163 = vunpack.c.l.bf16 %v651
        %v1164 = vunpack.c.l.bf16 %v652
        %v1165 = vunpack.c.l.bf16 %v653
        %v1166 = vunpack.c.l.bf16 %v654
        %v1167 = vunpack.c.l.bf16 %v655
        %v1168 = vunpack.c.l.bf16 %v656
        %v1169 = vunpack.c.l.bf16 %v657
        %v1170 = vunpack.c.l.bf16 %v658
        %v1171 = vunpack.c.l.bf16 %v659
        %v1172 = vunpack.c.l.bf16 %v660
        %v1173 = vunpack.c.l.bf16 %v661
        %v1174 = vunpack.c.l.bf16 %v662
        %v1175 = vunpack.c.l.bf16 %v663
        %v1176 = vunpack.c.l.bf16 %v664
        %v1177 = vunpack.c.l.bf16 %v665
        %v1178 = vunpack.c.l.bf16 %v666
        %v1179 = vunpack.c.l.bf16 %v667
        %v1180 = vunpack.c.l.bf16 %v668
        %v1181 = vunpack.c.l.bf16 %v669
        %v1182 = vunpack.c.l.bf16 %v670
        %v1183 = vunpack.c.l.bf16 %v671
        %v1184 = vunpack.c.l.bf16 %v672
        %v1185 = vunpack.c.l.bf16 %v673
        %v1186 = vunpack.c.l.bf16 %v674
        %v1187 = vunpack.c.l.bf16 %v675
        %v1188 = vunpack.c.l.bf16 %v676
        %v1189 = vunpack.c.l.bf16 %v677
        %v1190 = vunpack.c.l.bf16 %v678
        %v1191 = vunpack.c.l.bf16 %v679
        %v1192 = vunpack.c.l.bf16 %v680
        %v1193 = vunpack.c.l.bf16 %v681
        %v1194 = vunpack.c.l.bf16 %v682
        %v1195 = vunpack.c.l.bf16 %v683
        %v1196 = vunpack.c.l.bf16 %v684
        %v1197 = vunpack.c.l.bf16 %v685
        %v1198 = vunpack.c.l.bf16 %v686
        %v1199 = vunpack.c.l.bf16 %v687
        %v1200 = vunpack.c.l.bf16 %v688
        %v1201 = vunpack.c.l.bf16 %v689
        %v1202 = vunpack.c.l.bf16 %v690
        %v1203 = vunpack.c.l.bf16 %v691
        %v1204 = vunpack.c.l.bf16 %v692
        %v1205 = vunpack.c.l.bf16 %v693
        %v1206 = vunpack.c.l.bf16 %v694
        %v1207 = vunpack.c.l.bf16 %v695
        %v1208 = vunpack.c.l.bf16 %v696
        %v1209 = vunpack.c.l.bf16 %v697
        %v1210 = vunpack.c.l.bf16 %v698
        %v1211 = vunpack.c.l.bf16 %v699
        %v1212 = vunpack.c.l.bf16 %v700
        %v1213 = vunpack.c.l.bf16 %v701
        %v1214 = vunpack.c.l.bf16 %v702
        %v1215 = vunpack.c.l.bf16 %v703
        %v1216 = vunpack.c.l.bf16 %v704
        %v1217 = vunpack.c.l.bf16 %v705
        %v1218 = vunpack.c.l.bf16 %v706
        %v1219 = vunpack.c.l.bf16 %v707
        %v1220 = vunpack.c.l.bf16 %v708
        %v1221 = vunpack.c.l.bf16 %v709
        %v1222 = vunpack.c.l.bf16 %v710
        %v1223 = vunpack.c.l.bf16 %v711
        %v1224 = vunpack.c.l.bf16 %v712
        %v1225 = vunpack.c.l.bf16 %v713
        %v1226 = vunpack.c.l.bf16 %v714
        %v1227 = vunpack.c.l.bf16 %v715
        %v1228 = vunpack.c.l.bf16 %v716
        %v1229 = vunpack.c.l.bf16 %v717
        %v1230 = vunpack.c.l.bf16 %v718
        %v1231 = vunpack.c.l.bf16 %v719
        %v1232 = vunpack.c.l.bf16 %v720
        %v1233 = vunpack.c.l.bf16 %v721
        %v1234 = vunpack.c.l.bf16 %v722
        %v1235 = vunpack.c.l.bf16 %v723
        %v1236 = vunpack.c.l.bf16 %v724
        %v1237 = vunpack.c.l.bf16 %v725
        %v1238 = vunpack.c.l.bf16 %v726
        %v1239 = vunpack.c.l.bf16 %v727
        %v1240 = vunpack.c.l.bf16 %v728
        %v1241 = vunpack.c.l.bf16 %v729
        %v1242 = vunpack.c.l.bf16 %v730
        %v1243 = vunpack.c.l.bf16 %v731
        %v1244 = vunpack.c.l.bf16 %v732
        %v1245 = vunpack.c.l.bf16 %v733
        %v1246 = vunpack.c.l.bf16 %v734
        %v1247 = vunpack.c.l.bf16 %v735
        %v1248 = vunpack.c.l.bf16 %v736
        %v1249 = vunpack.c.l.bf16 %v737
        %v1250 = vunpack.c.l.bf16 %v738
        %v1251 = vunpack.c.l.bf16 %v739
        %v1252 = vunpack.c.l.bf16 %v740
        %v1253 = vunpack.c.l.bf16 %v741
        %v1254 = vunpack.c.l.bf16 %v742
        %v1255 = vunpack.c.l.bf16 %v743
        %v1256 = vunpack.c.l.bf16 %v744
        %v1257 = vunpack.c.l.bf16 %v745
        %v1258 = vunpack.c.l.bf16 %v746
        %v1259 = vunpack.c.l.bf16 %v747
        %v1260 = vunpack.c.l.bf16 %v748
        %v1261 = vunpack.c.l.bf16 %v749
        %v1262 = vunpack.c.l.bf16 %v750
        %v1263 = vunpack.c.l.bf16 %v751
        %v1264 = vunpack.c.l.bf16 %v752
        %v1265 = vunpack.c.l.bf16 %v753
        %v1266 = vunpack.c.l.bf16 %v754
        %v1267 = vunpack.c.l.bf16 %v755
        %v1268 = vunpack.c.l.bf16 %v756
        %v1269 = vunpack.c.l.bf16 %v757
        %v1270 = vunpack.c.l.bf16 %v758
        %v1271 = vunpack.c.l.bf16 %v759
        %v1272 = vunpack.c.l.bf16 %v760
        %v1273 = vunpack.c.l.bf16 %v761
        %v1274 = vunpack.c.l.bf16 %v762
        %v1275 = vunpack.c.l.bf16 %v763
        %v1276 = vunpack.c.l.bf16 %v764
        %v1277 = vunpack.c.l.bf16 %v765
        %v1278 = vunpack.c.l.bf16 %v766
        %v1279 = vunpack.c.l.bf16 %v767
        %v1280 = vunpack.c.l.bf16 %v768
        %v1281 = vunpack.c.l.bf16 %v769
        %v1282 = vunpack.c.l.bf16 %v770
        %v1283 = vunpack.c.l.bf16 %v771
        %v1284 = vunpack.c.l.bf16 %v772
        %v1285 = vunpack.c.l.bf16 %v773
        %v1286 = vunpack.c.l.bf16 %v774
        %v1287 = vunpack.c.l.bf16 %v775
        %v1288 = vunpack.c.l.bf16 %v776
        %v1289 = vunpack.c.l.bf16 %v777
        %v1290 = vunpack.c.l.bf16 %v778
        %v1291 = vunpack.c.l.bf16 %v779
        %v1292 = vunpack.c.l.bf16 %v780
        %v1293 = vunpack.c.l.bf16 %v781
        %v1294 = vunpack.c.l.bf16 %v782
        %v1295 = vunpack.c.l.bf16 %v783
        %v1296 = vunpack.c.l.bf16 %v784
        %v1297 = vunpack.c.l.bf16 %v785
        %v1298 = vunpack.c.l.bf16 %v786
        %v1299 = vunpack.c.l.bf16 %v787
        %v1300 = vunpack.c.l.bf16 %v788
        %v1301 = vunpack.c.l.bf16 %v789
        %v1302 = vunpack.c.l.bf16 %v790
        %v1303 = vunpack.c.l.bf16 %v791
        %v1304 = vunpack.c.l.bf16 %v792
        %v1305 = vunpack.c.l.bf16 %v793
        %v1306 = vunpack.c.l.bf16 %v794
        %v1307 = vunpack.c.l.bf16 %v795
        %v1308 = vunpack.c.l.bf16 %v796
        %v1309 = vunpack.c.l.bf16 %v797
        %v1310 = vunpack.c.l.bf16 %v798
        %v1311 = vunpack.c.l.bf16 %v799
        %v1312 = vunpack.c.l.bf16 %v800
        %v1313 = vunpack.c.l.bf16 %v801
        %v1314 = vunpack.c.l.bf16 %v802
        %v1315 = vunpack.c.l.bf16 %v803
        %v1316 = vunpack.c.l.bf16 %v804
        %v1317 = vunpack.c.l.bf16 %v805
        %v1318 = vunpack.c.l.bf16 %v806
        %v1319 = vunpack.c.l.bf16 %v807
        %v1320 = vunpack.c.l.bf16 %v808
        %v1321 = vunpack.c.l.bf16 %v809
        %v1322 = vunpack.c.l.bf16 %v810
        %v1323 = vunpack.c.l.bf16 %v811
        %v1324 = vunpack.c.l.bf16 %v812
        %v1325 = vunpack.c.l.bf16 %v813
        %v1326 = vunpack.c.l.bf16 %v814
        %v1327 = vunpack.c.l.bf16 %v815
        %v1328 = vunpack.c.l.bf16 %v816
        %v1329 = vunpack.c.l.bf16 %v817
        %v1330 = vunpack.c.l.bf16 %v818
        %v1331 = vunpack.c.l.bf16 %v819
        %v1332 = vunpack.c.l.bf16 %v820
        %v1333 = vunpack.c.l.bf16 %v821
        %v1334 = vunpack.c.l.bf16 %v822
        %v1335 = vunpack.c.l.bf16 %v823
        %v1336 = vunpack.c.l.bf16 %v824
        %v1337 = vunpack.c.l.bf16 %v825
        %v1338 = vunpack.c.l.bf16 %v826
        %v1339 = vunpack.c.l.bf16 %v827
        %v1340 = vunpack.c.l.bf16 %v828
        %v1341 = vunpack.c.l.bf16 %v829
        %v1342 = vunpack.c.l.bf16 %v830
        %v1343 = vunpack.c.l.bf16 %v831
        %v1344 = vunpack.c.l.bf16 %v832
        %v1345 = vunpack.c.l.bf16 %v833
        %v1346 = vunpack.c.l.bf16 %v834
        %v1347 = vunpack.c.l.bf16 %v835
        %v1348 = vunpack.c.l.bf16 %v836
        %v1349 = vunpack.c.l.bf16 %v837
        %v1350 = vunpack.c.l.bf16 %v838
        %v1351 = vunpack.c.l.bf16 %v839
        %v1352 = vunpack.c.l.bf16 %v840
        %v1353 = vunpack.c.l.bf16 %v841
        %v1354 = vunpack.c.l.bf16 %v842
        %v1355 = vunpack.c.l.bf16 %v843
        %v1356 = vunpack.c.l.bf16 %v844
        %v1357 = vunpack.c.l.bf16 %v845
        %v1358 = vunpack.c.l.bf16 %v846
        %v1359 = vunpack.c.l.bf16 %v847
        %v1360 = vunpack.c.l.bf16 %v848
        %v1361 = vunpack.c.l.bf16 %v849
        %v1362 = vunpack.c.l.bf16 %v850
        %v1363 = vunpack.c.l.bf16 %v851
        %v1364 = vunpack.c.l.bf16 %v852
        %v1365 = vunpack.c.l.bf16 %v853
        %v1366 = vunpack.c.l.bf16 %v854
        %v1367 = vunpack.c.l.bf16 %v855
        %v1368 = vunpack.c.l.bf16 %v856
        %v1369 = vunpack.c.l.bf16 %v857
        %v1370 = vunpack.c.l.bf16 %v858
        %v1371 = vunpack.c.l.bf16 %v859
        %v1372 = vunpack.c.l.bf16 %v860
        %v1373 = vunpack.c.l.bf16 %v861
        %v1374 = vunpack.c.l.bf16 %v862
        %v1375 = vunpack.c.l.bf16 %v863
        %v1376 = vunpack.c.l.bf16 %v864
        %v1377 = vunpack.c.l.bf16 %v865
        %v1378 = vunpack.c.l.bf16 %v866
        %v1379 = vunpack.c.l.bf16 %v867
        %v1380 = vunpack.c.l.bf16 %v868
        %v1381 = vunpack.c.l.bf16 %v869
        %v1382 = vunpack.c.l.bf16 %v870
        %v1383 = vunpack.c.l.bf16 %v871
        %v1384 = vunpack.c.l.bf16 %v872
        %v1385 = vunpack.c.l.bf16 %v873
        %v1386 = vunpack.c.l.bf16 %v874
        %v1387 = vunpack.c.l.bf16 %v875
        %v1388 = vunpack.c.l.bf16 %v876
        %v1389 = vunpack.c.l.bf16 %v877
        %v1390 = vunpack.c.l.bf16 %v878
        %v1391 = vunpack.c.l.bf16 %v879
        %v1392 = vunpack.c.l.bf16 %v880
        %v1393 = vunpack.c.l.bf16 %v881
        %v1394 = vunpack.c.l.bf16 %v882
        %v1395 = vunpack.c.l.bf16 %v883
        %v1396 = vunpack.c.l.bf16 %v884
        %v1397 = vunpack.c.l.bf16 %v885
        %v1398 = vunpack.c.l.bf16 %v886
        %v1399 = vunpack.c.l.bf16 %v887
        %v1400 = vunpack.c.l.bf16 %v888
        %v1401 = vunpack.c.l.bf16 %v889
        %v1402 = vunpack.c.l.bf16 %v890
        %v1403 = vunpack.c.l.bf16 %v891
        %v1404 = vunpack.c.l.bf16 %v892
        %v1405 = vunpack.c.l.bf16 %v893
        %v1406 = vunpack.c.l.bf16 %v894
        %v1407 = vunpack.c.l.bf16 %v895
        %v1408 = vunpack.c.l.bf16 %v896
        %v1409 = vunpack.c.l.bf16 %v897
        %v1410 = vunpack.c.l.bf16 %v898
        %v1411 = vunpack.c.l.bf16 %v899
        %v1412 = vunpack.c.l.bf16 %v900
        %v1413 = vunpack.c.l.bf16 %v901
        %v1414 = vunpack.c.l.bf16 %v902
        %v1415 = vunpack.c.l.bf16 %v903
        %v1416 = vunpack.c.l.bf16 %v904
        %v1417 = vunpack.c.l.bf16 %v905
        %v1418 = vunpack.c.l.bf16 %v906
        %v1419 = vunpack.c.l.bf16 %v907
        %v1420 = vunpack.c.l.bf16 %v908
        %v1421 = vunpack.c.l.bf16 %v909
        %v1422 = vunpack.c.l.bf16 %v910
        %v1423 = vunpack.c.l.bf16 %v911
        %v1424 = vunpack.c.l.bf16 %v912
        %v1425 = vunpack.c.l.bf16 %v913
        %v1426 = vunpack.c.l.bf16 %v914
        %v1427 = vunpack.c.l.bf16 %v915
        %v1428 = vunpack.c.l.bf16 %v916
        %v1429 = vunpack.c.l.bf16 %v917
        %v1430 = vunpack.c.l.bf16 %v918
        %v1431 = vunpack.c.l.bf16 %v919
        %v1432 = vunpack.c.l.bf16 %v920
        %v1433 = vld [vmem:[%s307] sm:$0xff]
        %v1434 = vld [vmem:[%s307 + $0x8] sm:$0xff]
        %v1435 = vld [vmem:[%s307 + $0x10] sm:$0xff]
        %v1436 = vld [vmem:[%s307 + $0x18] sm:$0xff]
        %v1437 = vld [vmem:[#allocation2] sm:$0xff]
        %v1438 = vld [vmem:[#allocation2 + $0x8] sm:$0xff]
        %v1439 = vperm.slane %v1433, 0
        %v1440 = vlaneseq
        %v1441 = vshrl.u32 %v1440, 7
        %1443 = vset.pattern.permute.xlu0 %v1441
        %1444 = vperm.xlu0 %1443, %v1439
        %v1445 = vpop.permute.xlu0 %1444
        %v1446 = vlaneseq
        %v1447 = vshrl.u32 %v1446, 7
        %v1448 = vadd.s32 %v1447, 8
        %1449 = vset.pattern.permute.xlu0 %v1448
        %1450 = vperm.xlu0 %1449, %v1439
        %v1451 = vpop.permute.xlu0 %1450
        %v1452 = vlaneseq
        %v1453 = vshrl.u32 %v1452, 7
        %v1454 = vadd.s32 %v1453, 16
        %1455 = vset.pattern.permute.xlu0 %v1454
        %1456 = vperm.xlu0 %1455, %v1439
        %v1457 = vpop.permute.xlu0 %1456
        %v1458 = vlaneseq
        %v1459 = vshrl.u32 %v1458, 7
        %v1460 = vadd.s32 %v1459, 24
        %1461 = vset.pattern.permute.xlu0 %v1460
        %1462 = vperm.xlu0 %1461, %v1439
        %v1463 = vpop.permute.xlu0 %1462
        %v1464 = vlaneseq
        %v1465 = vshrl.u32 %v1464, 7
        %v1466 = vadd.s32 %v1465, 32
        %1467 = vset.pattern.permute.xlu0 %v1466
        %1468 = vperm.xlu0 %1467, %v1439
        %v1469 = vpop.permute.xlu0 %1468
        %v1470 = vlaneseq
        %v1471 = vshrl.u32 %v1470, 7
        %v1472 = vadd.s32 %v1471, 40
        %1473 = vset.pattern.permute.xlu0 %v1472
        %1474 = vperm.xlu0 %1473, %v1439
        %v1475 = vpop.permute.xlu0 %1474
        %v1476 = vlaneseq
        %v1477 = vshrl.u32 %v1476, 7
        %v1478 = vadd.s32 %v1477, 48
        %1479 = vset.pattern.permute.xlu0 %v1478
        %1480 = vperm.xlu0 %1479, %v1439
        %v1481 = vpop.permute.xlu0 %1480
        %v1482 = vlaneseq
        %v1483 = vshrl.u32 %v1482, 7
        %v1484 = vadd.s32 %v1483, 56
        %1485 = vset.pattern.permute.xlu0 %v1484
        %1486 = vperm.xlu0 %1485, %v1439
        %v1487 = vpop.permute.xlu0 %1486
        %v1488 = vlaneseq
        %v1489 = vshrl.u32 %v1488, 7
        %v1490 = vadd.s32 %v1489, 64
        %1491 = vset.pattern.permute.xlu0 %v1490
        %1492 = vperm.xlu0 %1491, %v1439
        %v1493 = vpop.permute.xlu0 %1492
        %v1494 = vlaneseq
        %v1495 = vshrl.u32 %v1494, 7
        %v1496 = vadd.s32 %v1495, 72
        %1497 = vset.pattern.permute.xlu0 %v1496
        %1498 = vperm.xlu0 %1497, %v1439
        %v1499 = vpop.permute.xlu0 %1498
        %v1500 = vlaneseq
        %v1501 = vshrl.u32 %v1500, 7
        %v1502 = vadd.s32 %v1501, 80
        %1503 = vset.pattern.permute.xlu0 %v1502
        %1504 = vperm.xlu0 %1503, %v1439
        %v1505 = vpop.permute.xlu0 %1504
        %v1506 = vlaneseq
        %v1507 = vshrl.u32 %v1506, 7
        %v1508 = vadd.s32 %v1507, 88
        %1509 = vset.pattern.permute.xlu0 %v1508
        %1510 = vperm.xlu0 %1509, %v1439
        %v1511 = vpop.permute.xlu0 %1510
        %v1512 = vlaneseq
        %v1513 = vshrl.u32 %v1512, 7
        %v1514 = vadd.s32 %v1513, 96
        %1515 = vset.pattern.permute.xlu0 %v1514
        %1516 = vperm.xlu0 %1515, %v1439
        %v1517 = vpop.permute.xlu0 %1516
        %v1518 = vlaneseq
        %v1519 = vshrl.u32 %v1518, 7
        %v1520 = vadd.s32 %v1519, 104
        %1521 = vset.pattern.permute.xlu0 %v1520
        %1522 = vperm.xlu0 %1521, %v1439
        %v1523 = vpop.permute.xlu0 %1522
        %v1524 = vlaneseq
        %v1525 = vshrl.u32 %v1524, 7
        %v1526 = vadd.s32 %v1525, 112
        %1527 = vset.pattern.permute.xlu0 %v1526
        %1528 = vperm.xlu0 %1527, %v1439
        %v1529 = vpop.permute.xlu0 %1528
        %v1530 = vlaneseq
        %v1531 = vshrl.u32 %v1530, 7
        %v1532 = vadd.s32 %v1531, 120
        %1533 = vset.pattern.permute.xlu0 %v1532
        %1534 = vperm.xlu0 %1533, %v1439
        %v1535 = vpop.permute.xlu0 %1534
        %v1536 = vperm.slane %v1434, 0
        %v1537 = vlaneseq
        %v1538 = vshrl.u32 %v1537, 7
        %1540 = vset.pattern.permute.xlu0 %v1538
        %1541 = vperm.xlu0 %1540, %v1536
        %v1542 = vpop.permute.xlu0 %1541
        %v1543 = vlaneseq
        %v1544 = vshrl.u32 %v1543, 7
        %v1545 = vadd.s32 %v1544, 8
        %1546 = vset.pattern.permute.xlu0 %v1545
        %1547 = vperm.xlu0 %1546, %v1536
        %v1548 = vpop.permute.xlu0 %1547
        %v1549 = vlaneseq
        %v1550 = vshrl.u32 %v1549, 7
        %v1551 = vadd.s32 %v1550, 16
        %1552 = vset.pattern.permute.xlu0 %v1551
        %1553 = vperm.xlu0 %1552, %v1536
        %v1554 = vpop.permute.xlu0 %1553
        %v1555 = vlaneseq
        %v1556 = vshrl.u32 %v1555, 7
        %v1557 = vadd.s32 %v1556, 24
        %1558 = vset.pattern.permute.xlu0 %v1557
        %1559 = vperm.xlu0 %1558, %v1536
        %v1560 = vpop.permute.xlu0 %1559
        %v1561 = vlaneseq
        %v1562 = vshrl.u32 %v1561, 7
        %v1563 = vadd.s32 %v1562, 32
        %1564 = vset.pattern.permute.xlu0 %v1563
        %1565 = vperm.xlu0 %1564, %v1536
        %v1566 = vpop.permute.xlu0 %1565
        %v1567 = vlaneseq
        %v1568 = vshrl.u32 %v1567, 7
        %v1569 = vadd.s32 %v1568, 40
        %1570 = vset.pattern.permute.xlu0 %v1569
        %1571 = vperm.xlu0 %1570, %v1536
        %v1572 = vpop.permute.xlu0 %1571
        %v1573 = vlaneseq
        %v1574 = vshrl.u32 %v1573, 7
        %v1575 = vadd.s32 %v1574, 48
        %1576 = vset.pattern.permute.xlu0 %v1575
        %1577 = vperm.xlu0 %1576, %v1536
        %v1578 = vpop.permute.xlu0 %1577
        %v1579 = vlaneseq
        %v1580 = vshrl.u32 %v1579, 7
        %v1581 = vadd.s32 %v1580, 56
        %1582 = vset.pattern.permute.xlu0 %v1581
        %1583 = vperm.xlu0 %1582, %v1536
        %v1584 = vpop.permute.xlu0 %1583
        %v1585 = vlaneseq
        %v1586 = vshrl.u32 %v1585, 7
        %v1587 = vadd.s32 %v1586, 64
        %1588 = vset.pattern.permute.xlu0 %v1587
        %1589 = vperm.xlu0 %1588, %v1536
        %v1590 = vpop.permute.xlu0 %1589
        %v1591 = vlaneseq
        %v1592 = vshrl.u32 %v1591, 7
        %v1593 = vadd.s32 %v1592, 72
        %1594 = vset.pattern.permute.xlu0 %v1593
        %1595 = vperm.xlu0 %1594, %v1536
        %v1596 = vpop.permute.xlu0 %1595
        %v1597 = vlaneseq
        %v1598 = vshrl.u32 %v1597, 7
        %v1599 = vadd.s32 %v1598, 80
        %1600 = vset.pattern.permute.xlu0 %v1599
        %1601 = vperm.xlu0 %1600, %v1536
        %v1602 = vpop.permute.xlu0 %1601
        %v1603 = vlaneseq
        %v1604 = vshrl.u32 %v1603, 7
        %v1605 = vadd.s32 %v1604, 88
        %1606 = vset.pattern.permute.xlu0 %v1605
        %1607 = vperm.xlu0 %1606, %v1536
        %v1608 = vpop.permute.xlu0 %1607
        %v1609 = vlaneseq
        %v1610 = vshrl.u32 %v1609, 7
        %v1611 = vadd.s32 %v1610, 96
        %1612 = vset.pattern.permute.xlu0 %v1611
        %1613 = vperm.xlu0 %1612, %v1536
        %v1614 = vpop.permute.xlu0 %1613
        %v1615 = vlaneseq
        %v1616 = vshrl.u32 %v1615, 7
        %v1617 = vadd.s32 %v1616, 104
        %1618 = vset.pattern.permute.xlu0 %v1617
        %1619 = vperm.xlu0 %1618, %v1536
        %v1620 = vpop.permute.xlu0 %1619
        %v1621 = vlaneseq
        %v1622 = vshrl.u32 %v1621, 7
        %v1623 = vadd.s32 %v1622, 112
        %1624 = vset.pattern.permute.xlu0 %v1623
        %1625 = vperm.xlu0 %1624, %v1536
        %v1626 = vpop.permute.xlu0 %1625
        %v1627 = vlaneseq
        %v1628 = vshrl.u32 %v1627, 7
        %v1629 = vadd.s32 %v1628, 120
        %1630 = vset.pattern.permute.xlu0 %v1629
        %1631 = vperm.xlu0 %1630, %v1536
        %v1632 = vpop.permute.xlu0 %1631
        %v1633 = vperm.slane %v1433, 1
        %v1634 = vlaneseq
        %v1635 = vshrl.u32 %v1634, 7
        %1637 = vset.pattern.permute.xlu0 %v1635
        %1638 = vperm.xlu0 %1637, %v1633
        %v1639 = vpop.permute.xlu0 %1638
        %v1640 = vlaneseq
        %v1641 = vshrl.u32 %v1640, 7
        %v1642 = vadd.s32 %v1641, 8
        %1643 = vset.pattern.permute.xlu0 %v1642
        %1644 = vperm.xlu0 %1643, %v1633
        %v1645 = vpop.permute.xlu0 %1644
        %v1646 = vlaneseq
        %v1647 = vshrl.u32 %v1646, 7
        %v1648 = vadd.s32 %v1647, 16
        %1649 = vset.pattern.permute.xlu0 %v1648
        %1650 = vperm.xlu0 %1649, %v1633
        %v1651 = vpop.permute.xlu0 %1650
        %v1652 = vlaneseq
        %v1653 = vshrl.u32 %v1652, 7
        %v1654 = vadd.s32 %v1653, 24
        %1655 = vset.pattern.permute.xlu0 %v1654
        %1656 = vperm.xlu0 %1655, %v1633
        %v1657 = vpop.permute.xlu0 %1656
        %v1658 = vlaneseq
        %v1659 = vshrl.u32 %v1658, 7
        %v1660 = vadd.s32 %v1659, 32
        %1661 = vset.pattern.permute.xlu0 %v1660
        %1662 = vperm.xlu0 %1661, %v1633
        %v1663 = vpop.permute.xlu0 %1662
        %v1664 = vlaneseq
        %v1665 = vshrl.u32 %v1664, 7
        %v1666 = vadd.s32 %v1665, 40
        %1667 = vset.pattern.permute.xlu0 %v1666
        %1668 = vperm.xlu0 %1667, %v1633
        %v1669 = vpop.permute.xlu0 %1668
        %v1670 = vlaneseq
        %v1671 = vshrl.u32 %v1670, 7
        %v1672 = vadd.s32 %v1671, 48
        %1673 = vset.pattern.permute.xlu0 %v1672
        %1674 = vperm.xlu0 %1673, %v1633
        %v1675 = vpop.permute.xlu0 %1674
        %v1676 = vlaneseq
        %v1677 = vshrl.u32 %v1676, 7
        %v1678 = vadd.s32 %v1677, 56
        %1679 = vset.pattern.permute.xlu0 %v1678
        %1680 = vperm.xlu0 %1679, %v1633
        %v1681 = vpop.permute.xlu0 %1680
        %v1682 = vlaneseq
        %v1683 = vshrl.u32 %v1682, 7
        %v1684 = vadd.s32 %v1683, 64
        %1685 = vset.pattern.permute.xlu0 %v1684
        %1686 = vperm.xlu0 %1685, %v1633
        %v1687 = vpop.permute.xlu0 %1686
        %v1688 = vlaneseq
        %v1689 = vshrl.u32 %v1688, 7
        %v1690 = vadd.s32 %v1689, 72
        %1691 = vset.pattern.permute.xlu0 %v1690
        %1692 = vperm.xlu0 %1691, %v1633
        %v1693 = vpop.permute.xlu0 %1692
        %v1694 = vlaneseq
        %v1695 = vshrl.u32 %v1694, 7
        %v1696 = vadd.s32 %v1695, 80
        %1697 = vset.pattern.permute.xlu0 %v1696
        %1698 = vperm.xlu0 %1697, %v1633
        %v1699 = vpop.permute.xlu0 %1698
        %v1700 = vlaneseq
        %v1701 = vshrl.u32 %v1700, 7
        %v1702 = vadd.s32 %v1701, 88
        %1703 = vset.pattern.permute.xlu0 %v1702
        %1704 = vperm.xlu0 %1703, %v1633
        %v1705 = vpop.permute.xlu0 %1704
        %v1706 = vlaneseq
        %v1707 = vshrl.u32 %v1706, 7
        %v1708 = vadd.s32 %v1707, 96
        %1709 = vset.pattern.permute.xlu0 %v1708
        %1710 = vperm.xlu0 %1709, %v1633
        %v1711 = vpop.permute.xlu0 %1710
        %v1712 = vlaneseq
        %v1713 = vshrl.u32 %v1712, 7
        %v1714 = vadd.s32 %v1713, 104
        %1715 = vset.pattern.permute.xlu0 %v1714
        %1716 = vperm.xlu0 %1715, %v1633
        %v1717 = vpop.permute.xlu0 %1716
        %v1718 = vlaneseq
        %v1719 = vshrl.u32 %v1718, 7
        %v1720 = vadd.s32 %v1719, 112
        %1721 = vset.pattern.permute.xlu0 %v1720
        %1722 = vperm.xlu0 %1721, %v1633
        %v1723 = vpop.permute.xlu0 %1722
        %v1724 = vlaneseq
        %v1725 = vshrl.u32 %v1724, 7
        %v1726 = vadd.s32 %v1725, 120
        %1727 = vset.pattern.permute.xlu0 %v1726
        %1728 = vperm.xlu0 %1727, %v1633
        %v1729 = vpop.permute.xlu0 %1728
        %v1730 = vperm.slane %v1434, 1
        %v1731 = vlaneseq
        %v1732 = vshrl.u32 %v1731, 7
        %1734 = vset.pattern.permute.xlu0 %v1732
        %1735 = vperm.xlu0 %1734, %v1730
        %v1736 = vpop.permute.xlu0 %1735
        %v1737 = vlaneseq
        %v1738 = vshrl.u32 %v1737, 7
        %v1739 = vadd.s32 %v1738, 8
        %1740 = vset.pattern.permute.xlu0 %v1739
        %1741 = vperm.xlu0 %1740, %v1730
        %v1742 = vpop.permute.xlu0 %1741
        %v1743 = vlaneseq
        %v1744 = vshrl.u32 %v1743, 7
        %v1745 = vadd.s32 %v1744, 16
        %1746 = vset.pattern.permute.xlu0 %v1745
        %1747 = vperm.xlu0 %1746, %v1730
        %v1748 = vpop.permute.xlu0 %1747
        %v1749 = vlaneseq
        %v1750 = vshrl.u32 %v1749, 7
        %v1751 = vadd.s32 %v1750, 24
        %1752 = vset.pattern.permute.xlu0 %v1751
        %1753 = vperm.xlu0 %1752, %v1730
        %v1754 = vpop.permute.xlu0 %1753
        %v1755 = vlaneseq
        %v1756 = vshrl.u32 %v1755, 7
        %v1757 = vadd.s32 %v1756, 32
        %1758 = vset.pattern.permute.xlu0 %v1757
        %1759 = vperm.xlu0 %1758, %v1730
        %v1760 = vpop.permute.xlu0 %1759
        %v1761 = vlaneseq
        %v1762 = vshrl.u32 %v1761, 7
        %v1763 = vadd.s32 %v1762, 40
        %1764 = vset.pattern.permute.xlu0 %v1763
        %1765 = vperm.xlu0 %1764, %v1730
        %v1766 = vpop.permute.xlu0 %1765
        %v1767 = vlaneseq
        %v1768 = vshrl.u32 %v1767, 7
        %v1769 = vadd.s32 %v1768, 48
        %1770 = vset.pattern.permute.xlu0 %v1769
        %1771 = vperm.xlu0 %1770, %v1730
        %v1772 = vpop.permute.xlu0 %1771
        %v1773 = vlaneseq
        %v1774 = vshrl.u32 %v1773, 7
        %v1775 = vadd.s32 %v1774, 56
        %1776 = vset.pattern.permute.xlu0 %v1775
        %1777 = vperm.xlu0 %1776, %v1730
        %v1778 = vpop.permute.xlu0 %1777
        %v1779 = vlaneseq
        %v1780 = vshrl.u32 %v1779, 7
        %v1781 = vadd.s32 %v1780, 64
        %1782 = vset.pattern.permute.xlu0 %v1781
        %1783 = vperm.xlu0 %1782, %v1730
        %v1784 = vpop.permute.xlu0 %1783
        %v1785 = vlaneseq
        %v1786 = vshrl.u32 %v1785, 7
        %v1787 = vadd.s32 %v1786, 72
        %1788 = vset.pattern.permute.xlu0 %v1787
        %1789 = vperm.xlu0 %1788, %v1730
        %v1790 = vpop.permute.xlu0 %1789
        %v1791 = vlaneseq
        %v1792 = vshrl.u32 %v1791, 7
        %v1793 = vadd.s32 %v1792, 80
        %1794 = vset.pattern.permute.xlu0 %v1793
        %1795 = vperm.xlu0 %1794, %v1730
        %v1796 = vpop.permute.xlu0 %1795
        %v1797 = vlaneseq
        %v1798 = vshrl.u32 %v1797, 7
        %v1799 = vadd.s32 %v1798, 88
        %1800 = vset.pattern.permute.xlu0 %v1799
        %1801 = vperm.xlu0 %1800, %v1730
        %v1802 = vpop.permute.xlu0 %1801
        %v1803 = vlaneseq
        %v1804 = vshrl.u32 %v1803, 7
        %v1805 = vadd.s32 %v1804, 96
        %1806 = vset.pattern.permute.xlu0 %v1805
        %1807 = vperm.xlu0 %1806, %v1730
        %v1808 = vpop.permute.xlu0 %1807
        %v1809 = vlaneseq
        %v1810 = vshrl.u32 %v1809, 7
        %v1811 = vadd.s32 %v1810, 104
        %1812 = vset.pattern.permute.xlu0 %v1811
        %1813 = vperm.xlu0 %1812, %v1730
        %v1814 = vpop.permute.xlu0 %1813
        %v1815 = vlaneseq
        %v1816 = vshrl.u32 %v1815, 7
        %v1817 = vadd.s32 %v1816, 112
        %1818 = vset.pattern.permute.xlu0 %v1817
        %1819 = vperm.xlu0 %1818, %v1730
        %v1820 = vpop.permute.xlu0 %1819
        %v1821 = vlaneseq
        %v1822 = vshrl.u32 %v1821, 7
        %v1823 = vadd.s32 %v1822, 120
        %1824 = vset.pattern.permute.xlu0 %v1823
        %1825 = vperm.xlu0 %1824, %v1730
        %v1826 = vpop.permute.xlu0 %1825
        %v1827 = vperm.slane %v1433, 2
        %v1828 = vlaneseq
        %v1829 = vshrl.u32 %v1828, 7
        %1831 = vset.pattern.permute.xlu0 %v1829
        %1832 = vperm.xlu0 %1831, %v1827
        %v1833 = vpop.permute.xlu0 %1832
        %v1834 = vlaneseq
        %v1835 = vshrl.u32 %v1834, 7
        %v1836 = vadd.s32 %v1835, 8
        %1837 = vset.pattern.permute.xlu0 %v1836
        %1838 = vperm.xlu0 %1837, %v1827
        %v1839 = vpop.permute.xlu0 %1838
        %v1840 = vlaneseq
        %v1841 = vshrl.u32 %v1840, 7
        %v1842 = vadd.s32 %v1841, 16
        %1843 = vset.pattern.permute.xlu0 %v1842
        %1844 = vperm.xlu0 %1843, %v1827
        %v1845 = vpop.permute.xlu0 %1844
        %v1846 = vlaneseq
        %v1847 = vshrl.u32 %v1846, 7
        %v1848 = vadd.s32 %v1847, 24
        %1849 = vset.pattern.permute.xlu0 %v1848
        %1850 = vperm.xlu0 %1849, %v1827
        %v1851 = vpop.permute.xlu0 %1850
        %v1852 = vlaneseq
        %v1853 = vshrl.u32 %v1852, 7
        %v1854 = vadd.s32 %v1853, 32
        %1855 = vset.pattern.permute.xlu0 %v1854
        %1856 = vperm.xlu0 %1855, %v1827
        %v1857 = vpop.permute.xlu0 %1856
        %v1858 = vlaneseq
        %v1859 = vshrl.u32 %v1858, 7
        %v1860 = vadd.s32 %v1859, 40
        %1861 = vset.pattern.permute.xlu0 %v1860
        %1862 = vperm.xlu0 %1861, %v1827
        %v1863 = vpop.permute.xlu0 %1862
        %v1864 = vlaneseq
        %v1865 = vshrl.u32 %v1864, 7
        %v1866 = vadd.s32 %v1865, 48
        %1867 = vset.pattern.permute.xlu0 %v1866
        %1868 = vperm.xlu0 %1867, %v1827
        %v1869 = vpop.permute.xlu0 %1868
        %v1870 = vlaneseq
        %v1871 = vshrl.u32 %v1870, 7
        %v1872 = vadd.s32 %v1871, 56
        %1873 = vset.pattern.permute.xlu0 %v1872
        %1874 = vperm.xlu0 %1873, %v1827
        %v1875 = vpop.permute.xlu0 %1874
        %v1876 = vlaneseq
        %v1877 = vshrl.u32 %v1876, 7
        %v1878 = vadd.s32 %v1877, 64
        %1879 = vset.pattern.permute.xlu0 %v1878
        %1880 = vperm.xlu0 %1879, %v1827
        %v1881 = vpop.permute.xlu0 %1880
        %v1882 = vlaneseq
        %v1883 = vshrl.u32 %v1882, 7
        %v1884 = vadd.s32 %v1883, 72
        %1885 = vset.pattern.permute.xlu0 %v1884
        %1886 = vperm.xlu0 %1885, %v1827
        %v1887 = vpop.permute.xlu0 %1886
        %v1888 = vlaneseq
        %v1889 = vshrl.u32 %v1888, 7
        %v1890 = vadd.s32 %v1889, 80
        %1891 = vset.pattern.permute.xlu0 %v1890
        %1892 = vperm.xlu0 %1891, %v1827
        %v1893 = vpop.permute.xlu0 %1892
        %v1894 = vlaneseq
        %v1895 = vshrl.u32 %v1894, 7
        %v1896 = vadd.s32 %v1895, 88
        %1897 = vset.pattern.permute.xlu0 %v1896
        %1898 = vperm.xlu0 %1897, %v1827
        %v1899 = vpop.permute.xlu0 %1898
        %v1900 = vlaneseq
        %v1901 = vshrl.u32 %v1900, 7
        %v1902 = vadd.s32 %v1901, 96
        %1903 = vset.pattern.permute.xlu0 %v1902
        %1904 = vperm.xlu0 %1903, %v1827
        %v1905 = vpop.permute.xlu0 %1904
        %v1906 = vlaneseq
        %v1907 = vshrl.u32 %v1906, 7
        %v1908 = vadd.s32 %v1907, 104
        %1909 = vset.pattern.permute.xlu0 %v1908
        %1910 = vperm.xlu0 %1909, %v1827
        %v1911 = vpop.permute.xlu0 %1910
        %v1912 = vlaneseq
        %v1913 = vshrl.u32 %v1912, 7
        %v1914 = vadd.s32 %v1913, 112
        %1915 = vset.pattern.permute.xlu0 %v1914
        %1916 = vperm.xlu0 %1915, %v1827
        %v1917 = vpop.permute.xlu0 %1916
        %v1918 = vlaneseq
        %v1919 = vshrl.u32 %v1918, 7
        %v1920 = vadd.s32 %v1919, 120
        %1921 = vset.pattern.permute.xlu0 %v1920
        %1922 = vperm.xlu0 %1921, %v1827
        %v1923 = vpop.permute.xlu0 %1922
        %v1924 = vperm.slane %v1434, 2
        %v1925 = vlaneseq
        %v1926 = vshrl.u32 %v1925, 7
        %1928 = vset.pattern.permute.xlu0 %v1926
        %1929 = vperm.xlu0 %1928, %v1924
        %v1930 = vpop.permute.xlu0 %1929
        %v1931 = vlaneseq
        %v1932 = vshrl.u32 %v1931, 7
        %v1933 = vadd.s32 %v1932, 8
        %1934 = vset.pattern.permute.xlu0 %v1933
        %1935 = vperm.xlu0 %1934, %v1924
        %v1936 = vpop.permute.xlu0 %1935
        %v1937 = vlaneseq
        %v1938 = vshrl.u32 %v1937, 7
        %v1939 = vadd.s32 %v1938, 16
        %1940 = vset.pattern.permute.xlu0 %v1939
        %1941 = vperm.xlu0 %1940, %v1924
        %v1942 = vpop.permute.xlu0 %1941
        %v1943 = vlaneseq
        %v1944 = vshrl.u32 %v1943, 7
        %v1945 = vadd.s32 %v1944, 24
        %1946 = vset.pattern.permute.xlu0 %v1945
        %1947 = vperm.xlu0 %1946, %v1924
        %v1948 = vpop.permute.xlu0 %1947
        %v1949 = vlaneseq
        %v1950 = vshrl.u32 %v1949, 7
        %v1951 = vadd.s32 %v1950, 32
        %1952 = vset.pattern.permute.xlu0 %v1951
        %1953 = vperm.xlu0 %1952, %v1924
        %v1954 = vpop.permute.xlu0 %1953
        %v1955 = vlaneseq
        %v1956 = vshrl.u32 %v1955, 7
        %v1957 = vadd.s32 %v1956, 40
        %1958 = vset.pattern.permute.xlu0 %v1957
        %1959 = vperm.xlu0 %1958, %v1924
        %v1960 = vpop.permute.xlu0 %1959
        %v1961 = vlaneseq
        %v1962 = vshrl.u32 %v1961, 7
        %v1963 = vadd.s32 %v1962, 48
        %1964 = vset.pattern.permute.xlu0 %v1963
        %1965 = vperm.xlu0 %1964, %v1924
        %v1966 = vpop.permute.xlu0 %1965
        %v1967 = vlaneseq
        %v1968 = vshrl.u32 %v1967, 7
        %v1969 = vadd.s32 %v1968, 56
        %1970 = vset.pattern.permute.xlu0 %v1969
        %1971 = vperm.xlu0 %1970, %v1924
        %v1972 = vpop.permute.xlu0 %1971
        %v1973 = vlaneseq
        %v1974 = vshrl.u32 %v1973, 7
        %v1975 = vadd.s32 %v1974, 64
        %1976 = vset.pattern.permute.xlu0 %v1975
        %1977 = vperm.xlu0 %1976, %v1924
        %v1978 = vpop.permute.xlu0 %1977
        %v1979 = vlaneseq
        %v1980 = vshrl.u32 %v1979, 7
        %v1981 = vadd.s32 %v1980, 72
        %1982 = vset.pattern.permute.xlu0 %v1981
        %1983 = vperm.xlu0 %1982, %v1924
        %v1984 = vpop.permute.xlu0 %1983
        %v1985 = vlaneseq
        %v1986 = vshrl.u32 %v1985, 7
        %v1987 = vadd.s32 %v1986, 80
        %1988 = vset.pattern.permute.xlu0 %v1987
        %1989 = vperm.xlu0 %1988, %v1924
        %v1990 = vpop.permute.xlu0 %1989
        %v1991 = vlaneseq
        %v1992 = vshrl.u32 %v1991, 7
        %v1993 = vadd.s32 %v1992, 88
        %1994 = vset.pattern.permute.xlu0 %v1993
        %1995 = vperm.xlu0 %1994, %v1924
        %v1996 = vpop.permute.xlu0 %1995
        %v1997 = vlaneseq
        %v1998 = vshrl.u32 %v1997, 7
        %v1999 = vadd.s32 %v1998, 96
        %2000 = vset.pattern.permute.xlu0 %v1999
        %2001 = vperm.xlu0 %2000, %v1924
        %v2002 = vpop.permute.xlu0 %2001
        %v2003 = vlaneseq
        %v2004 = vshrl.u32 %v2003, 7
        %v2005 = vadd.s32 %v2004, 104
        %2006 = vset.pattern.permute.xlu0 %v2005
        %2007 = vperm.xlu0 %2006, %v1924
        %v2008 = vpop.permute.xlu0 %2007
        %v2009 = vlaneseq
        %v2010 = vshrl.u32 %v2009, 7
        %v2011 = vadd.s32 %v2010, 112
        %2012 = vset.pattern.permute.xlu0 %v2011
        %2013 = vperm.xlu0 %2012, %v1924
        %v2014 = vpop.permute.xlu0 %2013
        %v2015 = vlaneseq
        %v2016 = vshrl.u32 %v2015, 7
        %v2017 = vadd.s32 %v2016, 120
        %2018 = vset.pattern.permute.xlu0 %v2017
        %2019 = vperm.xlu0 %2018, %v1924
        %v2020 = vpop.permute.xlu0 %2019
        %v2021 = vperm.slane %v1433, 3
        %v2022 = vlaneseq
        %v2023 = vshrl.u32 %v2022, 7
        %2025 = vset.pattern.permute.xlu0 %v2023
        %2026 = vperm.xlu0 %2025, %v2021
        %v2027 = vpop.permute.xlu0 %2026
        %v2028 = vlaneseq
        %v2029 = vshrl.u32 %v2028, 7
        %v2030 = vadd.s32 %v2029, 8
        %2031 = vset.pattern.permute.xlu0 %v2030
        %2032 = vperm.xlu0 %2031, %v2021
        %v2033 = vpop.permute.xlu0 %2032
        %v2034 = vlaneseq
        %v2035 = vshrl.u32 %v2034, 7
        %v2036 = vadd.s32 %v2035, 16
        %2037 = vset.pattern.permute.xlu0 %v2036
        %2038 = vperm.xlu0 %2037, %v2021
        %v2039 = vpop.permute.xlu0 %2038
        %v2040 = vlaneseq
        %v2041 = vshrl.u32 %v2040, 7
        %v2042 = vadd.s32 %v2041, 24
        %2043 = vset.pattern.permute.xlu0 %v2042
        %2044 = vperm.xlu0 %2043, %v2021
        %v2045 = vpop.permute.xlu0 %2044
        %v2046 = vlaneseq
        %v2047 = vshrl.u32 %v2046, 7
        %v2048 = vadd.s32 %v2047, 32
        %2049 = vset.pattern.permute.xlu0 %v2048
        %2050 = vperm.xlu0 %2049, %v2021
        %v2051 = vpop.permute.xlu0 %2050
        %v2052 = vlaneseq
        %v2053 = vshrl.u32 %v2052, 7
        %v2054 = vadd.s32 %v2053, 40
        %2055 = vset.pattern.permute.xlu0 %v2054
        %2056 = vperm.xlu0 %2055, %v2021
        %v2057 = vpop.permute.xlu0 %2056
        %v2058 = vlaneseq
        %v2059 = vshrl.u32 %v2058, 7
        %v2060 = vadd.s32 %v2059, 48
        %2061 = vset.pattern.permute.xlu0 %v2060
        %2062 = vperm.xlu0 %2061, %v2021
        %v2063 = vpop.permute.xlu0 %2062
        %v2064 = vlaneseq
        %v2065 = vshrl.u32 %v2064, 7
        %v2066 = vadd.s32 %v2065, 56
        %2067 = vset.pattern.permute.xlu0 %v2066
        %2068 = vperm.xlu0 %2067, %v2021
        %v2069 = vpop.permute.xlu0 %2068
        %v2070 = vlaneseq
        %v2071 = vshrl.u32 %v2070, 7
        %v2072 = vadd.s32 %v2071, 64
        %2073 = vset.pattern.permute.xlu0 %v2072
        %2074 = vperm.xlu0 %2073, %v2021
        %v2075 = vpop.permute.xlu0 %2074
        %v2076 = vlaneseq
        %v2077 = vshrl.u32 %v2076, 7
        %v2078 = vadd.s32 %v2077, 72
        %2079 = vset.pattern.permute.xlu0 %v2078
        %2080 = vperm.xlu0 %2079, %v2021
        %v2081 = vpop.permute.xlu0 %2080
        %v2082 = vlaneseq
        %v2083 = vshrl.u32 %v2082, 7
        %v2084 = vadd.s32 %v2083, 80
        %2085 = vset.pattern.permute.xlu0 %v2084
        %2086 = vperm.xlu0 %2085, %v2021
        %v2087 = vpop.permute.xlu0 %2086
        %v2088 = vlaneseq
        %v2089 = vshrl.u32 %v2088, 7
        %v2090 = vadd.s32 %v2089, 88
        %2091 = vset.pattern.permute.xlu0 %v2090
        %2092 = vperm.xlu0 %2091, %v2021
        %v2093 = vpop.permute.xlu0 %2092
        %v2094 = vlaneseq
        %v2095 = vshrl.u32 %v2094, 7
        %v2096 = vadd.s32 %v2095, 96
        %2097 = vset.pattern.permute.xlu0 %v2096
        %2098 = vperm.xlu0 %2097, %v2021
        %v2099 = vpop.permute.xlu0 %2098
        %v2100 = vlaneseq
        %v2101 = vshrl.u32 %v2100, 7
        %v2102 = vadd.s32 %v2101, 104
        %2103 = vset.pattern.permute.xlu0 %v2102
        %2104 = vperm.xlu0 %2103, %v2021
        %v2105 = vpop.permute.xlu0 %2104
        %v2106 = vlaneseq
        %v2107 = vshrl.u32 %v2106, 7
        %v2108 = vadd.s32 %v2107, 112
        %2109 = vset.pattern.permute.xlu0 %v2108
        %2110 = vperm.xlu0 %2109, %v2021
        %v2111 = vpop.permute.xlu0 %2110
        %v2112 = vlaneseq
        %v2113 = vshrl.u32 %v2112, 7
        %v2114 = vadd.s32 %v2113, 120
        %2115 = vset.pattern.permute.xlu0 %v2114
        %2116 = vperm.xlu0 %2115, %v2021
        %v2117 = vpop.permute.xlu0 %2116
        %v2118 = vperm.slane %v1434, 3
        %v2119 = vlaneseq
        %v2120 = vshrl.u32 %v2119, 7
        %2122 = vset.pattern.permute.xlu0 %v2120
        %2123 = vperm.xlu0 %2122, %v2118
        %v2124 = vpop.permute.xlu0 %2123
        %v2125 = vlaneseq
        %v2126 = vshrl.u32 %v2125, 7
        %v2127 = vadd.s32 %v2126, 8
        %2128 = vset.pattern.permute.xlu0 %v2127
        %2129 = vperm.xlu0 %2128, %v2118
        %v2130 = vpop.permute.xlu0 %2129
        %v2131 = vlaneseq
        %v2132 = vshrl.u32 %v2131, 7
        %v2133 = vadd.s32 %v2132, 16
        %2134 = vset.pattern.permute.xlu0 %v2133
        %2135 = vperm.xlu0 %2134, %v2118
        %v2136 = vpop.permute.xlu0 %2135
        %v2137 = vlaneseq
        %v2138 = vshrl.u32 %v2137, 7
        %v2139 = vadd.s32 %v2138, 24
        %2140 = vset.pattern.permute.xlu0 %v2139
        %2141 = vperm.xlu0 %2140, %v2118
        %v2142 = vpop.permute.xlu0 %2141
        %v2143 = vlaneseq
        %v2144 = vshrl.u32 %v2143, 7
        %v2145 = vadd.s32 %v2144, 32
        %2146 = vset.pattern.permute.xlu0 %v2145
        %2147 = vperm.xlu0 %2146, %v2118
        %v2148 = vpop.permute.xlu0 %2147
        %v2149 = vlaneseq
        %v2150 = vshrl.u32 %v2149, 7
        %v2151 = vadd.s32 %v2150, 40
        %2152 = vset.pattern.permute.xlu0 %v2151
        %2153 = vperm.xlu0 %2152, %v2118
        %v2154 = vpop.permute.xlu0 %2153
        %v2155 = vlaneseq
        %v2156 = vshrl.u32 %v2155, 7
        %v2157 = vadd.s32 %v2156, 48
        %2158 = vset.pattern.permute.xlu0 %v2157
        %2159 = vperm.xlu0 %2158, %v2118
        %v2160 = vpop.permute.xlu0 %2159
        %v2161 = vlaneseq
        %v2162 = vshrl.u32 %v2161, 7
        %v2163 = vadd.s32 %v2162, 56
        %2164 = vset.pattern.permute.xlu0 %v2163
        %2165 = vperm.xlu0 %2164, %v2118
        %v2166 = vpop.permute.xlu0 %2165
        %v2167 = vlaneseq
        %v2168 = vshrl.u32 %v2167, 7
        %v2169 = vadd.s32 %v2168, 64
        %2170 = vset.pattern.permute.xlu0 %v2169
        %2171 = vperm.xlu0 %2170, %v2118
        %v2172 = vpop.permute.xlu0 %2171
        %v2173 = vlaneseq
        %v2174 = vshrl.u32 %v2173, 7
        %v2175 = vadd.s32 %v2174, 72
        %2176 = vset.pattern.permute.xlu0 %v2175
        %2177 = vperm.xlu0 %2176, %v2118
        %v2178 = vpop.permute.xlu0 %2177
        %v2179 = vlaneseq
        %v2180 = vshrl.u32 %v2179, 7
        %v2181 = vadd.s32 %v2180, 80
        %2182 = vset.pattern.permute.xlu0 %v2181
        %2183 = vperm.xlu0 %2182, %v2118
        %v2184 = vpop.permute.xlu0 %2183
        %v2185 = vlaneseq
        %v2186 = vshrl.u32 %v2185, 7
        %v2187 = vadd.s32 %v2186, 88
        %2188 = vset.pattern.permute.xlu0 %v2187
        %2189 = vperm.xlu0 %2188, %v2118
        %v2190 = vpop.permute.xlu0 %2189
        %v2191 = vlaneseq
        %v2192 = vshrl.u32 %v2191, 7
        %v2193 = vadd.s32 %v2192, 96
        %2194 = vset.pattern.permute.xlu0 %v2193
        %2195 = vperm.xlu0 %2194, %v2118
        %v2196 = vpop.permute.xlu0 %2195
        %v2197 = vlaneseq
        %v2198 = vshrl.u32 %v2197, 7
        %v2199 = vadd.s32 %v2198, 104
        %2200 = vset.pattern.permute.xlu0 %v2199
        %2201 = vperm.xlu0 %2200, %v2118
        %v2202 = vpop.permute.xlu0 %2201
        %v2203 = vlaneseq
        %v2204 = vshrl.u32 %v2203, 7
        %v2205 = vadd.s32 %v2204, 112
        %2206 = vset.pattern.permute.xlu0 %v2205
        %2207 = vperm.xlu0 %2206, %v2118
        %v2208 = vpop.permute.xlu0 %2207
        %v2209 = vlaneseq
        %v2210 = vshrl.u32 %v2209, 7
        %v2211 = vadd.s32 %v2210, 120
        %2212 = vset.pattern.permute.xlu0 %v2211
        %2213 = vperm.xlu0 %2212, %v2118
        %v2214 = vpop.permute.xlu0 %2213
        %v2215 = vperm.slane %v1433, 4
        %v2216 = vlaneseq
        %v2217 = vshrl.u32 %v2216, 7
        %2219 = vset.pattern.permute.xlu0 %v2217
        %2220 = vperm.xlu0 %2219, %v2215
        %v2221 = vpop.permute.xlu0 %2220
        %v2222 = vlaneseq
        %v2223 = vshrl.u32 %v2222, 7
        %v2224 = vadd.s32 %v2223, 8
        %2225 = vset.pattern.permute.xlu0 %v2224
        %2226 = vperm.xlu0 %2225, %v2215
        %v2227 = vpop.permute.xlu0 %2226
        %v2228 = vlaneseq
        %v2229 = vshrl.u32 %v2228, 7
        %v2230 = vadd.s32 %v2229, 16
        %2231 = vset.pattern.permute.xlu0 %v2230
        %2232 = vperm.xlu0 %2231, %v2215
        %v2233 = vpop.permute.xlu0 %2232
        %v2234 = vlaneseq
        %v2235 = vshrl.u32 %v2234, 7
        %v2236 = vadd.s32 %v2235, 24
        %2237 = vset.pattern.permute.xlu0 %v2236
        %2238 = vperm.xlu0 %2237, %v2215
        %v2239 = vpop.permute.xlu0 %2238
        %v2240 = vlaneseq
        %v2241 = vshrl.u32 %v2240, 7
        %v2242 = vadd.s32 %v2241, 32
        %2243 = vset.pattern.permute.xlu0 %v2242
        %2244 = vperm.xlu0 %2243, %v2215
        %v2245 = vpop.permute.xlu0 %2244
        %v2246 = vlaneseq
        %v2247 = vshrl.u32 %v2246, 7
        %v2248 = vadd.s32 %v2247, 40
        %2249 = vset.pattern.permute.xlu0 %v2248
        %2250 = vperm.xlu0 %2249, %v2215
        %v2251 = vpop.permute.xlu0 %2250
        %v2252 = vlaneseq
        %v2253 = vshrl.u32 %v2252, 7
        %v2254 = vadd.s32 %v2253, 48
        %2255 = vset.pattern.permute.xlu0 %v2254
        %2256 = vperm.xlu0 %2255, %v2215
        %v2257 = vpop.permute.xlu0 %2256
        %v2258 = vlaneseq
        %v2259 = vshrl.u32 %v2258, 7
        %v2260 = vadd.s32 %v2259, 56
        %2261 = vset.pattern.permute.xlu0 %v2260
        %2262 = vperm.xlu0 %2261, %v2215
        %v2263 = vpop.permute.xlu0 %2262
        %v2264 = vlaneseq
        %v2265 = vshrl.u32 %v2264, 7
        %v2266 = vadd.s32 %v2265, 64
        %2267 = vset.pattern.permute.xlu0 %v2266
        %2268 = vperm.xlu0 %2267, %v2215
        %v2269 = vpop.permute.xlu0 %2268
        %v2270 = vlaneseq
        %v2271 = vshrl.u32 %v2270, 7
        %v2272 = vadd.s32 %v2271, 72
        %2273 = vset.pattern.permute.xlu0 %v2272
        %2274 = vperm.xlu0 %2273, %v2215
        %v2275 = vpop.permute.xlu0 %2274
        %v2276 = vlaneseq
        %v2277 = vshrl.u32 %v2276, 7
        %v2278 = vadd.s32 %v2277, 80
        %2279 = vset.pattern.permute.xlu0 %v2278
        %2280 = vperm.xlu0 %2279, %v2215
        %v2281 = vpop.permute.xlu0 %2280
        %v2282 = vlaneseq
        %v2283 = vshrl.u32 %v2282, 7
        %v2284 = vadd.s32 %v2283, 88
        %2285 = vset.pattern.permute.xlu0 %v2284
        %2286 = vperm.xlu0 %2285, %v2215
        %v2287 = vpop.permute.xlu0 %2286
        %v2288 = vlaneseq
        %v2289 = vshrl.u32 %v2288, 7
        %v2290 = vadd.s32 %v2289, 96
        %2291 = vset.pattern.permute.xlu0 %v2290
        %2292 = vperm.xlu0 %2291, %v2215
        %v2293 = vpop.permute.xlu0 %2292
        %v2294 = vlaneseq
        %v2295 = vshrl.u32 %v2294, 7
        %v2296 = vadd.s32 %v2295, 104
        %2297 = vset.pattern.permute.xlu0 %v2296
        %2298 = vperm.xlu0 %2297, %v2215
        %v2299 = vpop.permute.xlu0 %2298
        %v2300 = vlaneseq
        %v2301 = vshrl.u32 %v2300, 7
        %v2302 = vadd.s32 %v2301, 112
        %2303 = vset.pattern.permute.xlu0 %v2302
        %2304 = vperm.xlu0 %2303, %v2215
        %v2305 = vpop.permute.xlu0 %2304
        %v2306 = vlaneseq
        %v2307 = vshrl.u32 %v2306, 7
        %v2308 = vadd.s32 %v2307, 120
        %2309 = vset.pattern.permute.xlu0 %v2308
        %2310 = vperm.xlu0 %2309, %v2215
        %v2311 = vpop.permute.xlu0 %2310
        %v2312 = vperm.slane %v1434, 4
        %v2313 = vlaneseq
        %v2314 = vshrl.u32 %v2313, 7
        %2316 = vset.pattern.permute.xlu0 %v2314
        %2317 = vperm.xlu0 %2316, %v2312
        %v2318 = vpop.permute.xlu0 %2317
        %v2319 = vlaneseq
        %v2320 = vshrl.u32 %v2319, 7
        %v2321 = vadd.s32 %v2320, 8
        %2322 = vset.pattern.permute.xlu0 %v2321
        %2323 = vperm.xlu0 %2322, %v2312
        %v2324 = vpop.permute.xlu0 %2323
        %v2325 = vlaneseq
        %v2326 = vshrl.u32 %v2325, 7
        %v2327 = vadd.s32 %v2326, 16
        %2328 = vset.pattern.permute.xlu0 %v2327
        %2329 = vperm.xlu0 %2328, %v2312
        %v2330 = vpop.permute.xlu0 %2329
        %v2331 = vlaneseq
        %v2332 = vshrl.u32 %v2331, 7
        %v2333 = vadd.s32 %v2332, 24
        %2334 = vset.pattern.permute.xlu0 %v2333
        %2335 = vperm.xlu0 %2334, %v2312
        %v2336 = vpop.permute.xlu0 %2335
        %v2337 = vlaneseq
        %v2338 = vshrl.u32 %v2337, 7
        %v2339 = vadd.s32 %v2338, 32
        %2340 = vset.pattern.permute.xlu0 %v2339
        %2341 = vperm.xlu0 %2340, %v2312
        %v2342 = vpop.permute.xlu0 %2341
        %v2343 = vlaneseq
        %v2344 = vshrl.u32 %v2343, 7
        %v2345 = vadd.s32 %v2344, 40
        %2346 = vset.pattern.permute.xlu0 %v2345
        %2347 = vperm.xlu0 %2346, %v2312
        %v2348 = vpop.permute.xlu0 %2347
        %v2349 = vlaneseq
        %v2350 = vshrl.u32 %v2349, 7
        %v2351 = vadd.s32 %v2350, 48
        %2352 = vset.pattern.permute.xlu0 %v2351
        %2353 = vperm.xlu0 %2352, %v2312
        %v2354 = vpop.permute.xlu0 %2353
        %v2355 = vlaneseq
        %v2356 = vshrl.u32 %v2355, 7
        %v2357 = vadd.s32 %v2356, 56
        %2358 = vset.pattern.permute.xlu0 %v2357
        %2359 = vperm.xlu0 %2358, %v2312
        %v2360 = vpop.permute.xlu0 %2359
        %v2361 = vlaneseq
        %v2362 = vshrl.u32 %v2361, 7
        %v2363 = vadd.s32 %v2362, 64
        %2364 = vset.pattern.permute.xlu0 %v2363
        %2365 = vperm.xlu0 %2364, %v2312
        %v2366 = vpop.permute.xlu0 %2365
        %v2367 = vlaneseq
        %v2368 = vshrl.u32 %v2367, 7
        %v2369 = vadd.s32 %v2368, 72
        %2370 = vset.pattern.permute.xlu0 %v2369
        %2371 = vperm.xlu0 %2370, %v2312
        %v2372 = vpop.permute.xlu0 %2371
        %v2373 = vlaneseq
        %v2374 = vshrl.u32 %v2373, 7
        %v2375 = vadd.s32 %v2374, 80
        %2376 = vset.pattern.permute.xlu0 %v2375
        %2377 = vperm.xlu0 %2376, %v2312
        %v2378 = vpop.permute.xlu0 %2377
        %v2379 = vlaneseq
        %v2380 = vshrl.u32 %v2379, 7
        %v2381 = vadd.s32 %v2380, 88
        %2382 = vset.pattern.permute.xlu0 %v2381
        %2383 = vperm.xlu0 %2382, %v2312
        %v2384 = vpop.permute.xlu0 %2383
        %v2385 = vlaneseq
        %v2386 = vshrl.u32 %v2385, 7
        %v2387 = vadd.s32 %v2386, 96
        %2388 = vset.pattern.permute.xlu0 %v2387
        %2389 = vperm.xlu0 %2388, %v2312
        %v2390 = vpop.permute.xlu0 %2389
        %v2391 = vlaneseq
        %v2392 = vshrl.u32 %v2391, 7
        %v2393 = vadd.s32 %v2392, 104
        %2394 = vset.pattern.permute.xlu0 %v2393
        %2395 = vperm.xlu0 %2394, %v2312
        %v2396 = vpop.permute.xlu0 %2395
        %v2397 = vlaneseq
        %v2398 = vshrl.u32 %v2397, 7
        %v2399 = vadd.s32 %v2398, 112
        %2400 = vset.pattern.permute.xlu0 %v2399
        %2401 = vperm.xlu0 %2400, %v2312
        %v2402 = vpop.permute.xlu0 %2401
        %v2403 = vlaneseq
        %v2404 = vshrl.u32 %v2403, 7
        %v2405 = vadd.s32 %v2404, 120
        %2406 = vset.pattern.permute.xlu0 %v2405
        %2407 = vperm.xlu0 %2406, %v2312
        %v2408 = vpop.permute.xlu0 %2407
        %v2409 = vperm.slane %v1433, 5
        %v2410 = vlaneseq
        %v2411 = vshrl.u32 %v2410, 7
        %2413 = vset.pattern.permute.xlu0 %v2411
        %2414 = vperm.xlu0 %2413, %v2409
        %v2415 = vpop.permute.xlu0 %2414
        %v2416 = vlaneseq
        %v2417 = vshrl.u32 %v2416, 7
        %v2418 = vadd.s32 %v2417, 8
        %2419 = vset.pattern.permute.xlu0 %v2418
        %2420 = vperm.xlu0 %2419, %v2409
        %v2421 = vpop.permute.xlu0 %2420
        %v2422 = vlaneseq
        %v2423 = vshrl.u32 %v2422, 7
        %v2424 = vadd.s32 %v2423, 16
        %2425 = vset.pattern.permute.xlu0 %v2424
        %2426 = vperm.xlu0 %2425, %v2409
        %v2427 = vpop.permute.xlu0 %2426
        %v2428 = vlaneseq
        %v2429 = vshrl.u32 %v2428, 7
        %v2430 = vadd.s32 %v2429, 24
        %2431 = vset.pattern.permute.xlu0 %v2430
        %2432 = vperm.xlu0 %2431, %v2409
        %v2433 = vpop.permute.xlu0 %2432
        %v2434 = vlaneseq
        %v2435 = vshrl.u32 %v2434, 7
        %v2436 = vadd.s32 %v2435, 32
        %2437 = vset.pattern.permute.xlu0 %v2436
        %2438 = vperm.xlu0 %2437, %v2409
        %v2439 = vpop.permute.xlu0 %2438
        %v2440 = vlaneseq
        %v2441 = vshrl.u32 %v2440, 7
        %v2442 = vadd.s32 %v2441, 40
        %2443 = vset.pattern.permute.xlu0 %v2442
        %2444 = vperm.xlu0 %2443, %v2409
        %v2445 = vpop.permute.xlu0 %2444
        %v2446 = vlaneseq
        %v2447 = vshrl.u32 %v2446, 7
        %v2448 = vadd.s32 %v2447, 48
        %2449 = vset.pattern.permute.xlu0 %v2448
        %2450 = vperm.xlu0 %2449, %v2409
        %v2451 = vpop.permute.xlu0 %2450
        %v2452 = vlaneseq
        %v2453 = vshrl.u32 %v2452, 7
        %v2454 = vadd.s32 %v2453, 56
        %2455 = vset.pattern.permute.xlu0 %v2454
        %2456 = vperm.xlu0 %2455, %v2409
        %v2457 = vpop.permute.xlu0 %2456
        %v2458 = vlaneseq
        %v2459 = vshrl.u32 %v2458, 7
        %v2460 = vadd.s32 %v2459, 64
        %2461 = vset.pattern.permute.xlu0 %v2460
        %2462 = vperm.xlu0 %2461, %v2409
        %v2463 = vpop.permute.xlu0 %2462
        %v2464 = vlaneseq
        %v2465 = vshrl.u32 %v2464, 7
        %v2466 = vadd.s32 %v2465, 72
        %2467 = vset.pattern.permute.xlu0 %v2466
        %2468 = vperm.xlu0 %2467, %v2409
        %v2469 = vpop.permute.xlu0 %2468
        %v2470 = vlaneseq
        %v2471 = vshrl.u32 %v2470, 7
        %v2472 = vadd.s32 %v2471, 80
        %2473 = vset.pattern.permute.xlu0 %v2472
        %2474 = vperm.xlu0 %2473, %v2409
        %v2475 = vpop.permute.xlu0 %2474
        %v2476 = vlaneseq
        %v2477 = vshrl.u32 %v2476, 7
        %v2478 = vadd.s32 %v2477, 88
        %2479 = vset.pattern.permute.xlu0 %v2478
        %2480 = vperm.xlu0 %2479, %v2409
        %v2481 = vpop.permute.xlu0 %2480
        %v2482 = vlaneseq
        %v2483 = vshrl.u32 %v2482, 7
        %v2484 = vadd.s32 %v2483, 96
        %2485 = vset.pattern.permute.xlu0 %v2484
        %2486 = vperm.xlu0 %2485, %v2409
        %v2487 = vpop.permute.xlu0 %2486
        %v2488 = vlaneseq
        %v2489 = vshrl.u32 %v2488, 7
        %v2490 = vadd.s32 %v2489, 104
        %2491 = vset.pattern.permute.xlu0 %v2490
        %2492 = vperm.xlu0 %2491, %v2409
        %v2493 = vpop.permute.xlu0 %2492
        %v2494 = vlaneseq
        %v2495 = vshrl.u32 %v2494, 7
        %v2496 = vadd.s32 %v2495, 112
        %2497 = vset.pattern.permute.xlu0 %v2496
        %2498 = vperm.xlu0 %2497, %v2409
        %v2499 = vpop.permute.xlu0 %2498
        %v2500 = vlaneseq
        %v2501 = vshrl.u32 %v2500, 7
        %v2502 = vadd.s32 %v2501, 120
        %2503 = vset.pattern.permute.xlu0 %v2502
        %2504 = vperm.xlu0 %2503, %v2409
        %v2505 = vpop.permute.xlu0 %2504
        %v2506 = vperm.slane %v1434, 5
        %v2507 = vlaneseq
        %v2508 = vshrl.u32 %v2507, 7
        %2510 = vset.pattern.permute.xlu0 %v2508
        %2511 = vperm.xlu0 %2510, %v2506
        %v2512 = vpop.permute.xlu0 %2511
        %v2513 = vlaneseq
        %v2514 = vshrl.u32 %v2513, 7
        %v2515 = vadd.s32 %v2514, 8
        %2516 = vset.pattern.permute.xlu0 %v2515
        %2517 = vperm.xlu0 %2516, %v2506
        %v2518 = vpop.permute.xlu0 %2517
        %v2519 = vlaneseq
        %v2520 = vshrl.u32 %v2519, 7
        %v2521 = vadd.s32 %v2520, 16
        %2522 = vset.pattern.permute.xlu0 %v2521
        %2523 = vperm.xlu0 %2522, %v2506
        %v2524 = vpop.permute.xlu0 %2523
        %v2525 = vlaneseq
        %v2526 = vshrl.u32 %v2525, 7
        %v2527 = vadd.s32 %v2526, 24
        %2528 = vset.pattern.permute.xlu0 %v2527
        %2529 = vperm.xlu0 %2528, %v2506
        %v2530 = vpop.permute.xlu0 %2529
        %v2531 = vlaneseq
        %v2532 = vshrl.u32 %v2531, 7
        %v2533 = vadd.s32 %v2532, 32
        %2534 = vset.pattern.permute.xlu0 %v2533
        %2535 = vperm.xlu0 %2534, %v2506
        %v2536 = vpop.permute.xlu0 %2535
        %v2537 = vlaneseq
        %v2538 = vshrl.u32 %v2537, 7
        %v2539 = vadd.s32 %v2538, 40
        %2540 = vset.pattern.permute.xlu0 %v2539
        %2541 = vperm.xlu0 %2540, %v2506
        %v2542 = vpop.permute.xlu0 %2541
        %v2543 = vlaneseq
        %v2544 = vshrl.u32 %v2543, 7
        %v2545 = vadd.s32 %v2544, 48
        %2546 = vset.pattern.permute.xlu0 %v2545
        %2547 = vperm.xlu0 %2546, %v2506
        %v2548 = vpop.permute.xlu0 %2547
        %v2549 = vlaneseq
        %v2550 = vshrl.u32 %v2549, 7
        %v2551 = vadd.s32 %v2550, 56
        %2552 = vset.pattern.permute.xlu0 %v2551
        %2553 = vperm.xlu0 %2552, %v2506
        %v2554 = vpop.permute.xlu0 %2553
        %v2555 = vlaneseq
        %v2556 = vshrl.u32 %v2555, 7
        %v2557 = vadd.s32 %v2556, 64
        %2558 = vset.pattern.permute.xlu0 %v2557
        %2559 = vperm.xlu0 %2558, %v2506
        %v2560 = vpop.permute.xlu0 %2559
        %v2561 = vlaneseq
        %v2562 = vshrl.u32 %v2561, 7
        %v2563 = vadd.s32 %v2562, 72
        %2564 = vset.pattern.permute.xlu0 %v2563
        %2565 = vperm.xlu0 %2564, %v2506
        %v2566 = vpop.permute.xlu0 %2565
        %v2567 = vlaneseq
        %v2568 = vshrl.u32 %v2567, 7
        %v2569 = vadd.s32 %v2568, 80
        %2570 = vset.pattern.permute.xlu0 %v2569
        %2571 = vperm.xlu0 %2570, %v2506
        %v2572 = vpop.permute.xlu0 %2571
        %v2573 = vlaneseq
        %v2574 = vshrl.u32 %v2573, 7
        %v2575 = vadd.s32 %v2574, 88
        %2576 = vset.pattern.permute.xlu0 %v2575
        %2577 = vperm.xlu0 %2576, %v2506
        %v2578 = vpop.permute.xlu0 %2577
        %v2579 = vlaneseq
        %v2580 = vshrl.u32 %v2579, 7
        %v2581 = vadd.s32 %v2580, 96
        %2582 = vset.pattern.permute.xlu0 %v2581
        %2583 = vperm.xlu0 %2582, %v2506
        %v2584 = vpop.permute.xlu0 %2583
        %v2585 = vlaneseq
        %v2586 = vshrl.u32 %v2585, 7
        %v2587 = vadd.s32 %v2586, 104
        %2588 = vset.pattern.permute.xlu0 %v2587
        %2589 = vperm.xlu0 %2588, %v2506
        %v2590 = vpop.permute.xlu0 %2589
        %v2591 = vlaneseq
        %v2592 = vshrl.u32 %v2591, 7
        %v2593 = vadd.s32 %v2592, 112
        %2594 = vset.pattern.permute.xlu0 %v2593
        %2595 = vperm.xlu0 %2594, %v2506
        %v2596 = vpop.permute.xlu0 %2595
        %v2597 = vlaneseq
        %v2598 = vshrl.u32 %v2597, 7
        %v2599 = vadd.s32 %v2598, 120
        %2600 = vset.pattern.permute.xlu0 %v2599
        %2601 = vperm.xlu0 %2600, %v2506
        %v2602 = vpop.permute.xlu0 %2601
        %v2603 = vperm.slane %v1433, 6
        %v2604 = vlaneseq
        %v2605 = vshrl.u32 %v2604, 7
        %2607 = vset.pattern.permute.xlu0 %v2605
        %2608 = vperm.xlu0 %2607, %v2603
        %v2609 = vpop.permute.xlu0 %2608
        %v2610 = vlaneseq
        %v2611 = vshrl.u32 %v2610, 7
        %v2612 = vadd.s32 %v2611, 8
        %2613 = vset.pattern.permute.xlu0 %v2612
        %2614 = vperm.xlu0 %2613, %v2603
        %v2615 = vpop.permute.xlu0 %2614
        %v2616 = vlaneseq
        %v2617 = vshrl.u32 %v2616, 7
        %v2618 = vadd.s32 %v2617, 16
        %2619 = vset.pattern.permute.xlu0 %v2618
        %2620 = vperm.xlu0 %2619, %v2603
        %v2621 = vpop.permute.xlu0 %2620
        %v2622 = vlaneseq
        %v2623 = vshrl.u32 %v2622, 7
        %v2624 = vadd.s32 %v2623, 24
        %2625 = vset.pattern.permute.xlu0 %v2624
        %2626 = vperm.xlu0 %2625, %v2603
        %v2627 = vpop.permute.xlu0 %2626
        %v2628 = vlaneseq
        %v2629 = vshrl.u32 %v2628, 7
        %v2630 = vadd.s32 %v2629, 32
        %2631 = vset.pattern.permute.xlu0 %v2630
        %2632 = vperm.xlu0 %2631, %v2603
        %v2633 = vpop.permute.xlu0 %2632
        %v2634 = vlaneseq
        %v2635 = vshrl.u32 %v2634, 7
        %v2636 = vadd.s32 %v2635, 40
        %2637 = vset.pattern.permute.xlu0 %v2636
        %2638 = vperm.xlu0 %2637, %v2603
        %v2639 = vpop.permute.xlu0 %2638
        %v2640 = vlaneseq
        %v2641 = vshrl.u32 %v2640, 7
        %v2642 = vadd.s32 %v2641, 48
        %2643 = vset.pattern.permute.xlu0 %v2642
        %2644 = vperm.xlu0 %2643, %v2603
        %v2645 = vpop.permute.xlu0 %2644
        %v2646 = vlaneseq
        %v2647 = vshrl.u32 %v2646, 7
        %v2648 = vadd.s32 %v2647, 56
        %2649 = vset.pattern.permute.xlu0 %v2648
        %2650 = vperm.xlu0 %2649, %v2603
        %v2651 = vpop.permute.xlu0 %2650
        %v2652 = vlaneseq
        %v2653 = vshrl.u32 %v2652, 7
        %v2654 = vadd.s32 %v2653, 64
        %2655 = vset.pattern.permute.xlu0 %v2654
        %2656 = vperm.xlu0 %2655, %v2603
        %v2657 = vpop.permute.xlu0 %2656
        %v2658 = vlaneseq
        %v2659 = vshrl.u32 %v2658, 7
        %v2660 = vadd.s32 %v2659, 72
        %2661 = vset.pattern.permute.xlu0 %v2660
        %2662 = vperm.xlu0 %2661, %v2603
        %v2663 = vpop.permute.xlu0 %2662
        %v2664 = vlaneseq
        %v2665 = vshrl.u32 %v2664, 7
        %v2666 = vadd.s32 %v2665, 80
        %2667 = vset.pattern.permute.xlu0 %v2666
        %2668 = vperm.xlu0 %2667, %v2603
        %v2669 = vpop.permute.xlu0 %2668
        %v2670 = vlaneseq
        %v2671 = vshrl.u32 %v2670, 7
        %v2672 = vadd.s32 %v2671, 88
        %2673 = vset.pattern.permute.xlu0 %v2672
        %2674 = vperm.xlu0 %2673, %v2603
        %v2675 = vpop.permute.xlu0 %2674
        %v2676 = vlaneseq
        %v2677 = vshrl.u32 %v2676, 7
        %v2678 = vadd.s32 %v2677, 96
        %2679 = vset.pattern.permute.xlu0 %v2678
        %2680 = vperm.xlu0 %2679, %v2603
        %v2681 = vpop.permute.xlu0 %2680
        %v2682 = vlaneseq
        %v2683 = vshrl.u32 %v2682, 7
        %v2684 = vadd.s32 %v2683, 104
        %2685 = vset.pattern.permute.xlu0 %v2684
        %2686 = vperm.xlu0 %2685, %v2603
        %v2687 = vpop.permute.xlu0 %2686
        %v2688 = vlaneseq
        %v2689 = vshrl.u32 %v2688, 7
        %v2690 = vadd.s32 %v2689, 112
        %2691 = vset.pattern.permute.xlu0 %v2690
        %2692 = vperm.xlu0 %2691, %v2603
        %v2693 = vpop.permute.xlu0 %2692
        %v2694 = vlaneseq
        %v2695 = vshrl.u32 %v2694, 7
        %v2696 = vadd.s32 %v2695, 120
        %2697 = vset.pattern.permute.xlu0 %v2696
        %2698 = vperm.xlu0 %2697, %v2603
        %v2699 = vpop.permute.xlu0 %2698
        %v2700 = vperm.slane %v1434, 6
        %v2701 = vlaneseq
        %v2702 = vshrl.u32 %v2701, 7
        %2704 = vset.pattern.permute.xlu0 %v2702
        %2705 = vperm.xlu0 %2704, %v2700
        %v2706 = vpop.permute.xlu0 %2705
        %v2707 = vlaneseq
        %v2708 = vshrl.u32 %v2707, 7
        %v2709 = vadd.s32 %v2708, 8
        %2710 = vset.pattern.permute.xlu0 %v2709
        %2711 = vperm.xlu0 %2710, %v2700
        %v2712 = vpop.permute.xlu0 %2711
        %v2713 = vlaneseq
        %v2714 = vshrl.u32 %v2713, 7
        %v2715 = vadd.s32 %v2714, 16
        %2716 = vset.pattern.permute.xlu0 %v2715
        %2717 = vperm.xlu0 %2716, %v2700
        %v2718 = vpop.permute.xlu0 %2717
        %v2719 = vlaneseq
        %v2720 = vshrl.u32 %v2719, 7
        %v2721 = vadd.s32 %v2720, 24
        %2722 = vset.pattern.permute.xlu0 %v2721
        %2723 = vperm.xlu0 %2722, %v2700
        %v2724 = vpop.permute.xlu0 %2723
        %v2725 = vlaneseq
        %v2726 = vshrl.u32 %v2725, 7
        %v2727 = vadd.s32 %v2726, 32
        %2728 = vset.pattern.permute.xlu0 %v2727
        %2729 = vperm.xlu0 %2728, %v2700
        %v2730 = vpop.permute.xlu0 %2729
        %v2731 = vlaneseq
        %v2732 = vshrl.u32 %v2731, 7
        %v2733 = vadd.s32 %v2732, 40
        %2734 = vset.pattern.permute.xlu0 %v2733
        %2735 = vperm.xlu0 %2734, %v2700
        %v2736 = vpop.permute.xlu0 %2735
        %v2737 = vlaneseq
        %v2738 = vshrl.u32 %v2737, 7
        %v2739 = vadd.s32 %v2738, 48
        %2740 = vset.pattern.permute.xlu0 %v2739
        %2741 = vperm.xlu0 %2740, %v2700
        %v2742 = vpop.permute.xlu0 %2741
        %v2743 = vlaneseq
        %v2744 = vshrl.u32 %v2743, 7
        %v2745 = vadd.s32 %v2744, 56
        %2746 = vset.pattern.permute.xlu0 %v2745
        %2747 = vperm.xlu0 %2746, %v2700
        %v2748 = vpop.permute.xlu0 %2747
        %v2749 = vlaneseq
        %v2750 = vshrl.u32 %v2749, 7
        %v2751 = vadd.s32 %v2750, 64
        %2752 = vset.pattern.permute.xlu0 %v2751
        %2753 = vperm.xlu0 %2752, %v2700
        %v2754 = vpop.permute.xlu0 %2753
        %v2755 = vlaneseq
        %v2756 = vshrl.u32 %v2755, 7
        %v2757 = vadd.s32 %v2756, 72
        %2758 = vset.pattern.permute.xlu0 %v2757
        %2759 = vperm.xlu0 %2758, %v2700
        %v2760 = vpop.permute.xlu0 %2759
        %v2761 = vlaneseq
        %v2762 = vshrl.u32 %v2761, 7
        %v2763 = vadd.s32 %v2762, 80
        %2764 = vset.pattern.permute.xlu0 %v2763
        %2765 = vperm.xlu0 %2764, %v2700
        %v2766 = vpop.permute.xlu0 %2765
        %v2767 = vlaneseq
        %v2768 = vshrl.u32 %v2767, 7
        %v2769 = vadd.s32 %v2768, 88
        %2770 = vset.pattern.permute.xlu0 %v2769
        %2771 = vperm.xlu0 %2770, %v2700
        %v2772 = vpop.permute.xlu0 %2771
        %v2773 = vlaneseq
        %v2774 = vshrl.u32 %v2773, 7
        %v2775 = vadd.s32 %v2774, 96
        %2776 = vset.pattern.permute.xlu0 %v2775
        %2777 = vperm.xlu0 %2776, %v2700
        %v2778 = vpop.permute.xlu0 %2777
        %v2779 = vlaneseq
        %v2780 = vshrl.u32 %v2779, 7
        %v2781 = vadd.s32 %v2780, 104
        %2782 = vset.pattern.permute.xlu0 %v2781
        %2783 = vperm.xlu0 %2782, %v2700
        %v2784 = vpop.permute.xlu0 %2783
        %v2785 = vlaneseq
        %v2786 = vshrl.u32 %v2785, 7
        %v2787 = vadd.s32 %v2786, 112
        %2788 = vset.pattern.permute.xlu0 %v2787
        %2789 = vperm.xlu0 %2788, %v2700
        %v2790 = vpop.permute.xlu0 %2789
        %v2791 = vlaneseq
        %v2792 = vshrl.u32 %v2791, 7
        %v2793 = vadd.s32 %v2792, 120
        %2794 = vset.pattern.permute.xlu0 %v2793
        %2795 = vperm.xlu0 %2794, %v2700
        %v2796 = vpop.permute.xlu0 %2795
        %v2797 = vperm.slane %v1433, 7
        %v2798 = vlaneseq
        %v2799 = vshrl.u32 %v2798, 7
        %2801 = vset.pattern.permute.xlu0 %v2799
        %2802 = vperm.xlu0 %2801, %v2797
        %v2803 = vpop.permute.xlu0 %2802
        %v2804 = vlaneseq
        %v2805 = vshrl.u32 %v2804, 7
        %v2806 = vadd.s32 %v2805, 8
        %2807 = vset.pattern.permute.xlu0 %v2806
        %2808 = vperm.xlu0 %2807, %v2797
        %v2809 = vpop.permute.xlu0 %2808
        %v2810 = vlaneseq
        %v2811 = vshrl.u32 %v2810, 7
        %v2812 = vadd.s32 %v2811, 16
        %2813 = vset.pattern.permute.xlu0 %v2812
        %2814 = vperm.xlu0 %2813, %v2797
        %v2815 = vpop.permute.xlu0 %2814
        %v2816 = vlaneseq
        %v2817 = vshrl.u32 %v2816, 7
        %v2818 = vadd.s32 %v2817, 24
        %2819 = vset.pattern.permute.xlu0 %v2818
        %2820 = vperm.xlu0 %2819, %v2797
        %v2821 = vpop.permute.xlu0 %2820
        %v2822 = vlaneseq
        %v2823 = vshrl.u32 %v2822, 7
        %v2824 = vadd.s32 %v2823, 32
        %2825 = vset.pattern.permute.xlu0 %v2824
        %2826 = vperm.xlu0 %2825, %v2797
        %v2827 = vpop.permute.xlu0 %2826
        %v2828 = vlaneseq
        %v2829 = vshrl.u32 %v2828, 7
        %v2830 = vadd.s32 %v2829, 40
        %2831 = vset.pattern.permute.xlu0 %v2830
        %2832 = vperm.xlu0 %2831, %v2797
        %v2833 = vpop.permute.xlu0 %2832
        %v2834 = vlaneseq
        %v2835 = vshrl.u32 %v2834, 7
        %v2836 = vadd.s32 %v2835, 48
        %2837 = vset.pattern.permute.xlu0 %v2836
        %2838 = vperm.xlu0 %2837, %v2797
        %v2839 = vpop.permute.xlu0 %2838
        %v2840 = vlaneseq
        %v2841 = vshrl.u32 %v2840, 7
        %v2842 = vadd.s32 %v2841, 56
        %2843 = vset.pattern.permute.xlu0 %v2842
        %2844 = vperm.xlu0 %2843, %v2797
        %v2845 = vpop.permute.xlu0 %2844
        %v2846 = vlaneseq
        %v2847 = vshrl.u32 %v2846, 7
        %v2848 = vadd.s32 %v2847, 64
        %2849 = vset.pattern.permute.xlu0 %v2848
        %2850 = vperm.xlu0 %2849, %v2797
        %v2851 = vpop.permute.xlu0 %2850
        %v2852 = vlaneseq
        %v2853 = vshrl.u32 %v2852, 7
        %v2854 = vadd.s32 %v2853, 72
        %2855 = vset.pattern.permute.xlu0 %v2854
        %2856 = vperm.xlu0 %2855, %v2797
        %v2857 = vpop.permute.xlu0 %2856
        %v2858 = vlaneseq
        %v2859 = vshrl.u32 %v2858, 7
        %v2860 = vadd.s32 %v2859, 80
        %2861 = vset.pattern.permute.xlu0 %v2860
        %2862 = vperm.xlu0 %2861, %v2797
        %v2863 = vpop.permute.xlu0 %2862
        %v2864 = vlaneseq
        %v2865 = vshrl.u32 %v2864, 7
        %v2866 = vadd.s32 %v2865, 88
        %2867 = vset.pattern.permute.xlu0 %v2866
        %2868 = vperm.xlu0 %2867, %v2797
        %v2869 = vpop.permute.xlu0 %2868
        %v2870 = vlaneseq
        %v2871 = vshrl.u32 %v2870, 7
        %v2872 = vadd.s32 %v2871, 96
        %2873 = vset.pattern.permute.xlu0 %v2872
        %2874 = vperm.xlu0 %2873, %v2797
        %v2875 = vpop.permute.xlu0 %2874
        %v2876 = vlaneseq
        %v2877 = vshrl.u32 %v2876, 7
        %v2878 = vadd.s32 %v2877, 104
        %2879 = vset.pattern.permute.xlu0 %v2878
        %2880 = vperm.xlu0 %2879, %v2797
        %v2881 = vpop.permute.xlu0 %2880
        %v2882 = vlaneseq
        %v2883 = vshrl.u32 %v2882, 7
        %v2884 = vadd.s32 %v2883, 112
        %2885 = vset.pattern.permute.xlu0 %v2884
        %2886 = vperm.xlu0 %2885, %v2797
        %v2887 = vpop.permute.xlu0 %2886
        %v2888 = vlaneseq
        %v2889 = vshrl.u32 %v2888, 7
        %v2890 = vadd.s32 %v2889, 120
        %2891 = vset.pattern.permute.xlu0 %v2890
        %2892 = vperm.xlu0 %2891, %v2797
        %v2893 = vpop.permute.xlu0 %2892
        %v2894 = vperm.slane %v1434, 7
        %v2895 = vlaneseq
        %v2896 = vshrl.u32 %v2895, 7
        %2898 = vset.pattern.permute.xlu0 %v2896
        %2899 = vperm.xlu0 %2898, %v2894
        %v2900 = vpop.permute.xlu0 %2899
        %v2901 = vlaneseq
        %v2902 = vshrl.u32 %v2901, 7
        %v2903 = vadd.s32 %v2902, 8
        %2904 = vset.pattern.permute.xlu0 %v2903
        %2905 = vperm.xlu0 %2904, %v2894
        %v2906 = vpop.permute.xlu0 %2905
        %v2907 = vlaneseq
        %v2908 = vshrl.u32 %v2907, 7
        %v2909 = vadd.s32 %v2908, 16
        %2910 = vset.pattern.permute.xlu0 %v2909
        %2911 = vperm.xlu0 %2910, %v2894
        %v2912 = vpop.permute.xlu0 %2911
        %v2913 = vlaneseq
        %v2914 = vshrl.u32 %v2913, 7
        %v2915 = vadd.s32 %v2914, 24
        %2916 = vset.pattern.permute.xlu0 %v2915
        %2917 = vperm.xlu0 %2916, %v2894
        %v2918 = vpop.permute.xlu0 %2917
        %v2919 = vlaneseq
        %v2920 = vshrl.u32 %v2919, 7
        %v2921 = vadd.s32 %v2920, 32
        %2922 = vset.pattern.permute.xlu0 %v2921
        %2923 = vperm.xlu0 %2922, %v2894
        %v2924 = vpop.permute.xlu0 %2923
        %v2925 = vlaneseq
        %v2926 = vshrl.u32 %v2925, 7
        %v2927 = vadd.s32 %v2926, 40
        %2928 = vset.pattern.permute.xlu0 %v2927
        %2929 = vperm.xlu0 %2928, %v2894
        %v2930 = vpop.permute.xlu0 %2929
        %v2931 = vlaneseq
        %v2932 = vshrl.u32 %v2931, 7
        %v2933 = vadd.s32 %v2932, 48
        %2934 = vset.pattern.permute.xlu0 %v2933
        %2935 = vperm.xlu0 %2934, %v2894
        %v2936 = vpop.permute.xlu0 %2935
        %v2937 = vlaneseq
        %v2938 = vshrl.u32 %v2937, 7
        %v2939 = vadd.s32 %v2938, 56
        %2940 = vset.pattern.permute.xlu0 %v2939
        %2941 = vperm.xlu0 %2940, %v2894
        %v2942 = vpop.permute.xlu0 %2941
        %v2943 = vlaneseq
        %v2944 = vshrl.u32 %v2943, 7
        %v2945 = vadd.s32 %v2944, 64
        %2946 = vset.pattern.permute.xlu0 %v2945
        %2947 = vperm.xlu0 %2946, %v2894
        %v2948 = vpop.permute.xlu0 %2947
        %v2949 = vlaneseq
        %v2950 = vshrl.u32 %v2949, 7
        %v2951 = vadd.s32 %v2950, 72
        %2952 = vset.pattern.permute.xlu0 %v2951
        %2953 = vperm.xlu0 %2952, %v2894
        %v2954 = vpop.permute.xlu0 %2953
        %v2955 = vlaneseq
        %v2956 = vshrl.u32 %v2955, 7
        %v2957 = vadd.s32 %v2956, 80
        %2958 = vset.pattern.permute.xlu0 %v2957
        %2959 = vperm.xlu0 %2958, %v2894
        %v2960 = vpop.permute.xlu0 %2959
        %v2961 = vlaneseq
        %v2962 = vshrl.u32 %v2961, 7
        %v2963 = vadd.s32 %v2962, 88
        %2964 = vset.pattern.permute.xlu0 %v2963
        %2965 = vperm.xlu0 %2964, %v2894
        %v2966 = vpop.permute.xlu0 %2965
        %v2967 = vlaneseq
        %v2968 = vshrl.u32 %v2967, 7
        %v2969 = vadd.s32 %v2968, 96
        %2970 = vset.pattern.permute.xlu0 %v2969
        %2971 = vperm.xlu0 %2970, %v2894
        %v2972 = vpop.permute.xlu0 %2971
        %v2973 = vlaneseq
        %v2974 = vshrl.u32 %v2973, 7
        %v2975 = vadd.s32 %v2974, 104
        %2976 = vset.pattern.permute.xlu0 %v2975
        %2977 = vperm.xlu0 %2976, %v2894
        %v2978 = vpop.permute.xlu0 %2977
        %v2979 = vlaneseq
        %v2980 = vshrl.u32 %v2979, 7
        %v2981 = vadd.s32 %v2980, 112
        %2982 = vset.pattern.permute.xlu0 %v2981
        %2983 = vperm.xlu0 %2982, %v2894
        %v2984 = vpop.permute.xlu0 %2983
        %v2985 = vlaneseq
        %v2986 = vshrl.u32 %v2985, 7
        %v2987 = vadd.s32 %v2986, 120
        %2988 = vset.pattern.permute.xlu0 %v2987
        %2989 = vperm.xlu0 %2988, %v2894
        %v2990 = vpop.permute.xlu0 %2989
        %v2991 = vperm.slane %v1435, 0
        %v2992 = vlaneseq
        %v2993 = vshrl.u32 %v2992, 7
        %2995 = vset.pattern.permute.xlu0 %v2993
        %2996 = vperm.xlu0 %2995, %v2991
        %v2997 = vpop.permute.xlu0 %2996
        %v2998 = vlaneseq
        %v2999 = vshrl.u32 %v2998, 7
        %v3000 = vadd.s32 %v2999, 8
        %3001 = vset.pattern.permute.xlu0 %v3000
        %3002 = vperm.xlu0 %3001, %v2991
        %v3003 = vpop.permute.xlu0 %3002
        %v3004 = vlaneseq
        %v3005 = vshrl.u32 %v3004, 7
        %v3006 = vadd.s32 %v3005, 16
        %3007 = vset.pattern.permute.xlu0 %v3006
        %3008 = vperm.xlu0 %3007, %v2991
        %v3009 = vpop.permute.xlu0 %3008
        %v3010 = vlaneseq
        %v3011 = vshrl.u32 %v3010, 7
        %v3012 = vadd.s32 %v3011, 24
        %3013 = vset.pattern.permute.xlu0 %v3012
        %3014 = vperm.xlu0 %3013, %v2991
        %v3015 = vpop.permute.xlu0 %3014
        %v3016 = vlaneseq
        %v3017 = vshrl.u32 %v3016, 7
        %v3018 = vadd.s32 %v3017, 32
        %3019 = vset.pattern.permute.xlu0 %v3018
        %3020 = vperm.xlu0 %3019, %v2991
        %v3021 = vpop.permute.xlu0 %3020
        %v3022 = vlaneseq
        %v3023 = vshrl.u32 %v3022, 7
        %v3024 = vadd.s32 %v3023, 40
        %3025 = vset.pattern.permute.xlu0 %v3024
        %3026 = vperm.xlu0 %3025, %v2991
        %v3027 = vpop.permute.xlu0 %3026
        %v3028 = vlaneseq
        %v3029 = vshrl.u32 %v3028, 7
        %v3030 = vadd.s32 %v3029, 48
        %3031 = vset.pattern.permute.xlu0 %v3030
        %3032 = vperm.xlu0 %3031, %v2991
        %v3033 = vpop.permute.xlu0 %3032
        %v3034 = vlaneseq
        %v3035 = vshrl.u32 %v3034, 7
        %v3036 = vadd.s32 %v3035, 56
        %3037 = vset.pattern.permute.xlu0 %v3036
        %3038 = vperm.xlu0 %3037, %v2991
        %v3039 = vpop.permute.xlu0 %3038
        %v3040 = vlaneseq
        %v3041 = vshrl.u32 %v3040, 7
        %v3042 = vadd.s32 %v3041, 64
        %3043 = vset.pattern.permute.xlu0 %v3042
        %3044 = vperm.xlu0 %3043, %v2991
        %v3045 = vpop.permute.xlu0 %3044
        %v3046 = vlaneseq
        %v3047 = vshrl.u32 %v3046, 7
        %v3048 = vadd.s32 %v3047, 72
        %3049 = vset.pattern.permute.xlu0 %v3048
        %3050 = vperm.xlu0 %3049, %v2991
        %v3051 = vpop.permute.xlu0 %3050
        %v3052 = vlaneseq
        %v3053 = vshrl.u32 %v3052, 7
        %v3054 = vadd.s32 %v3053, 80
        %3055 = vset.pattern.permute.xlu0 %v3054
        %3056 = vperm.xlu0 %3055, %v2991
        %v3057 = vpop.permute.xlu0 %3056
        %v3058 = vlaneseq
        %v3059 = vshrl.u32 %v3058, 7
        %v3060 = vadd.s32 %v3059, 88
        %3061 = vset.pattern.permute.xlu0 %v3060
        %3062 = vperm.xlu0 %3061, %v2991
        %v3063 = vpop.permute.xlu0 %3062
        %v3064 = vlaneseq
        %v3065 = vshrl.u32 %v3064, 7
        %v3066 = vadd.s32 %v3065, 96
        %3067 = vset.pattern.permute.xlu0 %v3066
        %3068 = vperm.xlu0 %3067, %v2991
        %v3069 = vpop.permute.xlu0 %3068
        %v3070 = vlaneseq
        %v3071 = vshrl.u32 %v3070, 7
        %v3072 = vadd.s32 %v3071, 104
        %3073 = vset.pattern.permute.xlu0 %v3072
        %3074 = vperm.xlu0 %3073, %v2991
        %v3075 = vpop.permute.xlu0 %3074
        %v3076 = vlaneseq
        %v3077 = vshrl.u32 %v3076, 7
        %v3078 = vadd.s32 %v3077, 112
        %3079 = vset.pattern.permute.xlu0 %v3078
        %3080 = vperm.xlu0 %3079, %v2991
        %v3081 = vpop.permute.xlu0 %3080
        %v3082 = vlaneseq
        %v3083 = vshrl.u32 %v3082, 7
        %v3084 = vadd.s32 %v3083, 120
        %3085 = vset.pattern.permute.xlu0 %v3084
        %3086 = vperm.xlu0 %3085, %v2991
        %v3087 = vpop.permute.xlu0 %3086
        %v3088 = vperm.slane %v1436, 0
        %v3089 = vlaneseq
        %v3090 = vshrl.u32 %v3089, 7
        %3092 = vset.pattern.permute.xlu0 %v3090
        %3093 = vperm.xlu0 %3092, %v3088
        %v3094 = vpop.permute.xlu0 %3093
        %v3095 = vlaneseq
        %v3096 = vshrl.u32 %v3095, 7
        %v3097 = vadd.s32 %v3096, 8
        %3098 = vset.pattern.permute.xlu0 %v3097
        %3099 = vperm.xlu0 %3098, %v3088
        %v3100 = vpop.permute.xlu0 %3099
        %v3101 = vlaneseq
        %v3102 = vshrl.u32 %v3101, 7
        %v3103 = vadd.s32 %v3102, 16
        %3104 = vset.pattern.permute.xlu0 %v3103
        %3105 = vperm.xlu0 %3104, %v3088
        %v3106 = vpop.permute.xlu0 %3105
        %v3107 = vlaneseq
        %v3108 = vshrl.u32 %v3107, 7
        %v3109 = vadd.s32 %v3108, 24
        %3110 = vset.pattern.permute.xlu0 %v3109
        %3111 = vperm.xlu0 %3110, %v3088
        %v3112 = vpop.permute.xlu0 %3111
        %v3113 = vlaneseq
        %v3114 = vshrl.u32 %v3113, 7
        %v3115 = vadd.s32 %v3114, 32
        %3116 = vset.pattern.permute.xlu0 %v3115
        %3117 = vperm.xlu0 %3116, %v3088
        %v3118 = vpop.permute.xlu0 %3117
        %v3119 = vlaneseq
        %v3120 = vshrl.u32 %v3119, 7
        %v3121 = vadd.s32 %v3120, 40
        %3122 = vset.pattern.permute.xlu0 %v3121
        %3123 = vperm.xlu0 %3122, %v3088
        %v3124 = vpop.permute.xlu0 %3123
        %v3125 = vlaneseq
        %v3126 = vshrl.u32 %v3125, 7
        %v3127 = vadd.s32 %v3126, 48
        %3128 = vset.pattern.permute.xlu0 %v3127
        %3129 = vperm.xlu0 %3128, %v3088
        %v3130 = vpop.permute.xlu0 %3129
        %v3131 = vlaneseq
        %v3132 = vshrl.u32 %v3131, 7
        %v3133 = vadd.s32 %v3132, 56
        %3134 = vset.pattern.permute.xlu0 %v3133
        %3135 = vperm.xlu0 %3134, %v3088
        %v3136 = vpop.permute.xlu0 %3135
        %v3137 = vlaneseq
        %v3138 = vshrl.u32 %v3137, 7
        %v3139 = vadd.s32 %v3138, 64
        %3140 = vset.pattern.permute.xlu0 %v3139
        %3141 = vperm.xlu0 %3140, %v3088
        %v3142 = vpop.permute.xlu0 %3141
        %v3143 = vlaneseq
        %v3144 = vshrl.u32 %v3143, 7
        %v3145 = vadd.s32 %v3144, 72
        %3146 = vset.pattern.permute.xlu0 %v3145
        %3147 = vperm.xlu0 %3146, %v3088
        %v3148 = vpop.permute.xlu0 %3147
        %v3149 = vlaneseq
        %v3150 = vshrl.u32 %v3149, 7
        %v3151 = vadd.s32 %v3150, 80
        %3152 = vset.pattern.permute.xlu0 %v3151
        %3153 = vperm.xlu0 %3152, %v3088
        %v3154 = vpop.permute.xlu0 %3153
        %v3155 = vlaneseq
        %v3156 = vshrl.u32 %v3155, 7
        %v3157 = vadd.s32 %v3156, 88
        %3158 = vset.pattern.permute.xlu0 %v3157
        %3159 = vperm.xlu0 %3158, %v3088
        %v3160 = vpop.permute.xlu0 %3159
        %v3161 = vlaneseq
        %v3162 = vshrl.u32 %v3161, 7
        %v3163 = vadd.s32 %v3162, 96
        %3164 = vset.pattern.permute.xlu0 %v3163
        %3165 = vperm.xlu0 %3164, %v3088
        %v3166 = vpop.permute.xlu0 %3165
        %v3167 = vlaneseq
        %v3168 = vshrl.u32 %v3167, 7
        %v3169 = vadd.s32 %v3168, 104
        %3170 = vset.pattern.permute.xlu0 %v3169
        %3171 = vperm.xlu0 %3170, %v3088
        %v3172 = vpop.permute.xlu0 %3171
        %v3173 = vlaneseq
        %v3174 = vshrl.u32 %v3173, 7
        %v3175 = vadd.s32 %v3174, 112
        %3176 = vset.pattern.permute.xlu0 %v3175
        %3177 = vperm.xlu0 %3176, %v3088
        %v3178 = vpop.permute.xlu0 %3177
        %v3179 = vlaneseq
        %v3180 = vshrl.u32 %v3179, 7
        %v3181 = vadd.s32 %v3180, 120
        %3182 = vset.pattern.permute.xlu0 %v3181
        %3183 = vperm.xlu0 %3182, %v3088
        %v3184 = vpop.permute.xlu0 %3183
        %v3185 = vperm.slane %v1435, 1
        %v3186 = vlaneseq
        %v3187 = vshrl.u32 %v3186, 7
        %3189 = vset.pattern.permute.xlu0 %v3187
        %3190 = vperm.xlu0 %3189, %v3185
        %v3191 = vpop.permute.xlu0 %3190
        %v3192 = vlaneseq
        %v3193 = vshrl.u32 %v3192, 7
        %v3194 = vadd.s32 %v3193, 8
        %3195 = vset.pattern.permute.xlu0 %v3194
        %3196 = vperm.xlu0 %3195, %v3185
        %v3197 = vpop.permute.xlu0 %3196
        %v3198 = vlaneseq
        %v3199 = vshrl.u32 %v3198, 7
        %v3200 = vadd.s32 %v3199, 16
        %3201 = vset.pattern.permute.xlu0 %v3200
        %3202 = vperm.xlu0 %3201, %v3185
        %v3203 = vpop.permute.xlu0 %3202
        %v3204 = vlaneseq
        %v3205 = vshrl.u32 %v3204, 7
        %v3206 = vadd.s32 %v3205, 24
        %3207 = vset.pattern.permute.xlu0 %v3206
        %3208 = vperm.xlu0 %3207, %v3185
        %v3209 = vpop.permute.xlu0 %3208
        %v3210 = vlaneseq
        %v3211 = vshrl.u32 %v3210, 7
        %v3212 = vadd.s32 %v3211, 32
        %3213 = vset.pattern.permute.xlu0 %v3212
        %3214 = vperm.xlu0 %3213, %v3185
        %v3215 = vpop.permute.xlu0 %3214
        %v3216 = vlaneseq
        %v3217 = vshrl.u32 %v3216, 7
        %v3218 = vadd.s32 %v3217, 40
        %3219 = vset.pattern.permute.xlu0 %v3218
        %3220 = vperm.xlu0 %3219, %v3185
        %v3221 = vpop.permute.xlu0 %3220
        %v3222 = vlaneseq
        %v3223 = vshrl.u32 %v3222, 7
        %v3224 = vadd.s32 %v3223, 48
        %3225 = vset.pattern.permute.xlu0 %v3224
        %3226 = vperm.xlu0 %3225, %v3185
        %v3227 = vpop.permute.xlu0 %3226
        %v3228 = vlaneseq
        %v3229 = vshrl.u32 %v3228, 7
        %v3230 = vadd.s32 %v3229, 56
        %3231 = vset.pattern.permute.xlu0 %v3230
        %3232 = vperm.xlu0 %3231, %v3185
        %v3233 = vpop.permute.xlu0 %3232
        %v3234 = vlaneseq
        %v3235 = vshrl.u32 %v3234, 7
        %v3236 = vadd.s32 %v3235, 64
        %3237 = vset.pattern.permute.xlu0 %v3236
        %3238 = vperm.xlu0 %3237, %v3185
        %v3239 = vpop.permute.xlu0 %3238
        %v3240 = vlaneseq
        %v3241 = vshrl.u32 %v3240, 7
        %v3242 = vadd.s32 %v3241, 72
        %3243 = vset.pattern.permute.xlu0 %v3242
        %3244 = vperm.xlu0 %3243, %v3185
        %v3245 = vpop.permute.xlu0 %3244
        %v3246 = vlaneseq
        %v3247 = vshrl.u32 %v3246, 7
        %v3248 = vadd.s32 %v3247, 80
        %3249 = vset.pattern.permute.xlu0 %v3248
        %3250 = vperm.xlu0 %3249, %v3185
        %v3251 = vpop.permute.xlu0 %3250
        %v3252 = vlaneseq
        %v3253 = vshrl.u32 %v3252, 7
        %v3254 = vadd.s32 %v3253, 88
        %3255 = vset.pattern.permute.xlu0 %v3254
        %3256 = vperm.xlu0 %3255, %v3185
        %v3257 = vpop.permute.xlu0 %3256
        %v3258 = vlaneseq
        %v3259 = vshrl.u32 %v3258, 7
        %v3260 = vadd.s32 %v3259, 96
        %3261 = vset.pattern.permute.xlu0 %v3260
        %3262 = vperm.xlu0 %3261, %v3185
        %v3263 = vpop.permute.xlu0 %3262
        %v3264 = vlaneseq
        %v3265 = vshrl.u32 %v3264, 7
        %v3266 = vadd.s32 %v3265, 104
        %3267 = vset.pattern.permute.xlu0 %v3266
        %3268 = vperm.xlu0 %3267, %v3185
        %v3269 = vpop.permute.xlu0 %3268
        %v3270 = vlaneseq
        %v3271 = vshrl.u32 %v3270, 7
        %v3272 = vadd.s32 %v3271, 112
        %3273 = vset.pattern.permute.xlu0 %v3272
        %3274 = vperm.xlu0 %3273, %v3185
        %v3275 = vpop.permute.xlu0 %3274
        %v3276 = vlaneseq
        %v3277 = vshrl.u32 %v3276, 7
        %v3278 = vadd.s32 %v3277, 120
        %3279 = vset.pattern.permute.xlu0 %v3278
        %3280 = vperm.xlu0 %3279, %v3185
        %v3281 = vpop.permute.xlu0 %3280
        %v3282 = vperm.slane %v1436, 1
        %v3283 = vlaneseq
        %v3284 = vshrl.u32 %v3283, 7
        %3286 = vset.pattern.permute.xlu0 %v3284
        %3287 = vperm.xlu0 %3286, %v3282
        %v3288 = vpop.permute.xlu0 %3287
        %v3289 = vlaneseq
        %v3290 = vshrl.u32 %v3289, 7
        %v3291 = vadd.s32 %v3290, 8
        %3292 = vset.pattern.permute.xlu0 %v3291
        %3293 = vperm.xlu0 %3292, %v3282
        %v3294 = vpop.permute.xlu0 %3293
        %v3295 = vlaneseq
        %v3296 = vshrl.u32 %v3295, 7
        %v3297 = vadd.s32 %v3296, 16
        %3298 = vset.pattern.permute.xlu0 %v3297
        %3299 = vperm.xlu0 %3298, %v3282
        %v3300 = vpop.permute.xlu0 %3299
        %v3301 = vlaneseq
        %v3302 = vshrl.u32 %v3301, 7
        %v3303 = vadd.s32 %v3302, 24
        %3304 = vset.pattern.permute.xlu0 %v3303
        %3305 = vperm.xlu0 %3304, %v3282
        %v3306 = vpop.permute.xlu0 %3305
        %v3307 = vlaneseq
        %v3308 = vshrl.u32 %v3307, 7
        %v3309 = vadd.s32 %v3308, 32
        %3310 = vset.pattern.permute.xlu0 %v3309
        %3311 = vperm.xlu0 %3310, %v3282
        %v3312 = vpop.permute.xlu0 %3311
        %v3313 = vlaneseq
        %v3314 = vshrl.u32 %v3313, 7
        %v3315 = vadd.s32 %v3314, 40
        %3316 = vset.pattern.permute.xlu0 %v3315
        %3317 = vperm.xlu0 %3316, %v3282
        %v3318 = vpop.permute.xlu0 %3317
        %v3319 = vlaneseq
        %v3320 = vshrl.u32 %v3319, 7
        %v3321 = vadd.s32 %v3320, 48
        %3322 = vset.pattern.permute.xlu0 %v3321
        %3323 = vperm.xlu0 %3322, %v3282
        %v3324 = vpop.permute.xlu0 %3323
        %v3325 = vlaneseq
        %v3326 = vshrl.u32 %v3325, 7
        %v3327 = vadd.s32 %v3326, 56
        %3328 = vset.pattern.permute.xlu0 %v3327
        %3329 = vperm.xlu0 %3328, %v3282
        %v3330 = vpop.permute.xlu0 %3329
        %v3331 = vlaneseq
        %v3332 = vshrl.u32 %v3331, 7
        %v3333 = vadd.s32 %v3332, 64
        %3334 = vset.pattern.permute.xlu0 %v3333
        %3335 = vperm.xlu0 %3334, %v3282
        %v3336 = vpop.permute.xlu0 %3335
        %v3337 = vlaneseq
        %v3338 = vshrl.u32 %v3337, 7
        %v3339 = vadd.s32 %v3338, 72
        %3340 = vset.pattern.permute.xlu0 %v3339
        %3341 = vperm.xlu0 %3340, %v3282
        %v3342 = vpop.permute.xlu0 %3341
        %v3343 = vlaneseq
        %v3344 = vshrl.u32 %v3343, 7
        %v3345 = vadd.s32 %v3344, 80
        %3346 = vset.pattern.permute.xlu0 %v3345
        %3347 = vperm.xlu0 %3346, %v3282
        %v3348 = vpop.permute.xlu0 %3347
        %v3349 = vlaneseq
        %v3350 = vshrl.u32 %v3349, 7
        %v3351 = vadd.s32 %v3350, 88
        %3352 = vset.pattern.permute.xlu0 %v3351
        %3353 = vperm.xlu0 %3352, %v3282
        %v3354 = vpop.permute.xlu0 %3353
        %v3355 = vlaneseq
        %v3356 = vshrl.u32 %v3355, 7
        %v3357 = vadd.s32 %v3356, 96
        %3358 = vset.pattern.permute.xlu0 %v3357
        %3359 = vperm.xlu0 %3358, %v3282
        %v3360 = vpop.permute.xlu0 %3359
        %v3361 = vlaneseq
        %v3362 = vshrl.u32 %v3361, 7
        %v3363 = vadd.s32 %v3362, 104
        %3364 = vset.pattern.permute.xlu0 %v3363
        %3365 = vperm.xlu0 %3364, %v3282
        %v3366 = vpop.permute.xlu0 %3365
        %v3367 = vlaneseq
        %v3368 = vshrl.u32 %v3367, 7
        %v3369 = vadd.s32 %v3368, 112
        %3370 = vset.pattern.permute.xlu0 %v3369
        %3371 = vperm.xlu0 %3370, %v3282
        %v3372 = vpop.permute.xlu0 %3371
        %v3373 = vlaneseq
        %v3374 = vshrl.u32 %v3373, 7
        %v3375 = vadd.s32 %v3374, 120
        %3376 = vset.pattern.permute.xlu0 %v3375
        %3377 = vperm.xlu0 %3376, %v3282
        %v3378 = vpop.permute.xlu0 %3377
        %v3379 = vperm.slane %v1435, 2
        %v3380 = vlaneseq
        %v3381 = vshrl.u32 %v3380, 7
        %3383 = vset.pattern.permute.xlu0 %v3381
        %3384 = vperm.xlu0 %3383, %v3379
        %v3385 = vpop.permute.xlu0 %3384
        %v3386 = vlaneseq
        %v3387 = vshrl.u32 %v3386, 7
        %v3388 = vadd.s32 %v3387, 8
        %3389 = vset.pattern.permute.xlu0 %v3388
        %3390 = vperm.xlu0 %3389, %v3379
        %v3391 = vpop.permute.xlu0 %3390
        %v3392 = vlaneseq
        %v3393 = vshrl.u32 %v3392, 7
        %v3394 = vadd.s32 %v3393, 16
        %3395 = vset.pattern.permute.xlu0 %v3394
        %3396 = vperm.xlu0 %3395, %v3379
        %v3397 = vpop.permute.xlu0 %3396
        %v3398 = vlaneseq
        %v3399 = vshrl.u32 %v3398, 7
        %v3400 = vadd.s32 %v3399, 24
        %3401 = vset.pattern.permute.xlu0 %v3400
        %3402 = vperm.xlu0 %3401, %v3379
        %v3403 = vpop.permute.xlu0 %3402
        %v3404 = vlaneseq
        %v3405 = vshrl.u32 %v3404, 7
        %v3406 = vadd.s32 %v3405, 32
        %3407 = vset.pattern.permute.xlu0 %v3406
        %3408 = vperm.xlu0 %3407, %v3379
        %v3409 = vpop.permute.xlu0 %3408
        %v3410 = vlaneseq
        %v3411 = vshrl.u32 %v3410, 7
        %v3412 = vadd.s32 %v3411, 40
        %3413 = vset.pattern.permute.xlu0 %v3412
        %3414 = vperm.xlu0 %3413, %v3379
        %v3415 = vpop.permute.xlu0 %3414
        %v3416 = vlaneseq
        %v3417 = vshrl.u32 %v3416, 7
        %v3418 = vadd.s32 %v3417, 48
        %3419 = vset.pattern.permute.xlu0 %v3418
        %3420 = vperm.xlu0 %3419, %v3379
        %v3421 = vpop.permute.xlu0 %3420
        %v3422 = vlaneseq
        %v3423 = vshrl.u32 %v3422, 7
        %v3424 = vadd.s32 %v3423, 56
        %3425 = vset.pattern.permute.xlu0 %v3424
        %3426 = vperm.xlu0 %3425, %v3379
        %v3427 = vpop.permute.xlu0 %3426
        %v3428 = vlaneseq
        %v3429 = vshrl.u32 %v3428, 7
        %v3430 = vadd.s32 %v3429, 64
        %3431 = vset.pattern.permute.xlu0 %v3430
        %3432 = vperm.xlu0 %3431, %v3379
        %v3433 = vpop.permute.xlu0 %3432
        %v3434 = vlaneseq
        %v3435 = vshrl.u32 %v3434, 7
        %v3436 = vadd.s32 %v3435, 72
        %3437 = vset.pattern.permute.xlu0 %v3436
        %3438 = vperm.xlu0 %3437, %v3379
        %v3439 = vpop.permute.xlu0 %3438
        %v3440 = vlaneseq
        %v3441 = vshrl.u32 %v3440, 7
        %v3442 = vadd.s32 %v3441, 80
        %3443 = vset.pattern.permute.xlu0 %v3442
        %3444 = vperm.xlu0 %3443, %v3379
        %v3445 = vpop.permute.xlu0 %3444
        %v3446 = vlaneseq
        %v3447 = vshrl.u32 %v3446, 7
        %v3448 = vadd.s32 %v3447, 88
        %3449 = vset.pattern.permute.xlu0 %v3448
        %3450 = vperm.xlu0 %3449, %v3379
        %v3451 = vpop.permute.xlu0 %3450
        %v3452 = vlaneseq
        %v3453 = vshrl.u32 %v3452, 7
        %v3454 = vadd.s32 %v3453, 96
        %3455 = vset.pattern.permute.xlu0 %v3454
        %3456 = vperm.xlu0 %3455, %v3379
        %v3457 = vpop.permute.xlu0 %3456
        %v3458 = vlaneseq
        %v3459 = vshrl.u32 %v3458, 7
        %v3460 = vadd.s32 %v3459, 104
        %3461 = vset.pattern.permute.xlu0 %v3460
        %3462 = vperm.xlu0 %3461, %v3379
        %v3463 = vpop.permute.xlu0 %3462
        %v3464 = vlaneseq
        %v3465 = vshrl.u32 %v3464, 7
        %v3466 = vadd.s32 %v3465, 112
        %3467 = vset.pattern.permute.xlu0 %v3466
        %3468 = vperm.xlu0 %3467, %v3379
        %v3469 = vpop.permute.xlu0 %3468
        %v3470 = vlaneseq
        %v3471 = vshrl.u32 %v3470, 7
        %v3472 = vadd.s32 %v3471, 120
        %3473 = vset.pattern.permute.xlu0 %v3472
        %3474 = vperm.xlu0 %3473, %v3379
        %v3475 = vpop.permute.xlu0 %3474
        %v3476 = vperm.slane %v1436, 2
        %v3477 = vlaneseq
        %v3478 = vshrl.u32 %v3477, 7
        %3480 = vset.pattern.permute.xlu0 %v3478
        %3481 = vperm.xlu0 %3480, %v3476
        %v3482 = vpop.permute.xlu0 %3481
        %v3483 = vlaneseq
        %v3484 = vshrl.u32 %v3483, 7
        %v3485 = vadd.s32 %v3484, 8
        %3486 = vset.pattern.permute.xlu0 %v3485
        %3487 = vperm.xlu0 %3486, %v3476
        %v3488 = vpop.permute.xlu0 %3487
        %v3489 = vlaneseq
        %v3490 = vshrl.u32 %v3489, 7
        %v3491 = vadd.s32 %v3490, 16
        %3492 = vset.pattern.permute.xlu0 %v3491
        %3493 = vperm.xlu0 %3492, %v3476
        %v3494 = vpop.permute.xlu0 %3493
        %v3495 = vlaneseq
        %v3496 = vshrl.u32 %v3495, 7
        %v3497 = vadd.s32 %v3496, 24
        %3498 = vset.pattern.permute.xlu0 %v3497
        %3499 = vperm.xlu0 %3498, %v3476
        %v3500 = vpop.permute.xlu0 %3499
        %v3501 = vlaneseq
        %v3502 = vshrl.u32 %v3501, 7
        %v3503 = vadd.s32 %v3502, 32
        %3504 = vset.pattern.permute.xlu0 %v3503
        %3505 = vperm.xlu0 %3504, %v3476
        %v3506 = vpop.permute.xlu0 %3505
        %v3507 = vlaneseq
        %v3508 = vshrl.u32 %v3507, 7
        %v3509 = vadd.s32 %v3508, 40
        %3510 = vset.pattern.permute.xlu0 %v3509
        %3511 = vperm.xlu0 %3510, %v3476
        %v3512 = vpop.permute.xlu0 %3511
        %v3513 = vlaneseq
        %v3514 = vshrl.u32 %v3513, 7
        %v3515 = vadd.s32 %v3514, 48
        %3516 = vset.pattern.permute.xlu0 %v3515
        %3517 = vperm.xlu0 %3516, %v3476
        %v3518 = vpop.permute.xlu0 %3517
        %v3519 = vlaneseq
        %v3520 = vshrl.u32 %v3519, 7
        %v3521 = vadd.s32 %v3520, 56
        %3522 = vset.pattern.permute.xlu0 %v3521
        %3523 = vperm.xlu0 %3522, %v3476
        %v3524 = vpop.permute.xlu0 %3523
        %v3525 = vlaneseq
        %v3526 = vshrl.u32 %v3525, 7
        %v3527 = vadd.s32 %v3526, 64
        %3528 = vset.pattern.permute.xlu0 %v3527
        %3529 = vperm.xlu0 %3528, %v3476
        %v3530 = vpop.permute.xlu0 %3529
        %v3531 = vlaneseq
        %v3532 = vshrl.u32 %v3531, 7
        %v3533 = vadd.s32 %v3532, 72
        %3534 = vset.pattern.permute.xlu0 %v3533
        %3535 = vperm.xlu0 %3534, %v3476
        %v3536 = vpop.permute.xlu0 %3535
        %v3537 = vlaneseq
        %v3538 = vshrl.u32 %v3537, 7
        %v3539 = vadd.s32 %v3538, 80
        %3540 = vset.pattern.permute.xlu0 %v3539
        %3541 = vperm.xlu0 %3540, %v3476
        %v3542 = vpop.permute.xlu0 %3541
        %v3543 = vlaneseq
        %v3544 = vshrl.u32 %v3543, 7
        %v3545 = vadd.s32 %v3544, 88
        %3546 = vset.pattern.permute.xlu0 %v3545
        %3547 = vperm.xlu0 %3546, %v3476
        %v3548 = vpop.permute.xlu0 %3547
        %v3549 = vlaneseq
        %v3550 = vshrl.u32 %v3549, 7
        %v3551 = vadd.s32 %v3550, 96
        %3552 = vset.pattern.permute.xlu0 %v3551
        %3553 = vperm.xlu0 %3552, %v3476
        %v3554 = vpop.permute.xlu0 %3553
        %v3555 = vlaneseq
        %v3556 = vshrl.u32 %v3555, 7
        %v3557 = vadd.s32 %v3556, 104
        %3558 = vset.pattern.permute.xlu0 %v3557
        %3559 = vperm.xlu0 %3558, %v3476
        %v3560 = vpop.permute.xlu0 %3559
        %v3561 = vlaneseq
        %v3562 = vshrl.u32 %v3561, 7
        %v3563 = vadd.s32 %v3562, 112
        %3564 = vset.pattern.permute.xlu0 %v3563
        %3565 = vperm.xlu0 %3564, %v3476
        %v3566 = vpop.permute.xlu0 %3565
        %v3567 = vlaneseq
        %v3568 = vshrl.u32 %v3567, 7
        %v3569 = vadd.s32 %v3568, 120
        %3570 = vset.pattern.permute.xlu0 %v3569
        %3571 = vperm.xlu0 %3570, %v3476
        %v3572 = vpop.permute.xlu0 %3571
        %v3573 = vperm.slane %v1435, 3
        %v3574 = vlaneseq
        %v3575 = vshrl.u32 %v3574, 7
        %3577 = vset.pattern.permute.xlu0 %v3575
        %3578 = vperm.xlu0 %3577, %v3573
        %v3579 = vpop.permute.xlu0 %3578
        %v3580 = vlaneseq
        %v3581 = vshrl.u32 %v3580, 7
        %v3582 = vadd.s32 %v3581, 8
        %3583 = vset.pattern.permute.xlu0 %v3582
        %3584 = vperm.xlu0 %3583, %v3573
        %v3585 = vpop.permute.xlu0 %3584
        %v3586 = vlaneseq
        %v3587 = vshrl.u32 %v3586, 7
        %v3588 = vadd.s32 %v3587, 16
        %3589 = vset.pattern.permute.xlu0 %v3588
        %3590 = vperm.xlu0 %3589, %v3573
        %v3591 = vpop.permute.xlu0 %3590
        %v3592 = vlaneseq
        %v3593 = vshrl.u32 %v3592, 7
        %v3594 = vadd.s32 %v3593, 24
        %3595 = vset.pattern.permute.xlu0 %v3594
        %3596 = vperm.xlu0 %3595, %v3573
        %v3597 = vpop.permute.xlu0 %3596
        %v3598 = vlaneseq
        %v3599 = vshrl.u32 %v3598, 7
        %v3600 = vadd.s32 %v3599, 32
        %3601 = vset.pattern.permute.xlu0 %v3600
        %3602 = vperm.xlu0 %3601, %v3573
        %v3603 = vpop.permute.xlu0 %3602
        %v3604 = vlaneseq
        %v3605 = vshrl.u32 %v3604, 7
        %v3606 = vadd.s32 %v3605, 40
        %3607 = vset.pattern.permute.xlu0 %v3606
        %3608 = vperm.xlu0 %3607, %v3573
        %v3609 = vpop.permute.xlu0 %3608
        %v3610 = vlaneseq
        %v3611 = vshrl.u32 %v3610, 7
        %v3612 = vadd.s32 %v3611, 48
        %3613 = vset.pattern.permute.xlu0 %v3612
        %3614 = vperm.xlu0 %3613, %v3573
        %v3615 = vpop.permute.xlu0 %3614
        %v3616 = vlaneseq
        %v3617 = vshrl.u32 %v3616, 7
        %v3618 = vadd.s32 %v3617, 56
        %3619 = vset.pattern.permute.xlu0 %v3618
        %3620 = vperm.xlu0 %3619, %v3573
        %v3621 = vpop.permute.xlu0 %3620
        %v3622 = vlaneseq
        %v3623 = vshrl.u32 %v3622, 7
        %v3624 = vadd.s32 %v3623, 64
        %3625 = vset.pattern.permute.xlu0 %v3624
        %3626 = vperm.xlu0 %3625, %v3573
        %v3627 = vpop.permute.xlu0 %3626
        %v3628 = vlaneseq
        %v3629 = vshrl.u32 %v3628, 7
        %v3630 = vadd.s32 %v3629, 72
        %3631 = vset.pattern.permute.xlu0 %v3630
        %3632 = vperm.xlu0 %3631, %v3573
        %v3633 = vpop.permute.xlu0 %3632
        %v3634 = vlaneseq
        %v3635 = vshrl.u32 %v3634, 7
        %v3636 = vadd.s32 %v3635, 80
        %3637 = vset.pattern.permute.xlu0 %v3636
        %3638 = vperm.xlu0 %3637, %v3573
        %v3639 = vpop.permute.xlu0 %3638
        %v3640 = vlaneseq
        %v3641 = vshrl.u32 %v3640, 7
        %v3642 = vadd.s32 %v3641, 88
        %3643 = vset.pattern.permute.xlu0 %v3642
        %3644 = vperm.xlu0 %3643, %v3573
        %v3645 = vpop.permute.xlu0 %3644
        %v3646 = vlaneseq
        %v3647 = vshrl.u32 %v3646, 7
        %v3648 = vadd.s32 %v3647, 96
        %3649 = vset.pattern.permute.xlu0 %v3648
        %3650 = vperm.xlu0 %3649, %v3573
        %v3651 = vpop.permute.xlu0 %3650
        %v3652 = vlaneseq
        %v3653 = vshrl.u32 %v3652, 7
        %v3654 = vadd.s32 %v3653, 104
        %3655 = vset.pattern.permute.xlu0 %v3654
        %3656 = vperm.xlu0 %3655, %v3573
        %v3657 = vpop.permute.xlu0 %3656
        %v3658 = vlaneseq
        %v3659 = vshrl.u32 %v3658, 7
        %v3660 = vadd.s32 %v3659, 112
        %3661 = vset.pattern.permute.xlu0 %v3660
        %3662 = vperm.xlu0 %3661, %v3573
        %v3663 = vpop.permute.xlu0 %3662
        %v3664 = vlaneseq
        %v3665 = vshrl.u32 %v3664, 7
        %v3666 = vadd.s32 %v3665, 120
        %3667 = vset.pattern.permute.xlu0 %v3666
        %3668 = vperm.xlu0 %3667, %v3573
        %v3669 = vpop.permute.xlu0 %3668
        %v3670 = vperm.slane %v1436, 3
        %v3671 = vlaneseq
        %v3672 = vshrl.u32 %v3671, 7
        %3674 = vset.pattern.permute.xlu0 %v3672
        %3675 = vperm.xlu0 %3674, %v3670
        %v3676 = vpop.permute.xlu0 %3675
        %v3677 = vlaneseq
        %v3678 = vshrl.u32 %v3677, 7
        %v3679 = vadd.s32 %v3678, 8
        %3680 = vset.pattern.permute.xlu0 %v3679
        %3681 = vperm.xlu0 %3680, %v3670
        %v3682 = vpop.permute.xlu0 %3681
        %v3683 = vlaneseq
        %v3684 = vshrl.u32 %v3683, 7
        %v3685 = vadd.s32 %v3684, 16
        %3686 = vset.pattern.permute.xlu0 %v3685
        %3687 = vperm.xlu0 %3686, %v3670
        %v3688 = vpop.permute.xlu0 %3687
        %v3689 = vlaneseq
        %v3690 = vshrl.u32 %v3689, 7
        %v3691 = vadd.s32 %v3690, 24
        %3692 = vset.pattern.permute.xlu0 %v3691
        %3693 = vperm.xlu0 %3692, %v3670
        %v3694 = vpop.permute.xlu0 %3693
        %v3695 = vlaneseq
        %v3696 = vshrl.u32 %v3695, 7
        %v3697 = vadd.s32 %v3696, 32
        %3698 = vset.pattern.permute.xlu0 %v3697
        %3699 = vperm.xlu0 %3698, %v3670
        %v3700 = vpop.permute.xlu0 %3699
        %v3701 = vlaneseq
        %v3702 = vshrl.u32 %v3701, 7
        %v3703 = vadd.s32 %v3702, 40
        %3704 = vset.pattern.permute.xlu0 %v3703
        %3705 = vperm.xlu0 %3704, %v3670
        %v3706 = vpop.permute.xlu0 %3705
        %v3707 = vlaneseq
        %v3708 = vshrl.u32 %v3707, 7
        %v3709 = vadd.s32 %v3708, 48
        %3710 = vset.pattern.permute.xlu0 %v3709
        %3711 = vperm.xlu0 %3710, %v3670
        %v3712 = vpop.permute.xlu0 %3711
        %v3713 = vlaneseq
        %v3714 = vshrl.u32 %v3713, 7
        %v3715 = vadd.s32 %v3714, 56
        %3716 = vset.pattern.permute.xlu0 %v3715
        %3717 = vperm.xlu0 %3716, %v3670
        %v3718 = vpop.permute.xlu0 %3717
        %v3719 = vlaneseq
        %v3720 = vshrl.u32 %v3719, 7
        %v3721 = vadd.s32 %v3720, 64
        %3722 = vset.pattern.permute.xlu0 %v3721
        %3723 = vperm.xlu0 %3722, %v3670
        %v3724 = vpop.permute.xlu0 %3723
        %v3725 = vlaneseq
        %v3726 = vshrl.u32 %v3725, 7
        %v3727 = vadd.s32 %v3726, 72
        %3728 = vset.pattern.permute.xlu0 %v3727
        %3729 = vperm.xlu0 %3728, %v3670
        %v3730 = vpop.permute.xlu0 %3729
        %v3731 = vlaneseq
        %v3732 = vshrl.u32 %v3731, 7
        %v3733 = vadd.s32 %v3732, 80
        %3734 = vset.pattern.permute.xlu0 %v3733
        %3735 = vperm.xlu0 %3734, %v3670
        %v3736 = vpop.permute.xlu0 %3735
        %v3737 = vlaneseq
        %v3738 = vshrl.u32 %v3737, 7
        %v3739 = vadd.s32 %v3738, 88
        %3740 = vset.pattern.permute.xlu0 %v3739
        %3741 = vperm.xlu0 %3740, %v3670
        %v3742 = vpop.permute.xlu0 %3741
        %v3743 = vlaneseq
        %v3744 = vshrl.u32 %v3743, 7
        %v3745 = vadd.s32 %v3744, 96
        %3746 = vset.pattern.permute.xlu0 %v3745
        %3747 = vperm.xlu0 %3746, %v3670
        %v3748 = vpop.permute.xlu0 %3747
        %v3749 = vlaneseq
        %v3750 = vshrl.u32 %v3749, 7
        %v3751 = vadd.s32 %v3750, 104
        %3752 = vset.pattern.permute.xlu0 %v3751
        %3753 = vperm.xlu0 %3752, %v3670
        %v3754 = vpop.permute.xlu0 %3753
        %v3755 = vlaneseq
        %v3756 = vshrl.u32 %v3755, 7
        %v3757 = vadd.s32 %v3756, 112
        %3758 = vset.pattern.permute.xlu0 %v3757
        %3759 = vperm.xlu0 %3758, %v3670
        %v3760 = vpop.permute.xlu0 %3759
        %v3761 = vlaneseq
        %v3762 = vshrl.u32 %v3761, 7
        %v3763 = vadd.s32 %v3762, 120
        %3764 = vset.pattern.permute.xlu0 %v3763
        %3765 = vperm.xlu0 %3764, %v3670
        %v3766 = vpop.permute.xlu0 %3765
        %v3767 = vperm.slane %v1435, 4
        %v3768 = vlaneseq
        %v3769 = vshrl.u32 %v3768, 7
        %3771 = vset.pattern.permute.xlu0 %v3769
        %3772 = vperm.xlu0 %3771, %v3767
        %v3773 = vpop.permute.xlu0 %3772
        %v3774 = vlaneseq
        %v3775 = vshrl.u32 %v3774, 7
        %v3776 = vadd.s32 %v3775, 8
        %3777 = vset.pattern.permute.xlu0 %v3776
        %3778 = vperm.xlu0 %3777, %v3767
        %v3779 = vpop.permute.xlu0 %3778
        %v3780 = vlaneseq
        %v3781 = vshrl.u32 %v3780, 7
        %v3782 = vadd.s32 %v3781, 16
        %3783 = vset.pattern.permute.xlu0 %v3782
        %3784 = vperm.xlu0 %3783, %v3767
        %v3785 = vpop.permute.xlu0 %3784
        %v3786 = vlaneseq
        %v3787 = vshrl.u32 %v3786, 7
        %v3788 = vadd.s32 %v3787, 24
        %3789 = vset.pattern.permute.xlu0 %v3788
        %3790 = vperm.xlu0 %3789, %v3767
        %v3791 = vpop.permute.xlu0 %3790
        %v3792 = vlaneseq
        %v3793 = vshrl.u32 %v3792, 7
        %v3794 = vadd.s32 %v3793, 32
        %3795 = vset.pattern.permute.xlu0 %v3794
        %3796 = vperm.xlu0 %3795, %v3767
        %v3797 = vpop.permute.xlu0 %3796
        %v3798 = vlaneseq
        %v3799 = vshrl.u32 %v3798, 7
        %v3800 = vadd.s32 %v3799, 40
        %3801 = vset.pattern.permute.xlu0 %v3800
        %3802 = vperm.xlu0 %3801, %v3767
        %v3803 = vpop.permute.xlu0 %3802
        %v3804 = vlaneseq
        %v3805 = vshrl.u32 %v3804, 7
        %v3806 = vadd.s32 %v3805, 48
        %3807 = vset.pattern.permute.xlu0 %v3806
        %3808 = vperm.xlu0 %3807, %v3767
        %v3809 = vpop.permute.xlu0 %3808
        %v3810 = vlaneseq
        %v3811 = vshrl.u32 %v3810, 7
        %v3812 = vadd.s32 %v3811, 56
        %3813 = vset.pattern.permute.xlu0 %v3812
        %3814 = vperm.xlu0 %3813, %v3767
        %v3815 = vpop.permute.xlu0 %3814
        %v3816 = vlaneseq
        %v3817 = vshrl.u32 %v3816, 7
        %v3818 = vadd.s32 %v3817, 64
        %3819 = vset.pattern.permute.xlu0 %v3818
        %3820 = vperm.xlu0 %3819, %v3767
        %v3821 = vpop.permute.xlu0 %3820
        %v3822 = vlaneseq
        %v3823 = vshrl.u32 %v3822, 7
        %v3824 = vadd.s32 %v3823, 72
        %3825 = vset.pattern.permute.xlu0 %v3824
        %3826 = vperm.xlu0 %3825, %v3767
        %v3827 = vpop.permute.xlu0 %3826
        %v3828 = vlaneseq
        %v3829 = vshrl.u32 %v3828, 7
        %v3830 = vadd.s32 %v3829, 80
        %3831 = vset.pattern.permute.xlu0 %v3830
        %3832 = vperm.xlu0 %3831, %v3767
        %v3833 = vpop.permute.xlu0 %3832
        %v3834 = vlaneseq
        %v3835 = vshrl.u32 %v3834, 7
        %v3836 = vadd.s32 %v3835, 88
        %3837 = vset.pattern.permute.xlu0 %v3836
        %3838 = vperm.xlu0 %3837, %v3767
        %v3839 = vpop.permute.xlu0 %3838
        %v3840 = vlaneseq
        %v3841 = vshrl.u32 %v3840, 7
        %v3842 = vadd.s32 %v3841, 96
        %3843 = vset.pattern.permute.xlu0 %v3842
        %3844 = vperm.xlu0 %3843, %v3767
        %v3845 = vpop.permute.xlu0 %3844
        %v3846 = vlaneseq
        %v3847 = vshrl.u32 %v3846, 7
        %v3848 = vadd.s32 %v3847, 104
        %3849 = vset.pattern.permute.xlu0 %v3848
        %3850 = vperm.xlu0 %3849, %v3767
        %v3851 = vpop.permute.xlu0 %3850
        %v3852 = vlaneseq
        %v3853 = vshrl.u32 %v3852, 7
        %v3854 = vadd.s32 %v3853, 112
        %3855 = vset.pattern.permute.xlu0 %v3854
        %3856 = vperm.xlu0 %3855, %v3767
        %v3857 = vpop.permute.xlu0 %3856
        %v3858 = vlaneseq
        %v3859 = vshrl.u32 %v3858, 7
        %v3860 = vadd.s32 %v3859, 120
        %3861 = vset.pattern.permute.xlu0 %v3860
        %3862 = vperm.xlu0 %3861, %v3767
        %v3863 = vpop.permute.xlu0 %3862
        %v3864 = vperm.slane %v1436, 4
        %v3865 = vlaneseq
        %v3866 = vshrl.u32 %v3865, 7
        %3868 = vset.pattern.permute.xlu0 %v3866
        %3869 = vperm.xlu0 %3868, %v3864
        %v3870 = vpop.permute.xlu0 %3869
        %v3871 = vlaneseq
        %v3872 = vshrl.u32 %v3871, 7
        %v3873 = vadd.s32 %v3872, 8
        %3874 = vset.pattern.permute.xlu0 %v3873
        %3875 = vperm.xlu0 %3874, %v3864
        %v3876 = vpop.permute.xlu0 %3875
        %v3877 = vlaneseq
        %v3878 = vshrl.u32 %v3877, 7
        %v3879 = vadd.s32 %v3878, 16
        %3880 = vset.pattern.permute.xlu0 %v3879
        %3881 = vperm.xlu0 %3880, %v3864
        %v3882 = vpop.permute.xlu0 %3881
        %v3883 = vlaneseq
        %v3884 = vshrl.u32 %v3883, 7
        %v3885 = vadd.s32 %v3884, 24
        %3886 = vset.pattern.permute.xlu0 %v3885
        %3887 = vperm.xlu0 %3886, %v3864
        %v3888 = vpop.permute.xlu0 %3887
        %v3889 = vlaneseq
        %v3890 = vshrl.u32 %v3889, 7
        %v3891 = vadd.s32 %v3890, 32
        %3892 = vset.pattern.permute.xlu0 %v3891
        %3893 = vperm.xlu0 %3892, %v3864
        %v3894 = vpop.permute.xlu0 %3893
        %v3895 = vlaneseq
        %v3896 = vshrl.u32 %v3895, 7
        %v3897 = vadd.s32 %v3896, 40
        %3898 = vset.pattern.permute.xlu0 %v3897
        %3899 = vperm.xlu0 %3898, %v3864
        %v3900 = vpop.permute.xlu0 %3899
        %v3901 = vlaneseq
        %v3902 = vshrl.u32 %v3901, 7
        %v3903 = vadd.s32 %v3902, 48
        %3904 = vset.pattern.permute.xlu0 %v3903
        %3905 = vperm.xlu0 %3904, %v3864
        %v3906 = vpop.permute.xlu0 %3905
        %v3907 = vlaneseq
        %v3908 = vshrl.u32 %v3907, 7
        %v3909 = vadd.s32 %v3908, 56
        %3910 = vset.pattern.permute.xlu0 %v3909
        %3911 = vperm.xlu0 %3910, %v3864
        %v3912 = vpop.permute.xlu0 %3911
        %v3913 = vlaneseq
        %v3914 = vshrl.u32 %v3913, 7
        %v3915 = vadd.s32 %v3914, 64
        %3916 = vset.pattern.permute.xlu0 %v3915
        %3917 = vperm.xlu0 %3916, %v3864
        %v3918 = vpop.permute.xlu0 %3917
        %v3919 = vlaneseq
        %v3920 = vshrl.u32 %v3919, 7
        %v3921 = vadd.s32 %v3920, 72
        %3922 = vset.pattern.permute.xlu0 %v3921
        %3923 = vperm.xlu0 %3922, %v3864
        %v3924 = vpop.permute.xlu0 %3923
        %v3925 = vlaneseq
        %v3926 = vshrl.u32 %v3925, 7
        %v3927 = vadd.s32 %v3926, 80
        %3928 = vset.pattern.permute.xlu0 %v3927
        %3929 = vperm.xlu0 %3928, %v3864
        %v3930 = vpop.permute.xlu0 %3929
        %v3931 = vlaneseq
        %v3932 = vshrl.u32 %v3931, 7
        %v3933 = vadd.s32 %v3932, 88
        %3934 = vset.pattern.permute.xlu0 %v3933
        %3935 = vperm.xlu0 %3934, %v3864
        %v3936 = vpop.permute.xlu0 %3935
        %v3937 = vlaneseq
        %v3938 = vshrl.u32 %v3937, 7
        %v3939 = vadd.s32 %v3938, 96
        %3940 = vset.pattern.permute.xlu0 %v3939
        %3941 = vperm.xlu0 %3940, %v3864
        %v3942 = vpop.permute.xlu0 %3941
        %v3943 = vlaneseq
        %v3944 = vshrl.u32 %v3943, 7
        %v3945 = vadd.s32 %v3944, 104
        %3946 = vset.pattern.permute.xlu0 %v3945
        %3947 = vperm.xlu0 %3946, %v3864
        %v3948 = vpop.permute.xlu0 %3947
        %v3949 = vlaneseq
        %v3950 = vshrl.u32 %v3949, 7
        %v3951 = vadd.s32 %v3950, 112
        %3952 = vset.pattern.permute.xlu0 %v3951
        %3953 = vperm.xlu0 %3952, %v3864
        %v3954 = vpop.permute.xlu0 %3953
        %v3955 = vlaneseq
        %v3956 = vshrl.u32 %v3955, 7
        %v3957 = vadd.s32 %v3956, 120
        %3958 = vset.pattern.permute.xlu0 %v3957
        %3959 = vperm.xlu0 %3958, %v3864
        %v3960 = vpop.permute.xlu0 %3959
        %v3961 = vperm.slane %v1435, 5
        %v3962 = vlaneseq
        %v3963 = vshrl.u32 %v3962, 7
        %3965 = vset.pattern.permute.xlu0 %v3963
        %3966 = vperm.xlu0 %3965, %v3961
        %v3967 = vpop.permute.xlu0 %3966
        %v3968 = vlaneseq
        %v3969 = vshrl.u32 %v3968, 7
        %v3970 = vadd.s32 %v3969, 8
        %3971 = vset.pattern.permute.xlu0 %v3970
        %3972 = vperm.xlu0 %3971, %v3961
        %v3973 = vpop.permute.xlu0 %3972
        %v3974 = vlaneseq
        %v3975 = vshrl.u32 %v3974, 7
        %v3976 = vadd.s32 %v3975, 16
        %3977 = vset.pattern.permute.xlu0 %v3976
        %3978 = vperm.xlu0 %3977, %v3961
        %v3979 = vpop.permute.xlu0 %3978
        %v3980 = vlaneseq
        %v3981 = vshrl.u32 %v3980, 7
        %v3982 = vadd.s32 %v3981, 24
        %3983 = vset.pattern.permute.xlu0 %v3982
        %3984 = vperm.xlu0 %3983, %v3961
        %v3985 = vpop.permute.xlu0 %3984
        %v3986 = vlaneseq
        %v3987 = vshrl.u32 %v3986, 7
        %v3988 = vadd.s32 %v3987, 32
        %3989 = vset.pattern.permute.xlu0 %v3988
        %3990 = vperm.xlu0 %3989, %v3961
        %v3991 = vpop.permute.xlu0 %3990
        %v3992 = vlaneseq
        %v3993 = vshrl.u32 %v3992, 7
        %v3994 = vadd.s32 %v3993, 40
        %3995 = vset.pattern.permute.xlu0 %v3994
        %3996 = vperm.xlu0 %3995, %v3961
        %v3997 = vpop.permute.xlu0 %3996
        %v3998 = vlaneseq
        %v3999 = vshrl.u32 %v3998, 7
        %v4000 = vadd.s32 %v3999, 48
        %4001 = vset.pattern.permute.xlu0 %v4000
        %4002 = vperm.xlu0 %4001, %v3961
        %v4003 = vpop.permute.xlu0 %4002
        %v4004 = vlaneseq
        %v4005 = vshrl.u32 %v4004, 7
        %v4006 = vadd.s32 %v4005, 56
        %4007 = vset.pattern.permute.xlu0 %v4006
        %4008 = vperm.xlu0 %4007, %v3961
        %v4009 = vpop.permute.xlu0 %4008
        %v4010 = vlaneseq
        %v4011 = vshrl.u32 %v4010, 7
        %v4012 = vadd.s32 %v4011, 64
        %4013 = vset.pattern.permute.xlu0 %v4012
        %4014 = vperm.xlu0 %4013, %v3961
        %v4015 = vpop.permute.xlu0 %4014
        %v4016 = vlaneseq
        %v4017 = vshrl.u32 %v4016, 7
        %v4018 = vadd.s32 %v4017, 72
        %4019 = vset.pattern.permute.xlu0 %v4018
        %4020 = vperm.xlu0 %4019, %v3961
        %v4021 = vpop.permute.xlu0 %4020
        %v4022 = vlaneseq
        %v4023 = vshrl.u32 %v4022, 7
        %v4024 = vadd.s32 %v4023, 80
        %4025 = vset.pattern.permute.xlu0 %v4024
        %4026 = vperm.xlu0 %4025, %v3961
        %v4027 = vpop.permute.xlu0 %4026
        %v4028 = vlaneseq
        %v4029 = vshrl.u32 %v4028, 7
        %v4030 = vadd.s32 %v4029, 88
        %4031 = vset.pattern.permute.xlu0 %v4030
        %4032 = vperm.xlu0 %4031, %v3961
        %v4033 = vpop.permute.xlu0 %4032
        %v4034 = vlaneseq
        %v4035 = vshrl.u32 %v4034, 7
        %v4036 = vadd.s32 %v4035, 96
        %4037 = vset.pattern.permute.xlu0 %v4036
        %4038 = vperm.xlu0 %4037, %v3961
        %v4039 = vpop.permute.xlu0 %4038
        %v4040 = vlaneseq
        %v4041 = vshrl.u32 %v4040, 7
        %v4042 = vadd.s32 %v4041, 104
        %4043 = vset.pattern.permute.xlu0 %v4042
        %4044 = vperm.xlu0 %4043, %v3961
        %v4045 = vpop.permute.xlu0 %4044
        %v4046 = vlaneseq
        %v4047 = vshrl.u32 %v4046, 7
        %v4048 = vadd.s32 %v4047, 112
        %4049 = vset.pattern.permute.xlu0 %v4048
        %4050 = vperm.xlu0 %4049, %v3961
        %v4051 = vpop.permute.xlu0 %4050
        %v4052 = vlaneseq
        %v4053 = vshrl.u32 %v4052, 7
        %v4054 = vadd.s32 %v4053, 120
        %4055 = vset.pattern.permute.xlu0 %v4054
        %4056 = vperm.xlu0 %4055, %v3961
        %v4057 = vpop.permute.xlu0 %4056
        %v4058 = vperm.slane %v1436, 5
        %v4059 = vlaneseq
        %v4060 = vshrl.u32 %v4059, 7
        %4062 = vset.pattern.permute.xlu0 %v4060
        %4063 = vperm.xlu0 %4062, %v4058
        %v4064 = vpop.permute.xlu0 %4063
        %v4065 = vlaneseq
        %v4066 = vshrl.u32 %v4065, 7
        %v4067 = vadd.s32 %v4066, 8
        %4068 = vset.pattern.permute.xlu0 %v4067
        %4069 = vperm.xlu0 %4068, %v4058
        %v4070 = vpop.permute.xlu0 %4069
        %v4071 = vlaneseq
        %v4072 = vshrl.u32 %v4071, 7
        %v4073 = vadd.s32 %v4072, 16
        %4074 = vset.pattern.permute.xlu0 %v4073
        %4075 = vperm.xlu0 %4074, %v4058
        %v4076 = vpop.permute.xlu0 %4075
        %v4077 = vlaneseq
        %v4078 = vshrl.u32 %v4077, 7
        %v4079 = vadd.s32 %v4078, 24
        %4080 = vset.pattern.permute.xlu0 %v4079
        %4081 = vperm.xlu0 %4080, %v4058
        %v4082 = vpop.permute.xlu0 %4081
        %v4083 = vlaneseq
        %v4084 = vshrl.u32 %v4083, 7
        %v4085 = vadd.s32 %v4084, 32
        %4086 = vset.pattern.permute.xlu0 %v4085
        %4087 = vperm.xlu0 %4086, %v4058
        %v4088 = vpop.permute.xlu0 %4087
        %v4089 = vlaneseq
        %v4090 = vshrl.u32 %v4089, 7
        %v4091 = vadd.s32 %v4090, 40
        %4092 = vset.pattern.permute.xlu0 %v4091
        %4093 = vperm.xlu0 %4092, %v4058
        %v4094 = vpop.permute.xlu0 %4093
        %v4095 = vlaneseq
        %v4096 = vshrl.u32 %v4095, 7
        %v4097 = vadd.s32 %v4096, 48
        %4098 = vset.pattern.permute.xlu0 %v4097
        %4099 = vperm.xlu0 %4098, %v4058
        %v4100 = vpop.permute.xlu0 %4099
        %v4101 = vlaneseq
        %v4102 = vshrl.u32 %v4101, 7
        %v4103 = vadd.s32 %v4102, 56
        %4104 = vset.pattern.permute.xlu0 %v4103
        %4105 = vperm.xlu0 %4104, %v4058
        %v4106 = vpop.permute.xlu0 %4105
        %v4107 = vlaneseq
        %v4108 = vshrl.u32 %v4107, 7
        %v4109 = vadd.s32 %v4108, 64
        %4110 = vset.pattern.permute.xlu0 %v4109
        %4111 = vperm.xlu0 %4110, %v4058
        %v4112 = vpop.permute.xlu0 %4111
        %v4113 = vlaneseq
        %v4114 = vshrl.u32 %v4113, 7
        %v4115 = vadd.s32 %v4114, 72
        %4116 = vset.pattern.permute.xlu0 %v4115
        %4117 = vperm.xlu0 %4116, %v4058
        %v4118 = vpop.permute.xlu0 %4117
        %v4119 = vlaneseq
        %v4120 = vshrl.u32 %v4119, 7
        %v4121 = vadd.s32 %v4120, 80
        %4122 = vset.pattern.permute.xlu0 %v4121
        %4123 = vperm.xlu0 %4122, %v4058
        %v4124 = vpop.permute.xlu0 %4123
        %v4125 = vlaneseq
        %v4126 = vshrl.u32 %v4125, 7
        %v4127 = vadd.s32 %v4126, 88
        %4128 = vset.pattern.permute.xlu0 %v4127
        %4129 = vperm.xlu0 %4128, %v4058
        %v4130 = vpop.permute.xlu0 %4129
        %v4131 = vlaneseq
        %v4132 = vshrl.u32 %v4131, 7
        %v4133 = vadd.s32 %v4132, 96
        %4134 = vset.pattern.permute.xlu0 %v4133
        %4135 = vperm.xlu0 %4134, %v4058
        %v4136 = vpop.permute.xlu0 %4135
        %v4137 = vlaneseq
        %v4138 = vshrl.u32 %v4137, 7
        %v4139 = vadd.s32 %v4138, 104
        %4140 = vset.pattern.permute.xlu0 %v4139
        %4141 = vperm.xlu0 %4140, %v4058
        %v4142 = vpop.permute.xlu0 %4141
        %v4143 = vlaneseq
        %v4144 = vshrl.u32 %v4143, 7
        %v4145 = vadd.s32 %v4144, 112
        %4146 = vset.pattern.permute.xlu0 %v4145
        %4147 = vperm.xlu0 %4146, %v4058
        %v4148 = vpop.permute.xlu0 %4147
        %v4149 = vlaneseq
        %v4150 = vshrl.u32 %v4149, 7
        %v4151 = vadd.s32 %v4150, 120
        %4152 = vset.pattern.permute.xlu0 %v4151
        %4153 = vperm.xlu0 %4152, %v4058
        %v4154 = vpop.permute.xlu0 %4153
        %v4155 = vperm.slane %v1435, 6
        %v4156 = vlaneseq
        %v4157 = vshrl.u32 %v4156, 7
        %4159 = vset.pattern.permute.xlu0 %v4157
        %4160 = vperm.xlu0 %4159, %v4155
        %v4161 = vpop.permute.xlu0 %4160
        %v4162 = vlaneseq
        %v4163 = vshrl.u32 %v4162, 7
        %v4164 = vadd.s32 %v4163, 8
        %4165 = vset.pattern.permute.xlu0 %v4164
        %4166 = vperm.xlu0 %4165, %v4155
        %v4167 = vpop.permute.xlu0 %4166
        %v4168 = vlaneseq
        %v4169 = vshrl.u32 %v4168, 7
        %v4170 = vadd.s32 %v4169, 16
        %4171 = vset.pattern.permute.xlu0 %v4170
        %4172 = vperm.xlu0 %4171, %v4155
        %v4173 = vpop.permute.xlu0 %4172
        %v4174 = vlaneseq
        %v4175 = vshrl.u32 %v4174, 7
        %v4176 = vadd.s32 %v4175, 24
        %4177 = vset.pattern.permute.xlu0 %v4176
        %4178 = vperm.xlu0 %4177, %v4155
        %v4179 = vpop.permute.xlu0 %4178
        %v4180 = vlaneseq
        %v4181 = vshrl.u32 %v4180, 7
        %v4182 = vadd.s32 %v4181, 32
        %4183 = vset.pattern.permute.xlu0 %v4182
        %4184 = vperm.xlu0 %4183, %v4155
        %v4185 = vpop.permute.xlu0 %4184
        %v4186 = vlaneseq
        %v4187 = vshrl.u32 %v4186, 7
        %v4188 = vadd.s32 %v4187, 40
        %4189 = vset.pattern.permute.xlu0 %v4188
        %4190 = vperm.xlu0 %4189, %v4155
        %v4191 = vpop.permute.xlu0 %4190
        %v4192 = vlaneseq
        %v4193 = vshrl.u32 %v4192, 7
        %v4194 = vadd.s32 %v4193, 48
        %4195 = vset.pattern.permute.xlu0 %v4194
        %4196 = vperm.xlu0 %4195, %v4155
        %v4197 = vpop.permute.xlu0 %4196
        %v4198 = vlaneseq
        %v4199 = vshrl.u32 %v4198, 7
        %v4200 = vadd.s32 %v4199, 56
        %4201 = vset.pattern.permute.xlu0 %v4200
        %4202 = vperm.xlu0 %4201, %v4155
        %v4203 = vpop.permute.xlu0 %4202
        %v4204 = vlaneseq
        %v4205 = vshrl.u32 %v4204, 7
        %v4206 = vadd.s32 %v4205, 64
        %4207 = vset.pattern.permute.xlu0 %v4206
        %4208 = vperm.xlu0 %4207, %v4155
        %v4209 = vpop.permute.xlu0 %4208
        %v4210 = vlaneseq
        %v4211 = vshrl.u32 %v4210, 7
        %v4212 = vadd.s32 %v4211, 72
        %4213 = vset.pattern.permute.xlu0 %v4212
        %4214 = vperm.xlu0 %4213, %v4155
        %v4215 = vpop.permute.xlu0 %4214
        %v4216 = vlaneseq
        %v4217 = vshrl.u32 %v4216, 7
        %v4218 = vadd.s32 %v4217, 80
        %4219 = vset.pattern.permute.xlu0 %v4218
        %4220 = vperm.xlu0 %4219, %v4155
        %v4221 = vpop.permute.xlu0 %4220
        %v4222 = vlaneseq
        %v4223 = vshrl.u32 %v4222, 7
        %v4224 = vadd.s32 %v4223, 88
        %4225 = vset.pattern.permute.xlu0 %v4224
        %4226 = vperm.xlu0 %4225, %v4155
        %v4227 = vpop.permute.xlu0 %4226
        %v4228 = vlaneseq
        %v4229 = vshrl.u32 %v4228, 7
        %v4230 = vadd.s32 %v4229, 96
        %4231 = vset.pattern.permute.xlu0 %v4230
        %4232 = vperm.xlu0 %4231, %v4155
        %v4233 = vpop.permute.xlu0 %4232
        %v4234 = vlaneseq
        %v4235 = vshrl.u32 %v4234, 7
        %v4236 = vadd.s32 %v4235, 104
        %4237 = vset.pattern.permute.xlu0 %v4236
        %4238 = vperm.xlu0 %4237, %v4155
        %v4239 = vpop.permute.xlu0 %4238
        %v4240 = vlaneseq
        %v4241 = vshrl.u32 %v4240, 7
        %v4242 = vadd.s32 %v4241, 112
        %4243 = vset.pattern.permute.xlu0 %v4242
        %4244 = vperm.xlu0 %4243, %v4155
        %v4245 = vpop.permute.xlu0 %4244
        %v4246 = vlaneseq
        %v4247 = vshrl.u32 %v4246, 7
        %v4248 = vadd.s32 %v4247, 120
        %4249 = vset.pattern.permute.xlu0 %v4248
        %4250 = vperm.xlu0 %4249, %v4155
        %v4251 = vpop.permute.xlu0 %4250
        %v4252 = vperm.slane %v1436, 6
        %v4253 = vlaneseq
        %v4254 = vshrl.u32 %v4253, 7
        %4256 = vset.pattern.permute.xlu0 %v4254
        %4257 = vperm.xlu0 %4256, %v4252
        %v4258 = vpop.permute.xlu0 %4257
        %v4259 = vlaneseq
        %v4260 = vshrl.u32 %v4259, 7
        %v4261 = vadd.s32 %v4260, 8
        %4262 = vset.pattern.permute.xlu0 %v4261
        %4263 = vperm.xlu0 %4262, %v4252
        %v4264 = vpop.permute.xlu0 %4263
        %v4265 = vlaneseq
        %v4266 = vshrl.u32 %v4265, 7
        %v4267 = vadd.s32 %v4266, 16
        %4268 = vset.pattern.permute.xlu0 %v4267
        %4269 = vperm.xlu0 %4268, %v4252
        %v4270 = vpop.permute.xlu0 %4269
        %v4271 = vlaneseq
        %v4272 = vshrl.u32 %v4271, 7
        %v4273 = vadd.s32 %v4272, 24
        %4274 = vset.pattern.permute.xlu0 %v4273
        %4275 = vperm.xlu0 %4274, %v4252
        %v4276 = vpop.permute.xlu0 %4275
        %v4277 = vlaneseq
        %v4278 = vshrl.u32 %v4277, 7
        %v4279 = vadd.s32 %v4278, 32
        %4280 = vset.pattern.permute.xlu0 %v4279
        %4281 = vperm.xlu0 %4280, %v4252
        %v4282 = vpop.permute.xlu0 %4281
        %v4283 = vlaneseq
        %v4284 = vshrl.u32 %v4283, 7
        %v4285 = vadd.s32 %v4284, 40
        %4286 = vset.pattern.permute.xlu0 %v4285
        %4287 = vperm.xlu0 %4286, %v4252
        %v4288 = vpop.permute.xlu0 %4287
        %v4289 = vlaneseq
        %v4290 = vshrl.u32 %v4289, 7
        %v4291 = vadd.s32 %v4290, 48
        %4292 = vset.pattern.permute.xlu0 %v4291
        %4293 = vperm.xlu0 %4292, %v4252
        %v4294 = vpop.permute.xlu0 %4293
        %v4295 = vlaneseq
        %v4296 = vshrl.u32 %v4295, 7
        %v4297 = vadd.s32 %v4296, 56
        %4298 = vset.pattern.permute.xlu0 %v4297
        %4299 = vperm.xlu0 %4298, %v4252
        %v4300 = vpop.permute.xlu0 %4299
        %v4301 = vlaneseq
        %v4302 = vshrl.u32 %v4301, 7
        %v4303 = vadd.s32 %v4302, 64
        %4304 = vset.pattern.permute.xlu0 %v4303
        %4305 = vperm.xlu0 %4304, %v4252
        %v4306 = vpop.permute.xlu0 %4305
        %v4307 = vlaneseq
        %v4308 = vshrl.u32 %v4307, 7
        %v4309 = vadd.s32 %v4308, 72
        %4310 = vset.pattern.permute.xlu0 %v4309
        %4311 = vperm.xlu0 %4310, %v4252
        %v4312 = vpop.permute.xlu0 %4311
        %v4313 = vlaneseq
        %v4314 = vshrl.u32 %v4313, 7
        %v4315 = vadd.s32 %v4314, 80
        %4316 = vset.pattern.permute.xlu0 %v4315
        %4317 = vperm.xlu0 %4316, %v4252
        %v4318 = vpop.permute.xlu0 %4317
        %v4319 = vlaneseq
        %v4320 = vshrl.u32 %v4319, 7
        %v4321 = vadd.s32 %v4320, 88
        %4322 = vset.pattern.permute.xlu0 %v4321
        %4323 = vperm.xlu0 %4322, %v4252
        %v4324 = vpop.permute.xlu0 %4323
        %v4325 = vlaneseq
        %v4326 = vshrl.u32 %v4325, 7
        %v4327 = vadd.s32 %v4326, 96
        %4328 = vset.pattern.permute.xlu0 %v4327
        %4329 = vperm.xlu0 %4328, %v4252
        %v4330 = vpop.permute.xlu0 %4329
        %v4331 = vlaneseq
        %v4332 = vshrl.u32 %v4331, 7
        %v4333 = vadd.s32 %v4332, 104
        %4334 = vset.pattern.permute.xlu0 %v4333
        %4335 = vperm.xlu0 %4334, %v4252
        %v4336 = vpop.permute.xlu0 %4335
        %v4337 = vlaneseq
        %v4338 = vshrl.u32 %v4337, 7
        %v4339 = vadd.s32 %v4338, 112
        %4340 = vset.pattern.permute.xlu0 %v4339
        %4341 = vperm.xlu0 %4340, %v4252
        %v4342 = vpop.permute.xlu0 %4341
        %v4343 = vlaneseq
        %v4344 = vshrl.u32 %v4343, 7
        %v4345 = vadd.s32 %v4344, 120
        %4346 = vset.pattern.permute.xlu0 %v4345
        %4347 = vperm.xlu0 %4346, %v4252
        %v4348 = vpop.permute.xlu0 %4347
        %v4349 = vperm.slane %v1435, 7
        %v4350 = vlaneseq
        %v4351 = vshrl.u32 %v4350, 7
        %4353 = vset.pattern.permute.xlu0 %v4351
        %4354 = vperm.xlu0 %4353, %v4349
        %v4355 = vpop.permute.xlu0 %4354
        %v4356 = vlaneseq
        %v4357 = vshrl.u32 %v4356, 7
        %v4358 = vadd.s32 %v4357, 8
        %4359 = vset.pattern.permute.xlu0 %v4358
        %4360 = vperm.xlu0 %4359, %v4349
        %v4361 = vpop.permute.xlu0 %4360
        %v4362 = vlaneseq
        %v4363 = vshrl.u32 %v4362, 7
        %v4364 = vadd.s32 %v4363, 16
        %4365 = vset.pattern.permute.xlu0 %v4364
        %4366 = vperm.xlu0 %4365, %v4349
        %v4367 = vpop.permute.xlu0 %4366
        %v4368 = vlaneseq
        %v4369 = vshrl.u32 %v4368, 7
        %v4370 = vadd.s32 %v4369, 24
        %4371 = vset.pattern.permute.xlu0 %v4370
        %4372 = vperm.xlu0 %4371, %v4349
        %v4373 = vpop.permute.xlu0 %4372
        %v4374 = vlaneseq
        %v4375 = vshrl.u32 %v4374, 7
        %v4376 = vadd.s32 %v4375, 32
        %4377 = vset.pattern.permute.xlu0 %v4376
        %4378 = vperm.xlu0 %4377, %v4349
        %v4379 = vpop.permute.xlu0 %4378
        %v4380 = vlaneseq
        %v4381 = vshrl.u32 %v4380, 7
        %v4382 = vadd.s32 %v4381, 40
        %4383 = vset.pattern.permute.xlu0 %v4382
        %4384 = vperm.xlu0 %4383, %v4349
        %v4385 = vpop.permute.xlu0 %4384
        %v4386 = vlaneseq
        %v4387 = vshrl.u32 %v4386, 7
        %v4388 = vadd.s32 %v4387, 48
        %4389 = vset.pattern.permute.xlu0 %v4388
        %4390 = vperm.xlu0 %4389, %v4349
        %v4391 = vpop.permute.xlu0 %4390
        %v4392 = vlaneseq
        %v4393 = vshrl.u32 %v4392, 7
        %v4394 = vadd.s32 %v4393, 56
        %4395 = vset.pattern.permute.xlu0 %v4394
        %4396 = vperm.xlu0 %4395, %v4349
        %v4397 = vpop.permute.xlu0 %4396
        %v4398 = vlaneseq
        %v4399 = vshrl.u32 %v4398, 7
        %v4400 = vadd.s32 %v4399, 64
        %4401 = vset.pattern.permute.xlu0 %v4400
        %4402 = vperm.xlu0 %4401, %v4349
        %v4403 = vpop.permute.xlu0 %4402
        %v4404 = vlaneseq
        %v4405 = vshrl.u32 %v4404, 7
        %v4406 = vadd.s32 %v4405, 72
        %4407 = vset.pattern.permute.xlu0 %v4406
        %4408 = vperm.xlu0 %4407, %v4349
        %v4409 = vpop.permute.xlu0 %4408
        %v4410 = vlaneseq
        %v4411 = vshrl.u32 %v4410, 7
        %v4412 = vadd.s32 %v4411, 80
        %4413 = vset.pattern.permute.xlu0 %v4412
        %4414 = vperm.xlu0 %4413, %v4349
        %v4415 = vpop.permute.xlu0 %4414
        %v4416 = vlaneseq
        %v4417 = vshrl.u32 %v4416, 7
        %v4418 = vadd.s32 %v4417, 88
        %4419 = vset.pattern.permute.xlu0 %v4418
        %4420 = vperm.xlu0 %4419, %v4349
        %v4421 = vpop.permute.xlu0 %4420
        %v4422 = vlaneseq
        %v4423 = vshrl.u32 %v4422, 7
        %v4424 = vadd.s32 %v4423, 96
        %4425 = vset.pattern.permute.xlu0 %v4424
        %4426 = vperm.xlu0 %4425, %v4349
        %v4427 = vpop.permute.xlu0 %4426
        %v4428 = vlaneseq
        %v4429 = vshrl.u32 %v4428, 7
        %v4430 = vadd.s32 %v4429, 104
        %4431 = vset.pattern.permute.xlu0 %v4430
        %4432 = vperm.xlu0 %4431, %v4349
        %v4433 = vpop.permute.xlu0 %4432
        %v4434 = vlaneseq
        %v4435 = vshrl.u32 %v4434, 7
        %v4436 = vadd.s32 %v4435, 112
        %4437 = vset.pattern.permute.xlu0 %v4436
        %4438 = vperm.xlu0 %4437, %v4349
        %v4439 = vpop.permute.xlu0 %4438
        %v4440 = vlaneseq
        %v4441 = vshrl.u32 %v4440, 7
        %v4442 = vadd.s32 %v4441, 120
        %4443 = vset.pattern.permute.xlu0 %v4442
        %4444 = vperm.xlu0 %4443, %v4349
        %v4445 = vpop.permute.xlu0 %4444
        %v4446 = vperm.slane %v1436, 7
        %v4447 = vlaneseq
        %v4448 = vshrl.u32 %v4447, 7
        %4450 = vset.pattern.permute.xlu0 %v4448
        %4451 = vperm.xlu0 %4450, %v4446
        %v4452 = vpop.permute.xlu0 %4451
        %v4453 = vlaneseq
        %v4454 = vshrl.u32 %v4453, 7
        %v4455 = vadd.s32 %v4454, 8
        %4456 = vset.pattern.permute.xlu0 %v4455
        %4457 = vperm.xlu0 %4456, %v4446
        %v4458 = vpop.permute.xlu0 %4457
        %v4459 = vlaneseq
        %v4460 = vshrl.u32 %v4459, 7
        %v4461 = vadd.s32 %v4460, 16
        %4462 = vset.pattern.permute.xlu0 %v4461
        %4463 = vperm.xlu0 %4462, %v4446
        %v4464 = vpop.permute.xlu0 %4463
        %v4465 = vlaneseq
        %v4466 = vshrl.u32 %v4465, 7
        %v4467 = vadd.s32 %v4466, 24
        %4468 = vset.pattern.permute.xlu0 %v4467
        %4469 = vperm.xlu0 %4468, %v4446
        %v4470 = vpop.permute.xlu0 %4469
        %v4471 = vlaneseq
        %v4472 = vshrl.u32 %v4471, 7
        %v4473 = vadd.s32 %v4472, 32
        %4474 = vset.pattern.permute.xlu0 %v4473
        %4475 = vperm.xlu0 %4474, %v4446
        %v4476 = vpop.permute.xlu0 %4475
        %v4477 = vlaneseq
        %v4478 = vshrl.u32 %v4477, 7
        %v4479 = vadd.s32 %v4478, 40
        %4480 = vset.pattern.permute.xlu0 %v4479
        %4481 = vperm.xlu0 %4480, %v4446
        %v4482 = vpop.permute.xlu0 %4481
        %v4483 = vlaneseq
        %v4484 = vshrl.u32 %v4483, 7
        %v4485 = vadd.s32 %v4484, 48
        %4486 = vset.pattern.permute.xlu0 %v4485
        %4487 = vperm.xlu0 %4486, %v4446
        %v4488 = vpop.permute.xlu0 %4487
        %v4489 = vlaneseq
        %v4490 = vshrl.u32 %v4489, 7
        %v4491 = vadd.s32 %v4490, 56
        %4492 = vset.pattern.permute.xlu0 %v4491
        %4493 = vperm.xlu0 %4492, %v4446
        %v4494 = vpop.permute.xlu0 %4493
        %v4495 = vlaneseq
        %v4496 = vshrl.u32 %v4495, 7
        %v4497 = vadd.s32 %v4496, 64
        %4498 = vset.pattern.permute.xlu0 %v4497
        %4499 = vperm.xlu0 %4498, %v4446
        %v4500 = vpop.permute.xlu0 %4499
        %v4501 = vlaneseq
        %v4502 = vshrl.u32 %v4501, 7
        %v4503 = vadd.s32 %v4502, 72
        %4504 = vset.pattern.permute.xlu0 %v4503
        %4505 = vperm.xlu0 %4504, %v4446
        %v4506 = vpop.permute.xlu0 %4505
        %v4507 = vlaneseq
        %v4508 = vshrl.u32 %v4507, 7
        %v4509 = vadd.s32 %v4508, 80
        %4510 = vset.pattern.permute.xlu0 %v4509
        %4511 = vperm.xlu0 %4510, %v4446
        %v4512 = vpop.permute.xlu0 %4511
        %v4513 = vlaneseq
        %v4514 = vshrl.u32 %v4513, 7
        %v4515 = vadd.s32 %v4514, 88
        %4516 = vset.pattern.permute.xlu0 %v4515
        %4517 = vperm.xlu0 %4516, %v4446
        %v4518 = vpop.permute.xlu0 %4517
        %v4519 = vlaneseq
        %v4520 = vshrl.u32 %v4519, 7
        %v4521 = vadd.s32 %v4520, 96
        %4522 = vset.pattern.permute.xlu0 %v4521
        %4523 = vperm.xlu0 %4522, %v4446
        %v4524 = vpop.permute.xlu0 %4523
        %v4525 = vlaneseq
        %v4526 = vshrl.u32 %v4525, 7
        %v4527 = vadd.s32 %v4526, 104
        %4528 = vset.pattern.permute.xlu0 %v4527
        %4529 = vperm.xlu0 %4528, %v4446
        %v4530 = vpop.permute.xlu0 %4529
        %v4531 = vlaneseq
        %v4532 = vshrl.u32 %v4531, 7
        %v4533 = vadd.s32 %v4532, 112
        %4534 = vset.pattern.permute.xlu0 %v4533
        %4535 = vperm.xlu0 %4534, %v4446
        %v4536 = vpop.permute.xlu0 %4535
        %v4537 = vlaneseq
        %v4538 = vshrl.u32 %v4537, 7
        %v4539 = vadd.s32 %v4538, 120
        %4540 = vset.pattern.permute.xlu0 %v4539
        %4541 = vperm.xlu0 %4540, %v4446
        %v4542 = vpop.permute.xlu0 %4541
        %v4543 = vmul.f32 %v1445, %v921
        %v4544 = vmul.f32 %v1451, %v922
        %v4545 = vmul.f32 %v1457, %v923
        %v4546 = vmul.f32 %v1463, %v924
        %v4547 = vmul.f32 %v1469, %v925
        %v4548 = vmul.f32 %v1475, %v926
        %v4549 = vmul.f32 %v1481, %v927
        %v4550 = vmul.f32 %v1487, %v928
        %v4551 = vmul.f32 %v1493, %v929
        %v4552 = vmul.f32 %v1499, %v930
        %v4553 = vmul.f32 %v1505, %v931
        %v4554 = vmul.f32 %v1511, %v932
        %v4555 = vmul.f32 %v1517, %v933
        %v4556 = vmul.f32 %v1523, %v934
        %v4557 = vmul.f32 %v1529, %v935
        %v4558 = vmul.f32 %v1535, %v936
        %v4559 = vmul.f32 %v1542, %v937
        %v4560 = vmul.f32 %v1548, %v938
        %v4561 = vmul.f32 %v1554, %v939
        %v4562 = vmul.f32 %v1560, %v940
        %v4563 = vmul.f32 %v1566, %v941
        %v4564 = vmul.f32 %v1572, %v942
        %v4565 = vmul.f32 %v1578, %v943
        %v4566 = vmul.f32 %v1584, %v944
        %v4567 = vmul.f32 %v1590, %v945
        %v4568 = vmul.f32 %v1596, %v946
        %v4569 = vmul.f32 %v1602, %v947
        %v4570 = vmul.f32 %v1608, %v948
        %v4571 = vmul.f32 %v1614, %v949
        %v4572 = vmul.f32 %v1620, %v950
        %v4573 = vmul.f32 %v1626, %v951
        %v4574 = vmul.f32 %v1632, %v952
        %v4575 = vmul.f32 %v1639, %v953
        %v4576 = vmul.f32 %v1645, %v954
        %v4577 = vmul.f32 %v1651, %v955
        %v4578 = vmul.f32 %v1657, %v956
        %v4579 = vmul.f32 %v1663, %v957
        %v4580 = vmul.f32 %v1669, %v958
        %v4581 = vmul.f32 %v1675, %v959
        %v4582 = vmul.f32 %v1681, %v960
        %v4583 = vmul.f32 %v1687, %v961
        %v4584 = vmul.f32 %v1693, %v962
        %v4585 = vmul.f32 %v1699, %v963
        %v4586 = vmul.f32 %v1705, %v964
        %v4587 = vmul.f32 %v1711, %v965
        %v4588 = vmul.f32 %v1717, %v966
        %v4589 = vmul.f32 %v1723, %v967
        %v4590 = vmul.f32 %v1729, %v968
        %v4591 = vmul.f32 %v1736, %v969
        %v4592 = vmul.f32 %v1742, %v970
        %v4593 = vmul.f32 %v1748, %v971
        %v4594 = vmul.f32 %v1754, %v972
        %v4595 = vmul.f32 %v1760, %v973
        %v4596 = vmul.f32 %v1766, %v974
        %v4597 = vmul.f32 %v1772, %v975
        %v4598 = vmul.f32 %v1778, %v976
        %v4599 = vmul.f32 %v1784, %v977
        %v4600 = vmul.f32 %v1790, %v978
        %v4601 = vmul.f32 %v1796, %v979
        %v4602 = vmul.f32 %v1802, %v980
        %v4603 = vmul.f32 %v1808, %v981
        %v4604 = vmul.f32 %v1814, %v982
        %v4605 = vmul.f32 %v1820, %v983
        %v4606 = vmul.f32 %v1826, %v984
        %v4607 = vmul.f32 %v1833, %v985
        %v4608 = vmul.f32 %v1839, %v986
        %v4609 = vmul.f32 %v1845, %v987
        %v4610 = vmul.f32 %v1851, %v988
        %v4611 = vmul.f32 %v1857, %v989
        %v4612 = vmul.f32 %v1863, %v990
        %v4613 = vmul.f32 %v1869, %v991
        %v4614 = vmul.f32 %v1875, %v992
        %v4615 = vmul.f32 %v1881, %v993
        %v4616 = vmul.f32 %v1887, %v994
        %v4617 = vmul.f32 %v1893, %v995
        %v4618 = vmul.f32 %v1899, %v996
        %v4619 = vmul.f32 %v1905, %v997
        %v4620 = vmul.f32 %v1911, %v998
        %v4621 = vmul.f32 %v1917, %v999
        %v4622 = vmul.f32 %v1923, %v1000
        %v4623 = vmul.f32 %v1930, %v1001
        %v4624 = vmul.f32 %v1936, %v1002
        %v4625 = vmul.f32 %v1942, %v1003
        %v4626 = vmul.f32 %v1948, %v1004
        %v4627 = vmul.f32 %v1954, %v1005
        %v4628 = vmul.f32 %v1960, %v1006
        %v4629 = vmul.f32 %v1966, %v1007
        %v4630 = vmul.f32 %v1972, %v1008
        %v4631 = vmul.f32 %v1978, %v1009
        %v4632 = vmul.f32 %v1984, %v1010
        %v4633 = vmul.f32 %v1990, %v1011
        %v4634 = vmul.f32 %v1996, %v1012
        %v4635 = vmul.f32 %v2002, %v1013
        %v4636 = vmul.f32 %v2008, %v1014
        %v4637 = vmul.f32 %v2014, %v1015
        %v4638 = vmul.f32 %v2020, %v1016
        %v4639 = vmul.f32 %v2027, %v1017
        %v4640 = vmul.f32 %v2033, %v1018
        %v4641 = vmul.f32 %v2039, %v1019
        %v4642 = vmul.f32 %v2045, %v1020
        %v4643 = vmul.f32 %v2051, %v1021
        %v4644 = vmul.f32 %v2057, %v1022
        %v4645 = vmul.f32 %v2063, %v1023
        %v4646 = vmul.f32 %v2069, %v1024
        %v4647 = vmul.f32 %v2075, %v1025
        %v4648 = vmul.f32 %v2081, %v1026
        %v4649 = vmul.f32 %v2087, %v1027
        %v4650 = vmul.f32 %v2093, %v1028
        %v4651 = vmul.f32 %v2099, %v1029
        %v4652 = vmul.f32 %v2105, %v1030
        %v4653 = vmul.f32 %v2111, %v1031
        %v4654 = vmul.f32 %v2117, %v1032
        %v4655 = vmul.f32 %v2124, %v1033
        %v4656 = vmul.f32 %v2130, %v1034
        %v4657 = vmul.f32 %v2136, %v1035
        %v4658 = vmul.f32 %v2142, %v1036
        %v4659 = vmul.f32 %v2148, %v1037
        %v4660 = vmul.f32 %v2154, %v1038
        %v4661 = vmul.f32 %v2160, %v1039
        %v4662 = vmul.f32 %v2166, %v1040
        %v4663 = vmul.f32 %v2172, %v1041
        %v4664 = vmul.f32 %v2178, %v1042
        %v4665 = vmul.f32 %v2184, %v1043
        %v4666 = vmul.f32 %v2190, %v1044
        %v4667 = vmul.f32 %v2196, %v1045
        %v4668 = vmul.f32 %v2202, %v1046
        %v4669 = vmul.f32 %v2208, %v1047
        %v4670 = vmul.f32 %v2214, %v1048
        %v4671 = vmul.f32 %v2221, %v1049
        %v4672 = vmul.f32 %v2227, %v1050
        %v4673 = vmul.f32 %v2233, %v1051
        %v4674 = vmul.f32 %v2239, %v1052
        %v4675 = vmul.f32 %v2245, %v1053
        %v4676 = vmul.f32 %v2251, %v1054
        %v4677 = vmul.f32 %v2257, %v1055
        %v4678 = vmul.f32 %v2263, %v1056
        %v4679 = vmul.f32 %v2269, %v1057
        %v4680 = vmul.f32 %v2275, %v1058
        %v4681 = vmul.f32 %v2281, %v1059
        %v4682 = vmul.f32 %v2287, %v1060
        %v4683 = vmul.f32 %v2293, %v1061
        %v4684 = vmul.f32 %v2299, %v1062
        %v4685 = vmul.f32 %v2305, %v1063
        %v4686 = vmul.f32 %v2311, %v1064
        %v4687 = vmul.f32 %v2318, %v1065
        %v4688 = vmul.f32 %v2324, %v1066
        %v4689 = vmul.f32 %v2330, %v1067
        %v4690 = vmul.f32 %v2336, %v1068
        %v4691 = vmul.f32 %v2342, %v1069
        %v4692 = vmul.f32 %v2348, %v1070
        %v4693 = vmul.f32 %v2354, %v1071
        %v4694 = vmul.f32 %v2360, %v1072
        %v4695 = vmul.f32 %v2366, %v1073
        %v4696 = vmul.f32 %v2372, %v1074
        %v4697 = vmul.f32 %v2378, %v1075
        %v4698 = vmul.f32 %v2384, %v1076
        %v4699 = vmul.f32 %v2390, %v1077
        %v4700 = vmul.f32 %v2396, %v1078
        %v4701 = vmul.f32 %v2402, %v1079
        %v4702 = vmul.f32 %v2408, %v1080
        %v4703 = vmul.f32 %v2415, %v1081
        %v4704 = vmul.f32 %v2421, %v1082
        %v4705 = vmul.f32 %v2427, %v1083
        %v4706 = vmul.f32 %v2433, %v1084
        %v4707 = vmul.f32 %v2439, %v1085
        %v4708 = vmul.f32 %v2445, %v1086
        %v4709 = vmul.f32 %v2451, %v1087
        %v4710 = vmul.f32 %v2457, %v1088
        %v4711 = vmul.f32 %v2463, %v1089
        %v4712 = vmul.f32 %v2469, %v1090
        %v4713 = vmul.f32 %v2475, %v1091
        %v4714 = vmul.f32 %v2481, %v1092
        %v4715 = vmul.f32 %v2487, %v1093
        %v4716 = vmul.f32 %v2493, %v1094
        %v4717 = vmul.f32 %v2499, %v1095
        %v4718 = vmul.f32 %v2505, %v1096
        %v4719 = vmul.f32 %v2512, %v1097
        %v4720 = vmul.f32 %v2518, %v1098
        %v4721 = vmul.f32 %v2524, %v1099
        %v4722 = vmul.f32 %v2530, %v1100
        %v4723 = vmul.f32 %v2536, %v1101
        %v4724 = vmul.f32 %v2542, %v1102
        %v4725 = vmul.f32 %v2548, %v1103
        %v4726 = vmul.f32 %v2554, %v1104
        %v4727 = vmul.f32 %v2560, %v1105
        %v4728 = vmul.f32 %v2566, %v1106
        %v4729 = vmul.f32 %v2572, %v1107
        %v4730 = vmul.f32 %v2578, %v1108
        %v4731 = vmul.f32 %v2584, %v1109
        %v4732 = vmul.f32 %v2590, %v1110
        %v4733 = vmul.f32 %v2596, %v1111
        %v4734 = vmul.f32 %v2602, %v1112
        %v4735 = vmul.f32 %v2609, %v1113
        %v4736 = vmul.f32 %v2615, %v1114
        %v4737 = vmul.f32 %v2621, %v1115
        %v4738 = vmul.f32 %v2627, %v1116
        %v4739 = vmul.f32 %v2633, %v1117
        %v4740 = vmul.f32 %v2639, %v1118
        %v4741 = vmul.f32 %v2645, %v1119
        %v4742 = vmul.f32 %v2651, %v1120
        %v4743 = vmul.f32 %v2657, %v1121
        %v4744 = vmul.f32 %v2663, %v1122
        %v4745 = vmul.f32 %v2669, %v1123
        %v4746 = vmul.f32 %v2675, %v1124
        %v4747 = vmul.f32 %v2681, %v1125
        %v4748 = vmul.f32 %v2687, %v1126
        %v4749 = vmul.f32 %v2693, %v1127
        %v4750 = vmul.f32 %v2699, %v1128
        %v4751 = vmul.f32 %v2706, %v1129
        %v4752 = vmul.f32 %v2712, %v1130
        %v4753 = vmul.f32 %v2718, %v1131
        %v4754 = vmul.f32 %v2724, %v1132
        %v4755 = vmul.f32 %v2730, %v1133
        %v4756 = vmul.f32 %v2736, %v1134
        %v4757 = vmul.f32 %v2742, %v1135
        %v4758 = vmul.f32 %v2748, %v1136
        %v4759 = vmul.f32 %v2754, %v1137
        %v4760 = vmul.f32 %v2760, %v1138
        %v4761 = vmul.f32 %v2766, %v1139
        %v4762 = vmul.f32 %v2772, %v1140
        %v4763 = vmul.f32 %v2778, %v1141
        %v4764 = vmul.f32 %v2784, %v1142
        %v4765 = vmul.f32 %v2790, %v1143
        %v4766 = vmul.f32 %v2796, %v1144
        %v4767 = vmul.f32 %v2803, %v1145
        %v4768 = vmul.f32 %v2809, %v1146
        %v4769 = vmul.f32 %v2815, %v1147
        %v4770 = vmul.f32 %v2821, %v1148
        %v4771 = vmul.f32 %v2827, %v1149
        %v4772 = vmul.f32 %v2833, %v1150
        %v4773 = vmul.f32 %v2839, %v1151
        %v4774 = vmul.f32 %v2845, %v1152
        %v4775 = vmul.f32 %v2851, %v1153
        %v4776 = vmul.f32 %v2857, %v1154
        %v4777 = vmul.f32 %v2863, %v1155
        %v4778 = vmul.f32 %v2869, %v1156
        %v4779 = vmul.f32 %v2875, %v1157
        %v4780 = vmul.f32 %v2881, %v1158
        %v4781 = vmul.f32 %v2887, %v1159
        %v4782 = vmul.f32 %v2893, %v1160
        %v4783 = vmul.f32 %v2900, %v1161
        %v4784 = vmul.f32 %v2906, %v1162
        %v4785 = vmul.f32 %v2912, %v1163
        %v4786 = vmul.f32 %v2918, %v1164
        %v4787 = vmul.f32 %v2924, %v1165
        %v4788 = vmul.f32 %v2930, %v1166
        %v4789 = vmul.f32 %v2936, %v1167
        %v4790 = vmul.f32 %v2942, %v1168
        %v4791 = vmul.f32 %v2948, %v1169
        %v4792 = vmul.f32 %v2954, %v1170
        %v4793 = vmul.f32 %v2960, %v1171
        %v4794 = vmul.f32 %v2966, %v1172
        %v4795 = vmul.f32 %v2972, %v1173
        %v4796 = vmul.f32 %v2978, %v1174
        %v4797 = vmul.f32 %v2984, %v1175
        %v4798 = vmul.f32 %v2990, %v1176
        %v4799 = vmul.f32 %v2997, %v1177
        %v4800 = vmul.f32 %v3003, %v1178
        %v4801 = vmul.f32 %v3009, %v1179
        %v4802 = vmul.f32 %v3015, %v1180
        %v4803 = vmul.f32 %v3021, %v1181
        %v4804 = vmul.f32 %v3027, %v1182
        %v4805 = vmul.f32 %v3033, %v1183
        %v4806 = vmul.f32 %v3039, %v1184
        %v4807 = vmul.f32 %v3045, %v1185
        %v4808 = vmul.f32 %v3051, %v1186
        %v4809 = vmul.f32 %v3057, %v1187
        %v4810 = vmul.f32 %v3063, %v1188
        %v4811 = vmul.f32 %v3069, %v1189
        %v4812 = vmul.f32 %v3075, %v1190
        %v4813 = vmul.f32 %v3081, %v1191
        %v4814 = vmul.f32 %v3087, %v1192
        %v4815 = vmul.f32 %v3094, %v1193
        %v4816 = vmul.f32 %v3100, %v1194
        %v4817 = vmul.f32 %v3106, %v1195
        %v4818 = vmul.f32 %v3112, %v1196
        %v4819 = vmul.f32 %v3118, %v1197
        %v4820 = vmul.f32 %v3124, %v1198
        %v4821 = vmul.f32 %v3130, %v1199
        %v4822 = vmul.f32 %v3136, %v1200
        %v4823 = vmul.f32 %v3142, %v1201
        %v4824 = vmul.f32 %v3148, %v1202
        %v4825 = vmul.f32 %v3154, %v1203
        %v4826 = vmul.f32 %v3160, %v1204
        %v4827 = vmul.f32 %v3166, %v1205
        %v4828 = vmul.f32 %v3172, %v1206
        %v4829 = vmul.f32 %v3178, %v1207
        %v4830 = vmul.f32 %v3184, %v1208
        %v4831 = vmul.f32 %v3191, %v1209
        %v4832 = vmul.f32 %v3197, %v1210
        %v4833 = vmul.f32 %v3203, %v1211
        %v4834 = vmul.f32 %v3209, %v1212
        %v4835 = vmul.f32 %v3215, %v1213
        %v4836 = vmul.f32 %v3221, %v1214
        %v4837 = vmul.f32 %v3227, %v1215
        %v4838 = vmul.f32 %v3233, %v1216
        %v4839 = vmul.f32 %v3239, %v1217
        %v4840 = vmul.f32 %v3245, %v1218
        %v4841 = vmul.f32 %v3251, %v1219
        %v4842 = vmul.f32 %v3257, %v1220
        %v4843 = vmul.f32 %v3263, %v1221
        %v4844 = vmul.f32 %v3269, %v1222
        %v4845 = vmul.f32 %v3275, %v1223
        %v4846 = vmul.f32 %v3281, %v1224
        %v4847 = vmul.f32 %v3288, %v1225
        %v4848 = vmul.f32 %v3294, %v1226
        %v4849 = vmul.f32 %v3300, %v1227
        %v4850 = vmul.f32 %v3306, %v1228
        %v4851 = vmul.f32 %v3312, %v1229
        %v4852 = vmul.f32 %v3318, %v1230
        %v4853 = vmul.f32 %v3324, %v1231
        %v4854 = vmul.f32 %v3330, %v1232
        %v4855 = vmul.f32 %v3336, %v1233
        %v4856 = vmul.f32 %v3342, %v1234
        %v4857 = vmul.f32 %v3348, %v1235
        %v4858 = vmul.f32 %v3354, %v1236
        %v4859 = vmul.f32 %v3360, %v1237
        %v4860 = vmul.f32 %v3366, %v1238
        %v4861 = vmul.f32 %v3372, %v1239
        %v4862 = vmul.f32 %v3378, %v1240
        %v4863 = vmul.f32 %v3385, %v1241
        %v4864 = vmul.f32 %v3391, %v1242
        %v4865 = vmul.f32 %v3397, %v1243
        %v4866 = vmul.f32 %v3403, %v1244
        %v4867 = vmul.f32 %v3409, %v1245
        %v4868 = vmul.f32 %v3415, %v1246
        %v4869 = vmul.f32 %v3421, %v1247
        %v4870 = vmul.f32 %v3427, %v1248
        %v4871 = vmul.f32 %v3433, %v1249
        %v4872 = vmul.f32 %v3439, %v1250
        %v4873 = vmul.f32 %v3445, %v1251
        %v4874 = vmul.f32 %v3451, %v1252
        %v4875 = vmul.f32 %v3457, %v1253
        %v4876 = vmul.f32 %v3463, %v1254
        %v4877 = vmul.f32 %v3469, %v1255
        %v4878 = vmul.f32 %v3475, %v1256
        %v4879 = vmul.f32 %v3482, %v1257
        %v4880 = vmul.f32 %v3488, %v1258
        %v4881 = vmul.f32 %v3494, %v1259
        %v4882 = vmul.f32 %v3500, %v1260
        %v4883 = vmul.f32 %v3506, %v1261
        %v4884 = vmul.f32 %v3512, %v1262
        %v4885 = vmul.f32 %v3518, %v1263
        %v4886 = vmul.f32 %v3524, %v1264
        %v4887 = vmul.f32 %v3530, %v1265
        %v4888 = vmul.f32 %v3536, %v1266
        %v4889 = vmul.f32 %v3542, %v1267
        %v4890 = vmul.f32 %v3548, %v1268
        %v4891 = vmul.f32 %v3554, %v1269
        %v4892 = vmul.f32 %v3560, %v1270
        %v4893 = vmul.f32 %v3566, %v1271
        %v4894 = vmul.f32 %v3572, %v1272
        %v4895 = vmul.f32 %v3579, %v1273
        %v4896 = vmul.f32 %v3585, %v1274
        %v4897 = vmul.f32 %v3591, %v1275
        %v4898 = vmul.f32 %v3597, %v1276
        %v4899 = vmul.f32 %v3603, %v1277
        %v4900 = vmul.f32 %v3609, %v1278
        %v4901 = vmul.f32 %v3615, %v1279
        %v4902 = vmul.f32 %v3621, %v1280
        %v4903 = vmul.f32 %v3627, %v1281
        %v4904 = vmul.f32 %v3633, %v1282
        %v4905 = vmul.f32 %v3639, %v1283
        %v4906 = vmul.f32 %v3645, %v1284
        %v4907 = vmul.f32 %v3651, %v1285
        %v4908 = vmul.f32 %v3657, %v1286
        %v4909 = vmul.f32 %v3663, %v1287
        %v4910 = vmul.f32 %v3669, %v1288
        %v4911 = vmul.f32 %v3676, %v1289
        %v4912 = vmul.f32 %v3682, %v1290
        %v4913 = vmul.f32 %v3688, %v1291
        %v4914 = vmul.f32 %v3694, %v1292
        %v4915 = vmul.f32 %v3700, %v1293
        %v4916 = vmul.f32 %v3706, %v1294
        %v4917 = vmul.f32 %v3712, %v1295
        %v4918 = vmul.f32 %v3718, %v1296
        %v4919 = vmul.f32 %v3724, %v1297
        %v4920 = vmul.f32 %v3730, %v1298
        %v4921 = vmul.f32 %v3736, %v1299
        %v4922 = vmul.f32 %v3742, %v1300
        %v4923 = vmul.f32 %v3748, %v1301
        %v4924 = vmul.f32 %v3754, %v1302
        %v4925 = vmul.f32 %v3760, %v1303
        %v4926 = vmul.f32 %v3766, %v1304
        %v4927 = vmul.f32 %v3773, %v1305
        %v4928 = vmul.f32 %v3779, %v1306
        %v4929 = vmul.f32 %v3785, %v1307
        %v4930 = vmul.f32 %v3791, %v1308
        %v4931 = vmul.f32 %v3797, %v1309
        %v4932 = vmul.f32 %v3803, %v1310
        %v4933 = vmul.f32 %v3809, %v1311
        %v4934 = vmul.f32 %v3815, %v1312
        %v4935 = vmul.f32 %v3821, %v1313
        %v4936 = vmul.f32 %v3827, %v1314
        %v4937 = vmul.f32 %v3833, %v1315
        %v4938 = vmul.f32 %v3839, %v1316
        %v4939 = vmul.f32 %v3845, %v1317
        %v4940 = vmul.f32 %v3851, %v1318
        %v4941 = vmul.f32 %v3857, %v1319
        %v4942 = vmul.f32 %v3863, %v1320
        %v4943 = vmul.f32 %v3870, %v1321
        %v4944 = vmul.f32 %v3876, %v1322
        %v4945 = vmul.f32 %v3882, %v1323
        %v4946 = vmul.f32 %v3888, %v1324
        %v4947 = vmul.f32 %v3894, %v1325
        %v4948 = vmul.f32 %v3900, %v1326
        %v4949 = vmul.f32 %v3906, %v1327
        %v4950 = vmul.f32 %v3912, %v1328
        %v4951 = vmul.f32 %v3918, %v1329
        %v4952 = vmul.f32 %v3924, %v1330
        %v4953 = vmul.f32 %v3930, %v1331
        %v4954 = vmul.f32 %v3936, %v1332
        %v4955 = vmul.f32 %v3942, %v1333
        %v4956 = vmul.f32 %v3948, %v1334
        %v4957 = vmul.f32 %v3954, %v1335
        %v4958 = vmul.f32 %v3960, %v1336
        %v4959 = vmul.f32 %v3967, %v1337
        %v4960 = vmul.f32 %v3973, %v1338
        %v4961 = vmul.f32 %v3979, %v1339
        %v4962 = vmul.f32 %v3985, %v1340
        %v4963 = vmul.f32 %v3991, %v1341
        %v4964 = vmul.f32 %v3997, %v1342
        %v4965 = vmul.f32 %v4003, %v1343
        %v4966 = vmul.f32 %v4009, %v1344
        %v4967 = vmul.f32 %v4015, %v1345
        %v4968 = vmul.f32 %v4021, %v1346
        %v4969 = vmul.f32 %v4027, %v1347
        %v4970 = vmul.f32 %v4033, %v1348
        %v4971 = vmul.f32 %v4039, %v1349
        %v4972 = vmul.f32 %v4045, %v1350
        %v4973 = vmul.f32 %v4051, %v1351
        %v4974 = vmul.f32 %v4057, %v1352
        %v4975 = vmul.f32 %v4064, %v1353
        %v4976 = vmul.f32 %v4070, %v1354
        %v4977 = vmul.f32 %v4076, %v1355
        %v4978 = vmul.f32 %v4082, %v1356
        %v4979 = vmul.f32 %v4088, %v1357
        %v4980 = vmul.f32 %v4094, %v1358
        %v4981 = vmul.f32 %v4100, %v1359
        %v4982 = vmul.f32 %v4106, %v1360
        %v4983 = vmul.f32 %v4112, %v1361
        %v4984 = vmul.f32 %v4118, %v1362
        %v4985 = vmul.f32 %v4124, %v1363
        %v4986 = vmul.f32 %v4130, %v1364
        %v4987 = vmul.f32 %v4136, %v1365
        %v4988 = vmul.f32 %v4142, %v1366
        %v4989 = vmul.f32 %v4148, %v1367
        %v4990 = vmul.f32 %v4154, %v1368
        %v4991 = vmul.f32 %v4161, %v1369
        %v4992 = vmul.f32 %v4167, %v1370
        %v4993 = vmul.f32 %v4173, %v1371
        %v4994 = vmul.f32 %v4179, %v1372
        %v4995 = vmul.f32 %v4185, %v1373
        %v4996 = vmul.f32 %v4191, %v1374
        %v4997 = vmul.f32 %v4197, %v1375
        %v4998 = vmul.f32 %v4203, %v1376
        %v4999 = vmul.f32 %v4209, %v1377
        %v5000 = vmul.f32 %v4215, %v1378
        %v5001 = vmul.f32 %v4221, %v1379
        %v5002 = vmul.f32 %v4227, %v1380
        %v5003 = vmul.f32 %v4233, %v1381
        %v5004 = vmul.f32 %v4239, %v1382
        %v5005 = vmul.f32 %v4245, %v1383
        %v5006 = vmul.f32 %v4251, %v1384
        %v5007 = vmul.f32 %v4258, %v1385
        %v5008 = vmul.f32 %v4264, %v1386
        %v5009 = vmul.f32 %v4270, %v1387
        %v5010 = vmul.f32 %v4276, %v1388
        %v5011 = vmul.f32 %v4282, %v1389
        %v5012 = vmul.f32 %v4288, %v1390
        %v5013 = vmul.f32 %v4294, %v1391
        %v5014 = vmul.f32 %v4300, %v1392
        %v5015 = vmul.f32 %v4306, %v1393
        %v5016 = vmul.f32 %v4312, %v1394
        %v5017 = vmul.f32 %v4318, %v1395
        %v5018 = vmul.f32 %v4324, %v1396
        %v5019 = vmul.f32 %v4330, %v1397
        %v5020 = vmul.f32 %v4336, %v1398
        %v5021 = vmul.f32 %v4342, %v1399
        %v5022 = vmul.f32 %v4348, %v1400
        %v5023 = vmul.f32 %v4355, %v1401
        %v5024 = vmul.f32 %v4361, %v1402
        %v5025 = vmul.f32 %v4367, %v1403
        %v5026 = vmul.f32 %v4373, %v1404
        %v5027 = vmul.f32 %v4379, %v1405
        %v5028 = vmul.f32 %v4385, %v1406
        %v5029 = vmul.f32 %v4391, %v1407
        %v5030 = vmul.f32 %v4397, %v1408
        %v5031 = vmul.f32 %v4403, %v1409
        %v5032 = vmul.f32 %v4409, %v1410
        %v5033 = vmul.f32 %v4415, %v1411
        %v5034 = vmul.f32 %v4421, %v1412
        %v5035 = vmul.f32 %v4427, %v1413
        %v5036 = vmul.f32 %v4433, %v1414
        %v5037 = vmul.f32 %v4439, %v1415
        %v5038 = vmul.f32 %v4445, %v1416
        %v5039 = vmul.f32 %v4452, %v1417
        %v5040 = vmul.f32 %v4458, %v1418
        %v5041 = vmul.f32 %v4464, %v1419
        %v5042 = vmul.f32 %v4470, %v1420
        %v5043 = vmul.f32 %v4476, %v1421
        %v5044 = vmul.f32 %v4482, %v1422
        %v5045 = vmul.f32 %v4488, %v1423
        %v5046 = vmul.f32 %v4494, %v1424
        %v5047 = vmul.f32 %v4500, %v1425
        %v5048 = vmul.f32 %v4506, %v1426
        %v5049 = vmul.f32 %v4512, %v1427
        %v5050 = vmul.f32 %v4518, %v1428
        %v5051 = vmul.f32 %v4524, %v1429
        %v5052 = vmul.f32 %v4530, %v1430
        %v5053 = vmul.f32 %v4536, %v1431
        %v5054 = vmul.f32 %v4542, %v1432
        %v5055 = vadd.f32 %v4543, %v4544
        %v5056 = vadd.f32 %v5055, %v4545
        %v5057 = vadd.f32 %v5056, %v4546
        %v5058 = vadd.f32 %v5057, %v4547
        %v5059 = vadd.f32 %v5058, %v4548
        %v5060 = vadd.f32 %v5059, %v4549
        %v5061 = vadd.f32 %v5060, %v4550
        %v5062 = vadd.f32 %v5061, %v4551
        %v5063 = vadd.f32 %v5062, %v4552
        %v5064 = vadd.f32 %v5063, %v4553
        %v5065 = vadd.f32 %v5064, %v4554
        %v5066 = vadd.f32 %v5065, %v4555
        %v5067 = vadd.f32 %v5066, %v4556
        %v5068 = vadd.f32 %v5067, %v4557
        %v5069 = vadd.f32 %v5068, %v4558
        %v5070 = vadd.f32 %v5069, %v4559
        %v5071 = vadd.f32 %v5070, %v4560
        %v5072 = vadd.f32 %v5071, %v4561
        %v5073 = vadd.f32 %v5072, %v4562
        %v5074 = vadd.f32 %v5073, %v4563
        %v5075 = vadd.f32 %v5074, %v4564
        %v5076 = vadd.f32 %v5075, %v4565
        %v5077 = vadd.f32 %v5076, %v4566
        %v5078 = vadd.f32 %v5077, %v4567
        %v5079 = vadd.f32 %v5078, %v4568
        %v5080 = vadd.f32 %v5079, %v4569
        %v5081 = vadd.f32 %v5080, %v4570
        %v5082 = vadd.f32 %v5081, %v4571
        %v5083 = vadd.f32 %v5082, %v4572
        %v5084 = vadd.f32 %v5083, %v4573
        %v5085 = vadd.f32 %v5084, %v4574
        %v5086 = vrot.slane %v5085, 4
        %v5087 = vadd.f32 %v5085, %v5086
        %v5088 = vrot.slane %v5087, 2
        %v5089 = vadd.f32 %v5087, %v5088
        %v5090 = vrot.slane %v5089, 1
        %v5091 = vadd.f32 %v5089, %v5090
        %v5092 = vadd.f32 %v4575, %v4576
        %v5093 = vadd.f32 %v5092, %v4577
        %v5094 = vadd.f32 %v5093, %v4578
        %v5095 = vadd.f32 %v5094, %v4579
        %v5096 = vadd.f32 %v5095, %v4580
        %v5097 = vadd.f32 %v5096, %v4581
        %v5098 = vadd.f32 %v5097, %v4582
        %v5099 = vadd.f32 %v5098, %v4583
        %v5100 = vadd.f32 %v5099, %v4584
        %v5101 = vadd.f32 %v5100, %v4585
        %v5102 = vadd.f32 %v5101, %v4586
        %v5103 = vadd.f32 %v5102, %v4587
        %v5104 = vadd.f32 %v5103, %v4588
        %v5105 = vadd.f32 %v5104, %v4589
        %v5106 = vadd.f32 %v5105, %v4590
        %v5107 = vadd.f32 %v5106, %v4591
        %v5108 = vadd.f32 %v5107, %v4592
        %v5109 = vadd.f32 %v5108, %v4593
        %v5110 = vadd.f32 %v5109, %v4594
        %v5111 = vadd.f32 %v5110, %v4595
        %v5112 = vadd.f32 %v5111, %v4596
        %v5113 = vadd.f32 %v5112, %v4597
        %v5114 = vadd.f32 %v5113, %v4598
        %v5115 = vadd.f32 %v5114, %v4599
        %v5116 = vadd.f32 %v5115, %v4600
        %v5117 = vadd.f32 %v5116, %v4601
        %v5118 = vadd.f32 %v5117, %v4602
        %v5119 = vadd.f32 %v5118, %v4603
        %v5120 = vadd.f32 %v5119, %v4604
        %v5121 = vadd.f32 %v5120, %v4605
        %v5122 = vadd.f32 %v5121, %v4606
        %v5123 = vrot.slane %v5122, 4
        %v5124 = vadd.f32 %v5122, %v5123
        %v5125 = vrot.slane %v5124, 2
        %v5126 = vadd.f32 %v5124, %v5125
        %v5127 = vrot.slane %v5126, 1
        %v5128 = vadd.f32 %v5126, %v5127
        %v5129 = vadd.f32 %v4607, %v4608
        %v5130 = vadd.f32 %v5129, %v4609
        %v5131 = vadd.f32 %v5130, %v4610
        %v5132 = vadd.f32 %v5131, %v4611
        %v5133 = vadd.f32 %v5132, %v4612
        %v5134 = vadd.f32 %v5133, %v4613
        %v5135 = vadd.f32 %v5134, %v4614
        %v5136 = vadd.f32 %v5135, %v4615
        %v5137 = vadd.f32 %v5136, %v4616
        %v5138 = vadd.f32 %v5137, %v4617
        %v5139 = vadd.f32 %v5138, %v4618
        %v5140 = vadd.f32 %v5139, %v4619
        %v5141 = vadd.f32 %v5140, %v4620
        %v5142 = vadd.f32 %v5141, %v4621
        %v5143 = vadd.f32 %v5142, %v4622
        %v5144 = vadd.f32 %v5143, %v4623
        %v5145 = vadd.f32 %v5144, %v4624
        %v5146 = vadd.f32 %v5145, %v4625
        %v5147 = vadd.f32 %v5146, %v4626
        %v5148 = vadd.f32 %v5147, %v4627
        %v5149 = vadd.f32 %v5148, %v4628
        %v5150 = vadd.f32 %v5149, %v4629
        %v5151 = vadd.f32 %v5150, %v4630
        %v5152 = vadd.f32 %v5151, %v4631
        %v5153 = vadd.f32 %v5152, %v4632
        %v5154 = vadd.f32 %v5153, %v4633
        %v5155 = vadd.f32 %v5154, %v4634
        %v5156 = vadd.f32 %v5155, %v4635
        %v5157 = vadd.f32 %v5156, %v4636
        %v5158 = vadd.f32 %v5157, %v4637
        %v5159 = vadd.f32 %v5158, %v4638
        %v5160 = vrot.slane %v5159, 4
        %v5161 = vadd.f32 %v5159, %v5160
        %v5162 = vrot.slane %v5161, 2
        %v5163 = vadd.f32 %v5161, %v5162
        %v5164 = vrot.slane %v5163, 1
        %v5165 = vadd.f32 %v5163, %v5164
        %v5166 = vadd.f32 %v4639, %v4640
        %v5167 = vadd.f32 %v5166, %v4641
        %v5168 = vadd.f32 %v5167, %v4642
        %v5169 = vadd.f32 %v5168, %v4643
        %v5170 = vadd.f32 %v5169, %v4644
        %v5171 = vadd.f32 %v5170, %v4645
        %v5172 = vadd.f32 %v5171, %v4646
        %v5173 = vadd.f32 %v5172, %v4647
        %v5174 = vadd.f32 %v5173, %v4648
        %v5175 = vadd.f32 %v5174, %v4649
        %v5176 = vadd.f32 %v5175, %v4650
        %v5177 = vadd.f32 %v5176, %v4651
        %v5178 = vadd.f32 %v5177, %v4652
        %v5179 = vadd.f32 %v5178, %v4653
        %v5180 = vadd.f32 %v5179, %v4654
        %v5181 = vadd.f32 %v5180, %v4655
        %v5182 = vadd.f32 %v5181, %v4656
        %v5183 = vadd.f32 %v5182, %v4657
        %v5184 = vadd.f32 %v5183, %v4658
        %v5185 = vadd.f32 %v5184, %v4659
        %v5186 = vadd.f32 %v5185, %v4660
        %v5187 = vadd.f32 %v5186, %v4661
        %v5188 = vadd.f32 %v5187, %v4662
        %v5189 = vadd.f32 %v5188, %v4663
        %v5190 = vadd.f32 %v5189, %v4664
        %v5191 = vadd.f32 %v5190, %v4665
        %v5192 = vadd.f32 %v5191, %v4666
        %v5193 = vadd.f32 %v5192, %v4667
        %v5194 = vadd.f32 %v5193, %v4668
        %v5195 = vadd.f32 %v5194, %v4669
        %v5196 = vadd.f32 %v5195, %v4670
        %v5197 = vrot.slane %v5196, 4
        %v5198 = vadd.f32 %v5196, %v5197
        %v5199 = vrot.slane %v5198, 2
        %v5200 = vadd.f32 %v5198, %v5199
        %v5201 = vrot.slane %v5200, 1
        %v5202 = vadd.f32 %v5200, %v5201
        %v5203 = vadd.f32 %v4671, %v4672
        %v5204 = vadd.f32 %v5203, %v4673
        %v5205 = vadd.f32 %v5204, %v4674
        %v5206 = vadd.f32 %v5205, %v4675
        %v5207 = vadd.f32 %v5206, %v4676
        %v5208 = vadd.f32 %v5207, %v4677
        %v5209 = vadd.f32 %v5208, %v4678
        %v5210 = vadd.f32 %v5209, %v4679
        %v5211 = vadd.f32 %v5210, %v4680
        %v5212 = vadd.f32 %v5211, %v4681
        %v5213 = vadd.f32 %v5212, %v4682
        %v5214 = vadd.f32 %v5213, %v4683
        %v5215 = vadd.f32 %v5214, %v4684
        %v5216 = vadd.f32 %v5215, %v4685
        %v5217 = vadd.f32 %v5216, %v4686
        %v5218 = vadd.f32 %v5217, %v4687
        %v5219 = vadd.f32 %v5218, %v4688
        %v5220 = vadd.f32 %v5219, %v4689
        %v5221 = vadd.f32 %v5220, %v4690
        %v5222 = vadd.f32 %v5221, %v4691
        %v5223 = vadd.f32 %v5222, %v4692
        %v5224 = vadd.f32 %v5223, %v4693
        %v5225 = vadd.f32 %v5224, %v4694
        %v5226 = vadd.f32 %v5225, %v4695
        %v5227 = vadd.f32 %v5226, %v4696
        %v5228 = vadd.f32 %v5227, %v4697
        %v5229 = vadd.f32 %v5228, %v4698
        %v5230 = vadd.f32 %v5229, %v4699
        %v5231 = vadd.f32 %v5230, %v4700
        %v5232 = vadd.f32 %v5231, %v4701
        %v5233 = vadd.f32 %v5232, %v4702
        %v5234 = vrot.slane %v5233, 4
        %v5235 = vadd.f32 %v5233, %v5234
        %v5236 = vrot.slane %v5235, 2
        %v5237 = vadd.f32 %v5235, %v5236
        %v5238 = vrot.slane %v5237, 1
        %v5239 = vadd.f32 %v5237, %v5238
        %v5240 = vadd.f32 %v4703, %v4704
        %v5241 = vadd.f32 %v5240, %v4705
        %v5242 = vadd.f32 %v5241, %v4706
        %v5243 = vadd.f32 %v5242, %v4707
        %v5244 = vadd.f32 %v5243, %v4708
        %v5245 = vadd.f32 %v5244, %v4709
        %v5246 = vadd.f32 %v5245, %v4710
        %v5247 = vadd.f32 %v5246, %v4711
        %v5248 = vadd.f32 %v5247, %v4712
        %v5249 = vadd.f32 %v5248, %v4713
        %v5250 = vadd.f32 %v5249, %v4714
        %v5251 = vadd.f32 %v5250, %v4715
        %v5252 = vadd.f32 %v5251, %v4716
        %v5253 = vadd.f32 %v5252, %v4717
        %v5254 = vadd.f32 %v5253, %v4718
        %v5255 = vadd.f32 %v5254, %v4719
        %v5256 = vadd.f32 %v5255, %v4720
        %v5257 = vadd.f32 %v5256, %v4721
        %v5258 = vadd.f32 %v5257, %v4722
        %v5259 = vadd.f32 %v5258, %v4723
        %v5260 = vadd.f32 %v5259, %v4724
        %v5261 = vadd.f32 %v5260, %v4725
        %v5262 = vadd.f32 %v5261, %v4726
        %v5263 = vadd.f32 %v5262, %v4727
        %v5264 = vadd.f32 %v5263, %v4728
        %v5265 = vadd.f32 %v5264, %v4729
        %v5266 = vadd.f32 %v5265, %v4730
        %v5267 = vadd.f32 %v5266, %v4731
        %v5268 = vadd.f32 %v5267, %v4732
        %v5269 = vadd.f32 %v5268, %v4733
        %v5270 = vadd.f32 %v5269, %v4734
        %v5271 = vrot.slane %v5270, 4
        %v5272 = vadd.f32 %v5270, %v5271
        %v5273 = vrot.slane %v5272, 2
        %v5274 = vadd.f32 %v5272, %v5273
        %v5275 = vrot.slane %v5274, 1
        %v5276 = vadd.f32 %v5274, %v5275
        %v5277 = vadd.f32 %v4735, %v4736
        %v5278 = vadd.f32 %v5277, %v4737
        %v5279 = vadd.f32 %v5278, %v4738
        %v5280 = vadd.f32 %v5279, %v4739
        %v5281 = vadd.f32 %v5280, %v4740
        %v5282 = vadd.f32 %v5281, %v4741
        %v5283 = vadd.f32 %v5282, %v4742
        %v5284 = vadd.f32 %v5283, %v4743
        %v5285 = vadd.f32 %v5284, %v4744
        %v5286 = vadd.f32 %v5285, %v4745
        %v5287 = vadd.f32 %v5286, %v4746
        %v5288 = vadd.f32 %v5287, %v4747
        %v5289 = vadd.f32 %v5288, %v4748
        %v5290 = vadd.f32 %v5289, %v4749
        %v5291 = vadd.f32 %v5290, %v4750
        %v5292 = vadd.f32 %v5291, %v4751
        %v5293 = vadd.f32 %v5292, %v4752
        %v5294 = vadd.f32 %v5293, %v4753
        %v5295 = vadd.f32 %v5294, %v4754
        %v5296 = vadd.f32 %v5295, %v4755
        %v5297 = vadd.f32 %v5296, %v4756
        %v5298 = vadd.f32 %v5297, %v4757
        %v5299 = vadd.f32 %v5298, %v4758
        %v5300 = vadd.f32 %v5299, %v4759
        %v5301 = vadd.f32 %v5300, %v4760
        %v5302 = vadd.f32 %v5301, %v4761
        %v5303 = vadd.f32 %v5302, %v4762
        %v5304 = vadd.f32 %v5303, %v4763
        %v5305 = vadd.f32 %v5304, %v4764
        %v5306 = vadd.f32 %v5305, %v4765
        %v5307 = vadd.f32 %v5306, %v4766
        %v5308 = vrot.slane %v5307, 4
        %v5309 = vadd.f32 %v5307, %v5308
        %v5310 = vrot.slane %v5309, 2
        %v5311 = vadd.f32 %v5309, %v5310
        %v5312 = vrot.slane %v5311, 1
        %v5313 = vadd.f32 %v5311, %v5312
        %v5314 = vadd.f32 %v4767, %v4768
        %v5315 = vadd.f32 %v5314, %v4769
        %v5316 = vadd.f32 %v5315, %v4770
        %v5317 = vadd.f32 %v5316, %v4771
        %v5318 = vadd.f32 %v5317, %v4772
        %v5319 = vadd.f32 %v5318, %v4773
        %v5320 = vadd.f32 %v5319, %v4774
        %v5321 = vadd.f32 %v5320, %v4775
        %v5322 = vadd.f32 %v5321, %v4776
        %v5323 = vadd.f32 %v5322, %v4777
        %v5324 = vadd.f32 %v5323, %v4778
        %v5325 = vadd.f32 %v5324, %v4779
        %v5326 = vadd.f32 %v5325, %v4780
        %v5327 = vadd.f32 %v5326, %v4781
        %v5328 = vadd.f32 %v5327, %v4782
        %v5329 = vadd.f32 %v5328, %v4783
        %v5330 = vadd.f32 %v5329, %v4784
        %v5331 = vadd.f32 %v5330, %v4785
        %v5332 = vadd.f32 %v5331, %v4786
        %v5333 = vadd.f32 %v5332, %v4787
        %v5334 = vadd.f32 %v5333, %v4788
        %v5335 = vadd.f32 %v5334, %v4789
        %v5336 = vadd.f32 %v5335, %v4790
        %v5337 = vadd.f32 %v5336, %v4791
        %v5338 = vadd.f32 %v5337, %v4792
        %v5339 = vadd.f32 %v5338, %v4793
        %v5340 = vadd.f32 %v5339, %v4794
        %v5341 = vadd.f32 %v5340, %v4795
        %v5342 = vadd.f32 %v5341, %v4796
        %v5343 = vadd.f32 %v5342, %v4797
        %v5344 = vadd.f32 %v5343, %v4798
        %v5345 = vrot.slane %v5344, 4
        %v5346 = vadd.f32 %v5344, %v5345
        %v5347 = vrot.slane %v5346, 2
        %v5348 = vadd.f32 %v5346, %v5347
        %v5349 = vrot.slane %v5348, 1
        %v5350 = vadd.f32 %v5348, %v5349
        %v5351 = vadd.f32 %v4799, %v4800
        %v5352 = vadd.f32 %v5351, %v4801
        %v5353 = vadd.f32 %v5352, %v4802
        %v5354 = vadd.f32 %v5353, %v4803
        %v5355 = vadd.f32 %v5354, %v4804
        %v5356 = vadd.f32 %v5355, %v4805
        %v5357 = vadd.f32 %v5356, %v4806
        %v5358 = vadd.f32 %v5357, %v4807
        %v5359 = vadd.f32 %v5358, %v4808
        %v5360 = vadd.f32 %v5359, %v4809
        %v5361 = vadd.f32 %v5360, %v4810
        %v5362 = vadd.f32 %v5361, %v4811
        %v5363 = vadd.f32 %v5362, %v4812
        %v5364 = vadd.f32 %v5363, %v4813
        %v5365 = vadd.f32 %v5364, %v4814
        %v5366 = vadd.f32 %v5365, %v4815
        %v5367 = vadd.f32 %v5366, %v4816
        %v5368 = vadd.f32 %v5367, %v4817
        %v5369 = vadd.f32 %v5368, %v4818
        %v5370 = vadd.f32 %v5369, %v4819
        %v5371 = vadd.f32 %v5370, %v4820
        %v5372 = vadd.f32 %v5371, %v4821
        %v5373 = vadd.f32 %v5372, %v4822
        %v5374 = vadd.f32 %v5373, %v4823
        %v5375 = vadd.f32 %v5374, %v4824
        %v5376 = vadd.f32 %v5375, %v4825
        %v5377 = vadd.f32 %v5376, %v4826
        %v5378 = vadd.f32 %v5377, %v4827
        %v5379 = vadd.f32 %v5378, %v4828
        %v5380 = vadd.f32 %v5379, %v4829
        %v5381 = vadd.f32 %v5380, %v4830
        %v5382 = vrot.slane %v5381, 4
        %v5383 = vadd.f32 %v5381, %v5382
        %v5384 = vrot.slane %v5383, 2
        %v5385 = vadd.f32 %v5383, %v5384
        %v5386 = vrot.slane %v5385, 1
        %v5387 = vadd.f32 %v5385, %v5386
        %v5388 = vadd.f32 %v4831, %v4832
        %v5389 = vadd.f32 %v5388, %v4833
        %v5390 = vadd.f32 %v5389, %v4834
        %v5391 = vadd.f32 %v5390, %v4835
        %v5392 = vadd.f32 %v5391, %v4836
        %v5393 = vadd.f32 %v5392, %v4837
        %v5394 = vadd.f32 %v5393, %v4838
        %v5395 = vadd.f32 %v5394, %v4839
        %v5396 = vadd.f32 %v5395, %v4840
        %v5397 = vadd.f32 %v5396, %v4841
        %v5398 = vadd.f32 %v5397, %v4842
        %v5399 = vadd.f32 %v5398, %v4843
        %v5400 = vadd.f32 %v5399, %v4844
        %v5401 = vadd.f32 %v5400, %v4845
        %v5402 = vadd.f32 %v5401, %v4846
        %v5403 = vadd.f32 %v5402, %v4847
        %v5404 = vadd.f32 %v5403, %v4848
        %v5405 = vadd.f32 %v5404, %v4849
        %v5406 = vadd.f32 %v5405, %v4850
        %v5407 = vadd.f32 %v5406, %v4851
        %v5408 = vadd.f32 %v5407, %v4852
        %v5409 = vadd.f32 %v5408, %v4853
        %v5410 = vadd.f32 %v5409, %v4854
        %v5411 = vadd.f32 %v5410, %v4855
        %v5412 = vadd.f32 %v5411, %v4856
        %v5413 = vadd.f32 %v5412, %v4857
        %v5414 = vadd.f32 %v5413, %v4858
        %v5415 = vadd.f32 %v5414, %v4859
        %v5416 = vadd.f32 %v5415, %v4860
        %v5417 = vadd.f32 %v5416, %v4861
        %v5418 = vadd.f32 %v5417, %v4862
        %v5419 = vrot.slane %v5418, 4
        %v5420 = vadd.f32 %v5418, %v5419
        %v5421 = vrot.slane %v5420, 2
        %v5422 = vadd.f32 %v5420, %v5421
        %v5423 = vrot.slane %v5422, 1
        %v5424 = vadd.f32 %v5422, %v5423
        %v5425 = vadd.f32 %v4863, %v4864
        %v5426 = vadd.f32 %v5425, %v4865
        %v5427 = vadd.f32 %v5426, %v4866
        %v5428 = vadd.f32 %v5427, %v4867
        %v5429 = vadd.f32 %v5428, %v4868
        %v5430 = vadd.f32 %v5429, %v4869
        %v5431 = vadd.f32 %v5430, %v4870
        %v5432 = vadd.f32 %v5431, %v4871
        %v5433 = vadd.f32 %v5432, %v4872
        %v5434 = vadd.f32 %v5433, %v4873
        %v5435 = vadd.f32 %v5434, %v4874
        %v5436 = vadd.f32 %v5435, %v4875
        %v5437 = vadd.f32 %v5436, %v4876
        %v5438 = vadd.f32 %v5437, %v4877
        %v5439 = vadd.f32 %v5438, %v4878
        %v5440 = vadd.f32 %v5439, %v4879
        %v5441 = vadd.f32 %v5440, %v4880
        %v5442 = vadd.f32 %v5441, %v4881
        %v5443 = vadd.f32 %v5442, %v4882
        %v5444 = vadd.f32 %v5443, %v4883
        %v5445 = vadd.f32 %v5444, %v4884
        %v5446 = vadd.f32 %v5445, %v4885
        %v5447 = vadd.f32 %v5446, %v4886
        %v5448 = vadd.f32 %v5447, %v4887
        %v5449 = vadd.f32 %v5448, %v4888
        %v5450 = vadd.f32 %v5449, %v4889
        %v5451 = vadd.f32 %v5450, %v4890
        %v5452 = vadd.f32 %v5451, %v4891
        %v5453 = vadd.f32 %v5452, %v4892
        %v5454 = vadd.f32 %v5453, %v4893
        %v5455 = vadd.f32 %v5454, %v4894
        %v5456 = vrot.slane %v5455, 4
        %v5457 = vadd.f32 %v5455, %v5456
        %v5458 = vrot.slane %v5457, 2
        %v5459 = vadd.f32 %v5457, %v5458
        %v5460 = vrot.slane %v5459, 1
        %v5461 = vadd.f32 %v5459, %v5460
        %v5462 = vadd.f32 %v4895, %v4896
        %v5463 = vadd.f32 %v5462, %v4897
        %v5464 = vadd.f32 %v5463, %v4898
        %v5465 = vadd.f32 %v5464, %v4899
        %v5466 = vadd.f32 %v5465, %v4900
        %v5467 = vadd.f32 %v5466, %v4901
        %v5468 = vadd.f32 %v5467, %v4902
        %v5469 = vadd.f32 %v5468, %v4903
        %v5470 = vadd.f32 %v5469, %v4904
        %v5471 = vadd.f32 %v5470, %v4905
        %v5472 = vadd.f32 %v5471, %v4906
        %v5473 = vadd.f32 %v5472, %v4907
        %v5474 = vadd.f32 %v5473, %v4908
        %v5475 = vadd.f32 %v5474, %v4909
        %v5476 = vadd.f32 %v5475, %v4910
        %v5477 = vadd.f32 %v5476, %v4911
        %v5478 = vadd.f32 %v5477, %v4912
        %v5479 = vadd.f32 %v5478, %v4913
        %v5480 = vadd.f32 %v5479, %v4914
        %v5481 = vadd.f32 %v5480, %v4915
        %v5482 = vadd.f32 %v5481, %v4916
        %v5483 = vadd.f32 %v5482, %v4917
        %v5484 = vadd.f32 %v5483, %v4918
        %v5485 = vadd.f32 %v5484, %v4919
        %v5486 = vadd.f32 %v5485, %v4920
        %v5487 = vadd.f32 %v5486, %v4921
        %v5488 = vadd.f32 %v5487, %v4922
        %v5489 = vadd.f32 %v5488, %v4923
        %v5490 = vadd.f32 %v5489, %v4924
        %v5491 = vadd.f32 %v5490, %v4925
        %v5492 = vadd.f32 %v5491, %v4926
        %v5493 = vrot.slane %v5492, 4
        %v5494 = vadd.f32 %v5492, %v5493
        %v5495 = vrot.slane %v5494, 2
        %v5496 = vadd.f32 %v5494, %v5495
        %v5497 = vrot.slane %v5496, 1
        %v5498 = vadd.f32 %v5496, %v5497
        %v5499 = vadd.f32 %v4927, %v4928
        %v5500 = vadd.f32 %v5499, %v4929
        %v5501 = vadd.f32 %v5500, %v4930
        %v5502 = vadd.f32 %v5501, %v4931
        %v5503 = vadd.f32 %v5502, %v4932
        %v5504 = vadd.f32 %v5503, %v4933
        %v5505 = vadd.f32 %v5504, %v4934
        %v5506 = vadd.f32 %v5505, %v4935
        %v5507 = vadd.f32 %v5506, %v4936
        %v5508 = vadd.f32 %v5507, %v4937
        %v5509 = vadd.f32 %v5508, %v4938
        %v5510 = vadd.f32 %v5509, %v4939
        %v5511 = vadd.f32 %v5510, %v4940
        %v5512 = vadd.f32 %v5511, %v4941
        %v5513 = vadd.f32 %v5512, %v4942
        %v5514 = vadd.f32 %v5513, %v4943
        %v5515 = vadd.f32 %v5514, %v4944
        %v5516 = vadd.f32 %v5515, %v4945
        %v5517 = vadd.f32 %v5516, %v4946
        %v5518 = vadd.f32 %v5517, %v4947
        %v5519 = vadd.f32 %v5518, %v4948
        %v5520 = vadd.f32 %v5519, %v4949
        %v5521 = vadd.f32 %v5520, %v4950
        %v5522 = vadd.f32 %v5521, %v4951
        %v5523 = vadd.f32 %v5522, %v4952
        %v5524 = vadd.f32 %v5523, %v4953
        %v5525 = vadd.f32 %v5524, %v4954
        %v5526 = vadd.f32 %v5525, %v4955
        %v5527 = vadd.f32 %v5526, %v4956
        %v5528 = vadd.f32 %v5527, %v4957
        %v5529 = vadd.f32 %v5528, %v4958
        %v5530 = vrot.slane %v5529, 4
        %v5531 = vadd.f32 %v5529, %v5530
        %v5532 = vrot.slane %v5531, 2
        %v5533 = vadd.f32 %v5531, %v5532
        %v5534 = vrot.slane %v5533, 1
        %v5535 = vadd.f32 %v5533, %v5534
        %v5536 = vadd.f32 %v4959, %v4960
        %v5537 = vadd.f32 %v5536, %v4961
        %v5538 = vadd.f32 %v5537, %v4962
        %v5539 = vadd.f32 %v5538, %v4963
        %v5540 = vadd.f32 %v5539, %v4964
        %v5541 = vadd.f32 %v5540, %v4965
        %v5542 = vadd.f32 %v5541, %v4966
        %v5543 = vadd.f32 %v5542, %v4967
        %v5544 = vadd.f32 %v5543, %v4968
        %v5545 = vadd.f32 %v5544, %v4969
        %v5546 = vadd.f32 %v5545, %v4970
        %v5547 = vadd.f32 %v5546, %v4971
        %v5548 = vadd.f32 %v5547, %v4972
        %v5549 = vadd.f32 %v5548, %v4973
        %v5550 = vadd.f32 %v5549, %v4974
        %v5551 = vadd.f32 %v5550, %v4975
        %v5552 = vadd.f32 %v5551, %v4976
        %v5553 = vadd.f32 %v5552, %v4977
        %v5554 = vadd.f32 %v5553, %v4978
        %v5555 = vadd.f32 %v5554, %v4979
        %v5556 = vadd.f32 %v5555, %v4980
        %v5557 = vadd.f32 %v5556, %v4981
        %v5558 = vadd.f32 %v5557, %v4982
        %v5559 = vadd.f32 %v5558, %v4983
        %v5560 = vadd.f32 %v5559, %v4984
        %v5561 = vadd.f32 %v5560, %v4985
        %v5562 = vadd.f32 %v5561, %v4986
        %v5563 = vadd.f32 %v5562, %v4987
        %v5564 = vadd.f32 %v5563, %v4988
        %v5565 = vadd.f32 %v5564, %v4989
        %v5566 = vadd.f32 %v5565, %v4990
        %v5567 = vrot.slane %v5566, 4
        %v5568 = vadd.f32 %v5566, %v5567
        %v5569 = vrot.slane %v5568, 2
        %v5570 = vadd.f32 %v5568, %v5569
        %v5571 = vrot.slane %v5570, 1
        %v5572 = vadd.f32 %v5570, %v5571
        %v5573 = vadd.f32 %v4991, %v4992
        %v5574 = vadd.f32 %v5573, %v4993
        %v5575 = vadd.f32 %v5574, %v4994
        %v5576 = vadd.f32 %v5575, %v4995
        %v5577 = vadd.f32 %v5576, %v4996
        %v5578 = vadd.f32 %v5577, %v4997
        %v5579 = vadd.f32 %v5578, %v4998
        %v5580 = vadd.f32 %v5579, %v4999
        %v5581 = vadd.f32 %v5580, %v5000
        %v5582 = vadd.f32 %v5581, %v5001
        %v5583 = vadd.f32 %v5582, %v5002
        %v5584 = vadd.f32 %v5583, %v5003
        %v5585 = vadd.f32 %v5584, %v5004
        %v5586 = vadd.f32 %v5585, %v5005
        %v5587 = vadd.f32 %v5586, %v5006
        %v5588 = vadd.f32 %v5587, %v5007
        %v5589 = vadd.f32 %v5588, %v5008
        %v5590 = vadd.f32 %v5589, %v5009
        %v5591 = vadd.f32 %v5590, %v5010
        %v5592 = vadd.f32 %v5591, %v5011
        %v5593 = vadd.f32 %v5592, %v5012
        %v5594 = vadd.f32 %v5593, %v5013
        %v5595 = vadd.f32 %v5594, %v5014
        %v5596 = vadd.f32 %v5595, %v5015
        %v5597 = vadd.f32 %v5596, %v5016
        %v5598 = vadd.f32 %v5597, %v5017
        %v5599 = vadd.f32 %v5598, %v5018
        %v5600 = vadd.f32 %v5599, %v5019
        %v5601 = vadd.f32 %v5600, %v5020
        %v5602 = vadd.f32 %v5601, %v5021
        %v5603 = vadd.f32 %v5602, %v5022
        %v5604 = vrot.slane %v5603, 4
        %v5605 = vadd.f32 %v5603, %v5604
        %v5606 = vrot.slane %v5605, 2
        %v5607 = vadd.f32 %v5605, %v5606
        %v5608 = vrot.slane %v5607, 1
        %v5609 = vadd.f32 %v5607, %v5608
        %v5610 = vadd.f32 %v5023, %v5024
        %v5611 = vadd.f32 %v5610, %v5025
        %v5612 = vadd.f32 %v5611, %v5026
        %v5613 = vadd.f32 %v5612, %v5027
        %v5614 = vadd.f32 %v5613, %v5028
        %v5615 = vadd.f32 %v5614, %v5029
        %v5616 = vadd.f32 %v5615, %v5030
        %v5617 = vadd.f32 %v5616, %v5031
        %v5618 = vadd.f32 %v5617, %v5032
        %v5619 = vadd.f32 %v5618, %v5033
        %v5620 = vadd.f32 %v5619, %v5034
        %v5621 = vadd.f32 %v5620, %v5035
        %v5622 = vadd.f32 %v5621, %v5036
        %v5623 = vadd.f32 %v5622, %v5037
        %v5624 = vadd.f32 %v5623, %v5038
        %v5625 = vadd.f32 %v5624, %v5039
        %v5626 = vadd.f32 %v5625, %v5040
        %v5627 = vadd.f32 %v5626, %v5041
        %v5628 = vadd.f32 %v5627, %v5042
        %v5629 = vadd.f32 %v5628, %v5043
        %v5630 = vadd.f32 %v5629, %v5044
        %v5631 = vadd.f32 %v5630, %v5045
        %v5632 = vadd.f32 %v5631, %v5046
        %v5633 = vadd.f32 %v5632, %v5047
        %v5634 = vadd.f32 %v5633, %v5048
        %v5635 = vadd.f32 %v5634, %v5049
        %v5636 = vadd.f32 %v5635, %v5050
        %v5637 = vadd.f32 %v5636, %v5051
        %v5638 = vadd.f32 %v5637, %v5052
        %v5639 = vadd.f32 %v5638, %v5053
        %v5640 = vadd.f32 %v5639, %v5054
        %v5641 = vrot.slane %v5640, 4
        %v5642 = vadd.f32 %v5640, %v5641
        %v5643 = vrot.slane %v5642, 2
        %v5644 = vadd.f32 %v5642, %v5643
        %v5645 = vrot.slane %v5644, 1
        %v5646 = vadd.f32 %v5644, %v5645
        %vm5663 = vcmask 1041409
        %v5664 = vsel %vm5663, %v5128, %v5091
        %vm5665 = vcmask 1042434
        %v5666 = vsel %vm5665, %v5165, %v5664
        %vm5667 = vcmask 1043459
        %v5668 = vsel %vm5667, %v5202, %v5666
        %vm5669 = vcmask 1044484
        %v5670 = vsel %vm5669, %v5239, %v5668
        %vm5671 = vcmask 1045509
        %v5672 = vsel %vm5671, %v5276, %v5670
        %vm5673 = vcmask 1046534
        %v5674 = vsel %vm5673, %v5313, %v5672
        %vm5675 = vcmask 1047559
        %v5676 = vsel %vm5675, %v5350, %v5674
        %v5677 = vsel %vm5663, %v5424, %v5387
        %v5678 = vsel %vm5665, %v5461, %v5677
        %v5679 = vsel %vm5667, %v5498, %v5678
        %v5680 = vsel %vm5669, %v5535, %v5679
        %v5681 = vsel %vm5671, %v5572, %v5680
        %v5682 = vsel %vm5673, %v5609, %v5681
        %v5683 = vsel %vm5675, %v5646, %v5682
        %v5686 = vadd.f32 %v1437, %v5676
        %v5687 = vadd.f32 %v1438, %v5683
        %5688 = vst [vmem:[#allocation2] sm:$0xff] %v5686
        %5689 = vst [vmem:[#allocation2 + $0x8] sm:$0xff] %v5687
        // Predicated region
        $region61: #{tpu_custom_call.1} parent=39 // pred_check
          %p5690 = pneg %p371
        $region62: #{tpu_custom_call.1} parent=39 // pred_check_branch
          %5692 = sbr.rel (%p5690) target = $region64
        $region63: #{tpu_custom_call.1} parent=39 // pred_region
          %v5693 = vld [vmem:[#allocation3] sm:$0xff]
          %v5694 = vld [vmem:[#allocation3 + $0x8] sm:$0xff]
          %v5695 = vmax.f32 %v5693, 1.0
          %v5696 = vmax.f32 %v5694, 1.0
          %v5697 = vld [vmem:[#allocation2] sm:$0xff]
          %v5698 = vld [vmem:[#allocation2 + $0x8] sm:$0xff]
          %5700 = vset.pattern.permute.xlu0 0
          %5701 = vperm.xlu0 %5700, %v5695
          %v5702 = vpop.permute.xlu0 %5701
          %5705 = vset.pattern.permute.xlu0 0
          %5706 = vperm.xlu0 %5705, %v5696
          %v5707 = vpop.permute.xlu0 %5706
          %v5709 = vrcp.pop %v5702
          %v5710 = vmul.f32 %v5702, %v5709
          %v5711 = vsub.f32 1.0, %v5710
          %v5712 = vmul.f32 %v5709, %v5711
          %v5713 = vadd.f32 %v5709, %v5712
          %vm5714 = vweird.f32 %v5702
          %vm5715 = vweird.f32 %v5709
          %vm5716 = vmor %vm5714, %vm5715
          %v5717 = vsel %vm5716, %v5709, %v5713
          %v5718 = vand.u32 2147483647, %v5702
          %vm5719 = vcmp.eq.f32.partialorder %v5718, 8.507059e+37
          %v5720 = vand.u32 %v5702, 2147483648
          %v5721 = vor.u32 1.1754944e-38, %v5720
          %v5722 = vsel %vm5719, %v5721, %v5717
          %v5723 = vmul.f32 %v5697, %v5722
          %v5724 = vrcp.pop %v5707
          %v5725 = vmul.f32 %v5707, %v5724
          %v5726 = vsub.f32 1.0, %v5725
          %v5727 = vmul.f32 %v5724, %v5726
          %v5728 = vadd.f32 %v5724, %v5727
          %vm5729 = vweird.f32 %v5707
          %vm5730 = vweird.f32 %v5724
          %vm5731 = vmor %vm5729, %vm5730
          %v5732 = vsel %vm5731, %v5724, %v5728
          %v5733 = vand.u32 2147483647, %v5707
          %vm5734 = vcmp.eq.f32.partialorder %v5733, 8.507059e+37
          %v5735 = vand.u32 %v5707, 2147483648
          %v5736 = vor.u32 1.1754944e-38, %v5735
          %v5737 = vsel %vm5734, %v5736, %v5732
          %v5738 = vmul.f32 %v5698, %v5737
          %v5739 = vld [vmem:[%s317] sm:$0xff]
          %v5740 = vld [vmem:[%s317 + $0x8] sm:$0xff]
          %v5741 = vadd.f32 %v5723, %v5739
          %v5742 = vadd.f32 %v5738, %v5740
          %v5743 = vld [vmem:[%s3] sm:$0xff]
          %v5744 = vld [vmem:[%s3 + $0x8] sm:$0xff]
          %v5745 = vld [vmem:[%s3 + $0x10] sm:$0xff]
          %v5746 = vld [vmem:[%s3 + $0x18] sm:$0xff]
          %v5747 = vld [vmem:[%s3 + $0x20] sm:$0xff]
          %v5748 = vld [vmem:[%s3 + $0x28] sm:$0xff]
          %v5749 = vld [vmem:[%s3 + $0x30] sm:$0xff]
          %v5750 = vld [vmem:[%s3 + $0x38] sm:$0xff]
          %v5751 = vld [vmem:[%s3 + $0x40] sm:$0xff]
          %v5752 = vld [vmem:[%s3 + $0x48] sm:$0xff]
          %v5753 = vld [vmem:[%s3 + $0x50] sm:$0xff]
          %v5754 = vld [vmem:[%s3 + $0x58] sm:$0xff]
          %v5755 = vld [vmem:[%s3 + $0x60] sm:$0xff]
          %v5756 = vld [vmem:[%s3 + $0x68] sm:$0xff]
          %v5757 = vld [vmem:[%s3 + $0x70] sm:$0xff]
          %v5758 = vld [vmem:[%s3 + $0x78] sm:$0xff]
          %v5759 = vld [vmem:[#allocation9] sm:$0x1]
          %v5761 = vperm.slane %v5759, 0
          %5763 = vmatpush.msra.mxu0 %v5758
          %5764 = vmatpush.msra.mxu0 %v5757
          %5765 = vmatpush.msra.mxu0 %v5756
          %5766 = vmatpush.msra.mxu0 %v5755
          %5767 = vmatpush.msra.mxu0 %v5754
          %5768 = vmatpush.msra.mxu0 %v5753
          %5769 = vmatpush.msra.mxu0 %v5752
          %5770 = vmatpush.msra.mxu0 %v5751
          %5771 = vmatpush.msra.mxu0 %v5750
          %5772 = vmatpush.msra.mxu0 %v5749
          %5773 = vmatpush.msra.mxu0 %v5748
          %5774 = vmatpush.msra.mxu0 %v5747
          %5775 = vmatpush.msra.mxu0 %v5746
          %5776 = vmatpush.msra.mxu0 %v5745
          %5777 = vmatpush.msra.mxu0 %v5744
          %5778 = vmatpush.msra.mxu0 %v5743
          %5779 = vmatmul.f32.gmra.mxu0 %v5741
          %v5780 = vpop.f32.mrf.mxu0
          %v5781 = vadd.f32 %v5761, %v5780
          %5782 = vmatmul.f32.gmra.mxu0 %v5742
          %v5783 = vpop.f32.mrf.mxu0
          %v5784 = vadd.f32 %v5761, %v5783
          %5785 = vdwg.mxu0
          %vm5786 = vcmask 23552
          %5787 = vst.msk [vmem:[%s369] sm:$0xff] %vm5786, %v5781
          %5788 = vst.msk [vmem:[%s369 + $0x8] sm:$0xff] %vm5786, %v5784
        $region64: #{tpu_custom_call.1} parent=39 // pred_fallthru
          _
        %s5789 = smul.u32 2, %s27
        %p5790 = scmp.lt.s32.totalorder %s5789, 3
        %s5791 = scalar_select %p5790, %s5789, 3
        %s5792 = smul.addr %s5791, 8
        %s5793 = scalar_lea.vmem %s5, %s5792
        // Predicated region
        $region65: #{tpu_custom_call.1} parent=39 // pred_check
          %p5794 = pneg %p177
        $region66: #{tpu_custom_call.1} parent=39 // pred_check_branch
          %5796 = sbr.rel (%p5794) target = $region68
        $region67: #{tpu_custom_call.1} parent=39 // pred_region
          %s5797 = smul.u32 2, %s27
        $region68: #{tpu_custom_call.1} parent=39 // pred_fallthru
          _
      $region40: #{tpu_custom_call.1} parent=5 // pred_fallthru
        _
      %p5798 = scmp.le.s32.totalorder 2, %s18
      // Predicated region
      $region69: #{tpu_custom_call.1} parent=5 // pred_check
        %p5799 = pneg %p5798
      $region70: #{tpu_custom_call.1} parent=5 // pred_check_branch
        %5801 = sbr.rel (%p5799) target = $region72
      $region71: #{tpu_custom_call.1} parent=5 // pred_region
        %s5802 = ssub.s32 %s18, 2
        // Predicated region
        $region73: #{tpu_custom_call.1} parent=71 // pred_check
          %p5803 = pneg %p183
        $region74: #{tpu_custom_call.1} parent=71 // pred_check_branch
          %5805 = sbr.rel (%p5803) target = $region76
        $region75: #{tpu_custom_call.1} parent=71 // pred_region
          %s5806 = smul.u32 2, %s29
          %p5807 = scmp.lt.s32.totalorder %s5806, 3
          %s5808 = scalar_select %p5807, %s5806, 3
          %s5809 = smul.addr %s5808, 8
          %s5810 = scalar_lea.vmem %s5, %s5809
        $region76: #{tpu_custom_call.1} parent=71 // pred_fallthru
          _
      $region72: #{tpu_custom_call.1} parent=5 // pred_fallthru
        _
    $region6: #{tpu_custom_call.1} parent=1 // loop_footer
      %s22 = sadd.s32 1, %s18
    $region7: #{tpu_custom_call.1} parent=1 // loop_footer_branch
      %17 = sbr.rel target = $region3
    $region8: #{tpu_custom_call.1} parent=1 // loop_exit
      _
    %5811 = vsyncpa [#allocation5], 1
    %s5812 = scalar_lea.sflag [#allocation5], 1
    %5813 = vsyncpa %s5812, 1
    %5814 = vsyncpa [#allocation7], 1
    %s5815 = scalar_lea.sflag [#allocation7], 1
    %5816 = vsyncpa %s5815, 1
    %5817 = vsyncpa [#allocation10], 1

</llo_original>
